<compile_context>
chip_gen: v7x
topology: tpu7x:2x2x1
jax: 0.10.0
libtpu: 0.0.40
codegen_flags: <defaults>
</compile_context>

<pallas_src>
import math

import jax
import jax.numpy as jnp
from jax import lax
from jax.experimental import pallas as pl
from jax.experimental.pallas import tpu as pltpu


def _pick_batch_tile(batch, s_q, target_rows=256, max_bt=8):
    """Largest divisor of `batch` (<= max_bt) whose row count ~fills the MXU M dim."""
    want = max(1, min(max_bt, target_rows // max(s_q, 1)))
    bt = 1
    for cand in range(1, min(batch, want) + 1):
        if batch % cand == 0:
            bt = cand
    return bt


def _make_mha_kernel(*, bt, h, d_k, d_model, s_q, s_kv, sm_scale,
                     self_attn, kv_same, use_mask, per_batch_mask,
                     dropout_rate, training, mxu_dtype):
    """Fused MHA kernel body: Bt batch elements per grid step."""
    do_dropout = training and dropout_rate > 0.0
    if do_dropout:
        keep_scale = 1.0 / (1.0 - dropout_rate)
        drop_threshold = min(int(dropout_rate * 4294967296.0), 4294967295)

    def kernel(seed_ref, *refs):
        # ---- unpack (inputs vary with self_attn / kv_same / use_mask flags) ----
        idx = 0
        q_ref = refs[idx]; idx += 1
        if self_attn:
            k_ref = v_ref = q_ref
        else:
            k_ref = refs[idx]; idx += 1
            if kv_same:
                v_ref = k_ref
            else:
                v_ref = refs[idx]; idx += 1
        mask_ref = None
        if use_mask:
            mask_ref = refs[idx]; idx += 1
        wqkv_ref = refs[idx]
        bqkv_ref = refs[idx + 1]
        wo_ref = refs[idx + 2]
        bo_ref = refs[idx + 3]
        o_ref = refs[idx + 4]
        q_hd, k_hd, v_hd, ctx = refs[idx + 5: idx + 9]

        # ---- fused input projections (MXU, f32 accumulation, bias in f32) ------
        x_q = q_ref[...].reshape(bt * s_q, d_model)
        if self_attn:
            qkv = jnp.dot(x_q, wqkv_ref[...],
                          preferred_element_type=jnp.float32) + bqkv_ref[...]
            q_hd[...] = qkv[:, :d_model].astype(mxu_dtype)
            k_hd[...] = qkv[:, d_model:2 * d_model].astype(mxu_dtype)
            v_hd[...] = qkv[:, 2 * d_model:].astype(mxu_dtype)
        else:
            q_hd[...] = (jnp.dot(x_q, wqkv_ref[:, :d_model],
                                 preferred_element_type=jnp.float32)
                         + bqkv_ref[:, :d_model]).astype(mxu_dtype)
            x_k = k_ref[...].reshape(bt * s_kv, d_model)
            if kv_same:
                kv = jnp.dot(x_k, wqkv_ref[:, d_model:],
                             preferred_element_type=jnp.float32) + bqkv_ref[:, d_model:]
                k_hd[...] = kv[:, :d_model].astype(mxu_dtype)
                v_hd[...] = kv[:, d_model:].astype(mxu_dtype)
            else:
                x_v = v_ref[...].reshape(bt * s_kv, d_model)
                k_hd[...] = (jnp.dot(x_k, wqkv_ref[:, d_model:2 * d_model],
                                     preferred_element_type=jnp.float32)
                             + bqkv_ref[:, d_model:2 * d_model]).astype(mxu_dtype)
                v_hd[...] = (jnp.dot(x_v, wqkv_ref[:, 2 * d_model:],
                                     preferred_element_type=jnp.float32)
                             + bqkv_ref[:, 2 * d_model:]).astype(mxu_dtype)

        if do_dropout:
            # Hashed per-grid-step seed (mixes user seed + grid index).
            pltpu.prng_seed(seed_ref[0], pl.program_id(0))

        shared_mask_zero = None
        if use_mask and not per_batch_mask:
            shared_mask_zero = mask_ref[0] == 0          # hoisted: computed once

        # ---- per-(batch-element, head) attention --------------------------------
        # TODO(synk): for long sequences (S*d_model slabs that no longer fit VMEM,
        # especially on v7x's 64 MiB) switch to an S_q-tiled / online-softmax
        # (flash-style) layout and stream KV tiles instead of whole slabs.
        for bi in range(bt):
            r0 = bi * s_q
            c0 = bi * s_kv
            if use_mask:
                mask_zero = (mask_ref[bi] == 0) if per_batch_mask else shared_mask_zero
            if do_dropout:
                rnd = pltpu.bitcast(
                    pltpu.prng_random_bits((h, s_q, s_kv)), jnp.uint32)
            for head in range(h):
                lo = head * d_k
                qh = q_hd[r0:r0 + s_q, lo:lo + d_k]       # (S_q, d_k) from scratch
                kh = k_hd[c0:c0 + s_kv, lo:lo + d_k]      # (S_kv, d_k)
                vh = v_hd[c0:c0 + s_kv, lo:lo + d_k]      # (S_kv, d_k)

                # scores = qh @ kh^T / sqrt(d_k)  (contract d_k, f32 accumulation)
                s = lax.dot_general(
                    qh, kh, (((1,), (1,)), ((), ())),
                    preferred_element_type=jnp.float32) * sm_scale   # (S_q, S_kv)

                if use_mask:
                    s = jnp.where(mask_zero, -1e9, s)

                # numerically-stable softmax in f32 (matches torch.softmax)
                s = s - jnp.max(s, axis=-1, keepdims=True)
                p = jnp.exp(s)
                p = p * pl.reciprocal(jnp.sum(p, axis=-1, keepdims=True),
                                      approx=True)

                if do_dropout:
                    keep = rnd[head] >= jnp.uint32(drop_threshold)
                    p = jnp.where(keep, p * keep_scale, 0.0)

                ho = jnp.dot(p.astype(mxu_dtype), vh,
                             preferred_element_type=jnp.float32)      # (S_q, d_k)
                ctx[r0:r0 + s_q, lo:lo + d_k] = ho                    # f32 scratch

        # ---- output projection ---------------------------------------------------
        out = jnp.dot(ctx[...].astype(mxu_dtype), wo_ref[...],
                      preferred_element_type=jnp.float32) + bo_ref[...]
        o_ref[...] = out.reshape(bt, s_q, d_model).astype(o_ref.dtype)

    return kernel


def multi_head_attention(q, k, v, wq, bq, wk, bk, wv, bv, wo, bo, *, h,
                         mask=None, dropout_rate=0.0, training=False, seed=0,
                         mxu_dtype=jnp.bfloat16, out_dtype=None):
    """q: (B, S_q, d_model); k, v: (B, S_kv, d_model). Weights are (in, out)."""
    B, S_q, d_model = q.shape
    Bk, S_kv, _ = k.shape
    assert Bk == B and v.shape == k.shape
    assert d_model % h == 0, "d_model must be divisible by h"
    d_k = d_model // h
    sm_scale = 1.0 / math.sqrt(d_k)
    out_dtype = out_dtype or q.dtype

    # Detect fusion opportunities from argument identity (wrapper-level, free).
    self_attn = (q is k) and (q is v)
    kv_same = (k is v)
    if self_attn:
        S_kv = S_q

    Bt = _pick_batch_tile(B, S_q)
    grid = (B // Bt,)

    # Fused QKV weight (in, out) layout; biases stay f32 (row vectors).
    # TODO(synk): for very large d_model (resident 4*d_model^2 bf16 > ~50% of VMEM)
    # stream w_o via a contraction grid axis instead of keeping it resident.
    wqkv = jnp.concatenate([wq, wk, wv], axis=1).astype(mxu_dtype)   # (d, 3d)
    bqkv = jnp.concatenate([bq, bk, bv]).reshape(1, 3 * d_model).astype(jnp.float32)
    wo_c = wo.astype(mxu_dtype)
    bo2 = bo.reshape(1, d_model).astype(jnp.float32)

    seed_arr = jnp.array([seed], dtype=jnp.int32)

    inputs = [seed_arr, q.astype(mxu_dtype)]
    in_specs = [pl.BlockSpec((Bt, S_q, d_model), lambda b, sref: (b, 0, 0))]
    if not self_attn:
        inputs.append(k.astype(mxu_dtype))
        in_specs.append(pl.BlockSpec((Bt, S_kv, d_model), lambda b, sref: (b, 0, 0)))
        if not kv_same:
            inputs.append(v.astype(mxu_dtype))
            in_specs.append(pl.BlockSpec((Bt, S_kv, d_model),
                                         lambda b, sref: (b, 0, 0)))

    resident = pl.BlockSpec(memory_space=pltpu.MemorySpace.VMEM)

    use_mask = mask is not None
    per_batch_mask = False
    if use_mask:
        m = jnp.asarray(mask)
        if m.ndim == 4:              # PyTorch-style (B or 1, 1, S_q, S_kv)
            m = m[:, 0]
        if m.ndim == 2:
            m = m[None]
        per_batch_mask = (m.shape[0] != 1)
        if per_batch_mask:
            m = jnp.broadcast_to(m, (B, S_q, S_kv)).astype(jnp.int32)
            inputs.append(m)
            in_specs.append(pl.BlockSpec((Bt, S_q, S_kv), lambda b, sref: (b, 0, 0)))
        else:
            # Shared mask: one VMEM-resident copy, never re-DMA'd per grid step.
            m = jnp.broadcast_to(m, (1, S_q, S_kv)).astype(jnp.int32)
            inputs.append(m)
            in_specs.append(resident)

    # Weights/biases: constant across the grid -> whole-array resident in VMEM.
    inputs += [wqkv, bqkv, wo_c, bo2]
    in_specs += [resident] * 4

    scratch_shapes = [
        pltpu.VMEM((Bt * S_q, d_model), mxu_dtype),    # projected Q (head-sliced)
        pltpu.VMEM((Bt * S_kv, d_model), mxu_dtype),   # projected K
        pltpu.VMEM((Bt * S_kv, d_model), mxu_dtype),   # projected V
        pltpu.VMEM((Bt * S_q, d_model), jnp.float32),  # ctx (per-head writes)
    ]

    kernel = _make_mha_kernel(
        bt=Bt, h=h, d_k=d_k, d_model=d_model, s_q=S_q, s_kv=S_kv,
        sm_scale=sm_scale, self_attn=self_attn, kv_same=kv_same,
        use_mask=use_mask, per_batch_mask=per_batch_mask,
        dropout_rate=float(dropout_rate), training=training, mxu_dtype=mxu_dtype)

    # ---- VMEM budget: footprint estimate, capped at 75% of the physical VMEM ----
    act_b = jnp.dtype(mxu_dtype).itemsize
    out_b = jnp.dtype(out_dtype).itemsize
    pipelined = 2 * Bt * S_q * d_model * act_b + 2 * Bt * S_q * d_model * out_b
    if not self_attn:
        pipelined += 2 * Bt * S_kv * d_model * act_b * (1 if kv_same else 2)
    if use_mask and per_batch_mask:
        pipelined += 2 * Bt * S_q * S_kv * 4
    resident_bytes = 4 * d_model * d_model * act_b + 4 * d_model * 4
    if use_mask and not per_batch_mask:
        resident_bytes += S_q * S_kv * 4
    scratch_bytes = (Bt * (S_q + 2 * S_kv) * d_model * act_b
                     + Bt * S_q * d_model * 4)
    temps = (Bt * S_q * 4 * d_model * 4              # f32 fused-proj + f32 out
             + 8 * S_q * S_kv * 4                    # score/prob temporaries
             + (h * S_q * S_kv * 4 if (training and dropout_rate > 0.0) else 0))
    est = pipelined + resident_bytes + scratch_bytes + temps
    try:
        vmem_cap = int(pltpu.get_tpu_info().vmem_capacity_bytes)
    except Exception:
        vmem_cap = 64 * 1024 * 1024                  # conservative (v7x) fallback
    cap = (vmem_cap * 3) // 4                        # headroom for compiler temps
    vmem_limit = int(min(cap, max(32 * 1024 * 1024, 2 * est)))

    # ---- advisory cost estimate for the XLA scheduler ---------------------------
    flops = int(2 * B * (S_q + 2 * S_kv) * d_model * d_model      # QKV projections
                + 4 * B * S_q * S_kv * d_model                    # scores + PV
                + 2 * B * S_q * d_model * d_model)                # output projection
    transcendentals = int(B * h * S_q * S_kv)
    in_bytes = B * S_q * d_model * act_b
    if not self_attn:
        in_bytes += B * S_kv * d_model * act_b * (1 if kv_same else 2)
    mask_bytes = ((B if per_batch_mask else 1) * S_q * S_kv * 4) if use_mask else 0
    bytes_accessed = int(in_bytes + mask_bytes + B * S_q * d_model * out_b
                         + 4 * d_model * d_model * act_b + 4 * d_model * 4)
    cost = pl.CostEstimate(flops=flops, transcendentals=transcendentals,
                           bytes_accessed=bytes_accessed)

    out = pl.pallas_call(
        kernel,
        out_shape=jax.ShapeDtypeStruct((B, S_q, d_model), out_dtype),
        grid_spec=pltpu.PrefetchScalarGridSpec(
            num_scalar_prefetch=1,                   # dropout seed lands in SMEM
            grid=grid,
            in_specs=in_specs,
            out_specs=pl.BlockSpec((Bt, S_q, d_model), lambda b, sref: (b, 0, 0)),
            scratch_shapes=scratch_shapes),
        compiler_params=pltpu.CompilerParams(
            dimension_semantics=("parallel",),       # batch-tile axis -> megacore
            vmem_limit_bytes=vmem_limit),
        cost_estimate=cost,
    )(*inputs)
    return out


def _init_params(key, d_model):
    """nn.Linear-style init, weights stored transposed as (in, out)."""
    keys = jax.random.split(key, 8)
    lim = 1.0 / math.sqrt(d_model)

    def lin(kw, kb):
        w = jax.random.uniform(kw, (d_model, d_model), jnp.float32, -lim, lim)
        b = jax.random.uniform(kb, (d_model,), jnp.float32, -lim, lim)
        return w, b

    wq, bq = lin(keys[0], keys[1])
    wk, bk = lin(keys[2], keys[3])
    wv, bv = lin(keys[4], keys[5])
    wo, bo = lin(keys[6], keys[7])
    return wq, bq, wk, bk, wv, bv, wo, bo


def _mha_reference(q, k, v, mask, wq, bq, wk, bk, wv, bv, wo, bo, *, h):
    """Pure-JAX f32 reference matching the PyTorch forward."""
    B, S_q, d_model = q.shape
    d_k = d_model // h

    def split_heads(x):
        b, s, _ = x.shape
        return x.reshape(b, s, h, d_k).transpose(0, 2, 1, 3)

    Q = split_heads(q @ wq + bq)
    K = split_heads(k @ wk + bk)
    V = split_heads(v @ wv + bv)
    s = jnp.einsum("bhqd,bhkd->bhqk", Q, K) / math.sqrt(d_k)
    if mask is not None:
        s = jnp.where(mask == 0, -1e9, s)
    p = jax.nn.softmax(s, axis=-1)
    ctx = jnp.einsum("bhqk,bhkd->bhqd", p, V)
    ctx = ctx.transpose(0, 2, 1, 3).reshape(B, S_q, d_model)
    return ctx @ wo + bo


if __name__ == "__main__":
    key = jax.random.PRNGKey(0)
    kx, kmem, kq2, kp = jax.random.split(key, 4)

    batch, seq, d_model, h = 2, 16, 128, 8
    wq, bq, wk, bk, wv, bv, wo, bo = _init_params(kp, d_model)

    # ---- test 1: self-attention (q is k is v) + shared causal mask, eval mode ----
    x = jax.random.normal(kx, (batch, seq, d_model), dtype=jnp.float32)
    causal = jnp.tril(jnp.ones((seq, seq), dtype=jnp.int32))[None, None]  # (1,1,S,S)
    out1 = multi_head_attention(x, x, x, wq, bq, wk, bk, wv, bv, wo, bo,
                                h=h, mask=causal, dropout_rate=0.1, training=False)
    out1 = jax.block_until_ready(out1)
    ref1 = _mha_reference(x, x, x, causal, wq, bq, wk, bk, wv, bv, wo, bo, h=h)
    assert out1.shape == ref1.shape
    err1 = float(jnp.max(jnp.abs(out1 - ref1)))
    assert jnp.allclose(out1, ref1, atol=3e-2, rtol=3e-2), (
        f"self-attn mismatch vs reference, max abs err = {err1}")

    # ---- test 2: cross-attention (k is v, longer memory, no mask) ---------------
    seq_kv = 32
    qx = jax.random.normal(kq2, (batch, seq, d_model), dtype=jnp.float32)
    mem = jax.random.normal(kmem, (batch, seq_kv, d_model), dtype=jnp.float32)
    out2 = multi_head_attention(qx, mem, mem, wq, bq, wk, bk, wv, bv, wo, bo,
                                h=h, mask=None, dropout_rate=0.0, training=False)
    out2 = jax.block_until_ready(out2)
    ref2 = _mha_reference(qx, mem, mem, None, wq, bq, wk, bk, wv, bv, wo, bo, h=h)
    err2 = float(jnp.max(jnp.abs(out2 - ref2)))
    assert jnp.allclose(out2, ref2, atol=3e-2, rtol=3e-2), (
        f"cross-attn mismatch vs reference, max abs err = {err2}")

    print("KERNEL_OK")
</pallas_src>

<mosaic_0001>
module attributes {stable_mosaic.version = 11 : i64} {
  func.func @kernel(%arg0: i32, %arg1: memref<1xi32, #tpu.memory_space<smem>>, %arg2: memref<2x16x128xbf16, #tpu.memory_space<vmem>>, %arg3: memref<1x16x16xi32, #tpu.memory_space<vmem>>, %arg4: memref<128x384xbf16, #tpu.memory_space<vmem>>, %arg5: memref<1x384xf32, #tpu.memory_space<vmem>>, %arg6: memref<128x128xbf16, #tpu.memory_space<vmem>>, %arg7: memref<1x128xf32, #tpu.memory_space<vmem>>, %arg8: memref<2x16x128xf32, #tpu.memory_space<vmem>>, %arg9: memref<32x128xbf16, #tpu.memory_space<vmem>>, %arg10: memref<32x128xbf16, #tpu.memory_space<vmem>>, %arg11: memref<32x128xbf16, #tpu.memory_space<vmem>>, %arg12: memref<32x128xf32, #tpu.memory_space<vmem>>) attributes {dimension_semantics = [#tpu.dimension_semantics<parallel>], iteration_bounds = array<i64: 1>, scalar_prefetch = 1 : i64, scratch_operands = 4 : i64, tpu.core_type = #tpu.core_type<tc>, window_params = [{transform_indices = @transform_0, window_bounds = array<i64: 2, 16, 128>}, {pipeline_mode = #tpu.pipeline_mode<synchronous>, transform_indices = @transform_1, window_bounds = array<i64: 1, 16, 16>}, {pipeline_mode = #tpu.pipeline_mode<synchronous>, transform_indices = @transform_2, window_bounds = array<i64: 128, 384>}, {pipeline_mode = #tpu.pipeline_mode<synchronous>, transform_indices = @transform_3, window_bounds = array<i64: 1, 384>}, {pipeline_mode = #tpu.pipeline_mode<synchronous>, transform_indices = @transform_4, window_bounds = array<i64: 128, 128>}, {pipeline_mode = #tpu.pipeline_mode<synchronous>, transform_indices = @transform_5, window_bounds = array<i64: 1, 128>}, {transform_indices = @transform_6, window_bounds = array<i64: 2, 16, 128>}]} {
    %c0 = arith.constant 0 : index
    %c0_0 = arith.constant 0 : index
    %c0_1 = arith.constant 0 : index
    %0 = vector.load %arg2[%c0, %c0_0, %c0_1] : memref<2x16x128xbf16, #tpu.memory_space<vmem>>, vector<2x16x128xbf16>
    %1 = vector.shape_cast %0 : vector<2x16x128xbf16> to vector<32x128xbf16>
    %c0_2 = arith.constant 0 : index
    %c0_3 = arith.constant 0 : index
    %2 = vector.load %arg4[%c0_2, %c0_3] : memref<128x384xbf16, #tpu.memory_space<vmem>>, vector<128x384xbf16>
    %cst = arith.constant dense<0.000000e+00> : vector<32x384xf32>
    %3 = tpu.matmul %1, %2, %cst {dimension_numbers = #tpu.dot_dimension_numbers<[1], [0], [0], [1], [0, 0, 1, 1], [], []>} : vector<32x128xbf16>, vector<128x384xbf16>, vector<32x384xf32> -> vector<32x384xf32>
    %c0_4 = arith.constant 0 : index
    %c0_5 = arith.constant 0 : index
    %4 = vector.load %arg5[%c0_4, %c0_5] : memref<1x384xf32, #tpu.memory_space<vmem>>, vector<1x384xf32>
    %5 = vector.broadcast %4 : vector<1x384xf32> to vector<32x384xf32>
    %6 = arith.addf %3, %5 : vector<32x384xf32>
    %7 = vector.extract_strided_slice %6 {offsets = [0, 0], sizes = [32, 128], strides = [1, 1]} : vector<32x384xf32> to vector<32x128xf32>
    %8 = arith.truncf %7 : vector<32x128xf32> to vector<32x128xbf16>
    %c0_6 = arith.constant 0 : index
    %c0_7 = arith.constant 0 : index
    %9 = vector.load %arg9[%c0_6, %c0_7] : memref<32x128xbf16, #tpu.memory_space<vmem>>, vector<32x128xbf16>
    tpu.vector_store %arg9[%c0_6, %c0_7], %8 {strides = array<i32>} : memref<32x128xbf16, #tpu.memory_space<vmem>>, vector<32x128xbf16>,
    %10 = vector.extract_strided_slice %6 {offsets = [0, 128], sizes = [32, 128], strides = [1, 1]} : vector<32x384xf32> to vector<32x128xf32>
    %11 = arith.truncf %10 : vector<32x128xf32> to vector<32x128xbf16>
    %c0_8 = arith.constant 0 : index
    %c0_9 = arith.constant 0 : index
    %12 = vector.load %arg10[%c0_8, %c0_9] : memref<32x128xbf16, #tpu.memory_space<vmem>>, vector<32x128xbf16>
    tpu.vector_store %arg10[%c0_8, %c0_9], %11 {strides = array<i32>} : memref<32x128xbf16, #tpu.memory_space<vmem>>, vector<32x128xbf16>,
    %13 = vector.extract_strided_slice %6 {offsets = [0, 256], sizes = [32, 128], strides = [1, 1]} : vector<32x384xf32> to vector<32x128xf32>
    %14 = arith.truncf %13 : vector<32x128xf32> to vector<32x128xbf16>
    %c0_10 = arith.constant 0 : index
    %c0_11 = arith.constant 0 : index
    %15 = vector.load %arg11[%c0_10, %c0_11] : memref<32x128xbf16, #tpu.memory_space<vmem>>, vector<32x128xbf16>
    tpu.vector_store %arg11[%c0_10, %c0_11], %14 {strides = array<i32>} : memref<32x128xbf16, #tpu.memory_space<vmem>>, vector<32x128xbf16>,
    %c0_12 = arith.constant 0 : index
    %c0_13 = arith.constant 0 : index
    %c0_14 = arith.constant 0 : index
    %16 = vector.load %arg3[%c0_12, %c0_13, %c0_14] : memref<1x16x16xi32, #tpu.memory_space<vmem>>, vector<1x16x16xi32>
    %17 = vector.shape_cast %16 : vector<1x16x16xi32> to vector<16x16xi32>
    %c0_i32 = arith.constant 0 : i32
    %18 = vector.broadcast %c0_i32 : i32 to vector<16x16xi32>
    %19 = arith.cmpi eq, %17, %18 : vector<16x16xi32>
    %c0_15 = arith.constant 0 : index
    %c0_16 = arith.constant 0 : index
    %20 = vector.load %arg9[%c0_15, %c0_16] : memref<32x128xbf16, #tpu.memory_space<vmem>>, vector<16x16xbf16>
    %c0_17 = arith.constant 0 : index
    %c0_18 = arith.constant 0 : index
    %21 = vector.load %arg10[%c0_17, %c0_18] : memref<32x128xbf16, #tpu.memory_space<vmem>>, vector<16x16xbf16>
    %c0_19 = arith.constant 0 : index
    %c0_20 = arith.constant 0 : index
    %22 = vector.load %arg11[%c0_19, %c0_20] : memref<32x128xbf16, #tpu.memory_space<vmem>>, vector<16x16xbf16>
    %cst_21 = arith.constant dense<0.000000e+00> : vector<16x16xf32>
    %23 = tpu.matmul %20, %21, %cst_21 {dimension_numbers = #tpu.dot_dimension_numbers<[1], [1], [0], [0], [0, 0, 1, 0], [], []>} : vector<16x16xbf16>, vector<16x16xbf16>, vector<16x16xf32> -> vector<16x16xf32>
    %cst_22 = arith.constant 2.500000e-01 : f32
    %24 = vector.broadcast %cst_22 : f32 to vector<16x16xf32>
    %25 = arith.mulf %23, %24 : vector<16x16xf32>
    %cst_23 = arith.constant -1.000000e+09 : f32
    %26 = vector.broadcast %cst_23 : f32 to vector<16x16xf32>
    %27 = arith.select %19, %26, %25 : vector<16x16xi1>, vector<16x16xf32>
    %cst_24 = arith.constant dense<0xFF800000> : vector<16xf32>
    %28 = vector.multi_reduction <maximumf>, %27, %cst_24 [1] : vector<16x16xf32> to vector<16xf32>
    %29 = vector.shape_cast %28 : vector<16xf32> to vector<16x1xf32>
    %30 = vector.broadcast %29 : vector<16x1xf32> to vector<16x16xf32>
    %31 = arith.subf %27, %30 : vector<16x16xf32>
    %32 = math.exp %31 : vector<16x16xf32>
    %cst_25 = arith.constant dense<0.000000e+00> : vector<16xf32>
    %33 = vector.multi_reduction <add>, %32, %cst_25 [1] : vector<16x16xf32> to vector<16xf32>
    %34 = vector.shape_cast %33 : vector<16xf32> to vector<16x1xf32>
    %35 = tpu.reciprocal %34 {approx = true} : vector<16x1xf32> -> vector<16x1xf32>
    %36 = vector.broadcast %35 : vector<16x1xf32> to vector<16x16xf32>
    %37 = arith.mulf %32, %36 : vector<16x16xf32>
    %38 = arith.truncf %37 : vector<16x16xf32> to vector<16x16xbf16>
    %cst_26 = arith.constant dense<0.000000e+00> : vector<16x16xf32>
    %39 = tpu.matmul %38, %22, %cst_26 {dimension_numbers = #tpu.dot_dimension_numbers<[1], [0], [0], [1], [0, 0, 1, 1], [], []>} : vector<16x16xbf16>, vector<16x16xbf16>, vector<16x16xf32> -> vector<16x16xf32>
    %c0_27 = arith.constant 0 : index
    %c0_28 = arith.constant 0 : index
    %40 = vector.load %arg12[%c0_27, %c0_28] : memref<32x128xf32, #tpu.memory_space<vmem>>, vector<16x16xf32>
    tpu.vector_store %arg12[%c0_27, %c0_28], %39 {strides = array<i32>} : memref<32x128xf32, #tpu.memory_space<vmem>>, vector<16x16xf32>,
    %c0_29 = arith.constant 0 : index
    %c16 = arith.constant 16 : index
    %41 = vector.load %arg9[%c0_29, %c16] : memref<32x128xbf16, #tpu.memory_space<vmem>>, vector<16x16xbf16>
    %c0_30 = arith.constant 0 : index
    %c16_31 = arith.constant 16 : index
    %42 = vector.load %arg10[%c0_30, %c16_31] : memref<32x128xbf16, #tpu.memory_space<vmem>>, vector<16x16xbf16>
    %c0_32 = arith.constant 0 : index
    %c16_33 = arith.constant 16 : index
    %43 = vector.load %arg11[%c0_32, %c16_33] : memref<32x128xbf16, #tpu.memory_space<vmem>>, vector<16x16xbf16>
    %cst_34 = arith.constant dense<0.000000e+00> : vector<16x16xf32>
    %44 = tpu.matmul %41, %42, %cst_34 {dimension_numbers = #tpu.dot_dimension_numbers<[1], [1], [0], [0], [0, 0, 1, 0], [], []>} : vector<16x16xbf16>, vector<16x16xbf16>, vector<16x16xf32> -> vector<16x16xf32>
    %cst_35 = arith.constant 2.500000e-01 : f32
    %45 = vector.broadcast %cst_35 : f32 to vector<16x16xf32>
    %46 = arith.mulf %44, %45 : vector<16x16xf32>
    %cst_36 = arith.constant -1.000000e+09 : f32
    %47 = vector.broadcast %cst_36 : f32 to vector<16x16xf32>
    %48 = arith.select %19, %47, %46 : vector<16x16xi1>, vector<16x16xf32>
    %cst_37 = arith.constant dense<0xFF800000> : vector<16xf32>
    %49 = vector.multi_reduction <maximumf>, %48, %cst_37 [1] : vector<16x16xf32> to vector<16xf32>
    %50 = vector.shape_cast %49 : vector<16xf32> to vector<16x1xf32>
    %51 = vector.broadcast %50 : vector<16x1xf32> to vector<16x16xf32>
    %52 = arith.subf %48, %51 : vector<16x16xf32>
    %53 = math.exp %52 : vector<16x16xf32>
    %cst_38 = arith.constant dense<0.000000e+00> : vector<16xf32>
    %54 = vector.multi_reduction <add>, %53, %cst_38 [1] : vector<16x16xf32> to vector<16xf32>
    %55 = vector.shape_cast %54 : vector<16xf32> to vector<16x1xf32>
    %56 = tpu.reciprocal %55 {approx = true} : vector<16x1xf32> -> vector<16x1xf32>
    %57 = vector.broadcast %56 : vector<16x1xf32> to vector<16x16xf32>
    %58 = arith.mulf %53, %57 : vector<16x16xf32>
    %59 = arith.truncf %58 : vector<16x16xf32> to vector<16x16xbf16>
    %cst_39 = arith.constant dense<0.000000e+00> : vector<16x16xf32>
    %60 = tpu.matmul %59, %43, %cst_39 {dimension_numbers = #tpu.dot_dimension_numbers<[1], [0], [0], [1], [0, 0, 1, 1], [], []>} : vector<16x16xbf16>, vector<16x16xbf16>, vector<16x16xf32> -> vector<16x16xf32>
    %c0_40 = arith.constant 0 : index
    %c16_41 = arith.constant 16 : index
    %61 = vector.load %arg12[%c0_40, %c16_41] : memref<32x128xf32, #tpu.memory_space<vmem>>, vector<16x16xf32>
    tpu.vector_store %arg12[%c0_40, %c16_41], %60 {strides = array<i32>} : memref<32x128xf32, #tpu.memory_space<vmem>>, vector<16x16xf32>,
    %c0_42 = arith.constant 0 : index
    %c32 = arith.constant 32 : index
    %62 = vector.load %arg9[%c0_42, %c32] : memref<32x128xbf16, #tpu.memory_space<vmem>>, vector<16x16xbf16>
    %c0_43 = arith.constant 0 : index
    %c32_44 = arith.constant 32 : index
    %63 = vector.load %arg10[%c0_43, %c32_44] : memref<32x128xbf16, #tpu.memory_space<vmem>>, vector<16x16xbf16>
    %c0_45 = arith.constant 0 : index
    %c32_46 = arith.constant 32 : index
    %64 = vector.load %arg11[%c0_45, %c32_46] : memref<32x128xbf16, #tpu.memory_space<vmem>>, vector<16x16xbf16>
    %cst_47 = arith.constant dense<0.000000e+00> : vector<16x16xf32>
    %65 = tpu.matmul %62, %63, %cst_47 {dimension_numbers = #tpu.dot_dimension_numbers<[1], [1], [0], [0], [0, 0, 1, 0], [], []>} : vector<16x16xbf16>, vector<16x16xbf16>, vector<16x16xf32> -> vector<16x16xf32>
    %cst_48 = arith.constant 2.500000e-01 : f32
    %66 = vector.broadcast %cst_48 : f32 to vector<16x16xf32>
    %67 = arith.mulf %65, %66 : vector<16x16xf32>
    %cst_49 = arith.constant -1.000000e+09 : f32
    %68 = vector.broadcast %cst_49 : f32 to vector<16x16xf32>
    %69 = arith.select %19, %68, %67 : vector<16x16xi1>, vector<16x16xf32>
    %cst_50 = arith.constant dense<0xFF800000> : vector<16xf32>
    %70 = vector.multi_reduction <maximumf>, %69, %cst_50 [1] : vector<16x16xf32> to vector<16xf32>
    %71 = vector.shape_cast %70 : vector<16xf32> to vector<16x1xf32>
    %72 = vector.broadcast %71 : vector<16x1xf32> to vector<16x16xf32>
    %73 = arith.subf %69, %72 : vector<16x16xf32>
    %74 = math.exp %73 : vector<16x16xf32>
    %cst_51 = arith.constant dense<0.000000e+00> : vector<16xf32>
    %75 = vector.multi_reduction <add>, %74, %cst_51 [1] : vector<16x16xf32> to vector<16xf32>
    %76 = vector.shape_cast %75 : vector<16xf32> to vector<16x1xf32>
    %77 = tpu.reciprocal %76 {approx = true} : vector<16x1xf32> -> vector<16x1xf32>
    %78 = vector.broadcast %77 : vector<16x1xf32> to vector<16x16xf32>
    %79 = arith.mulf %74, %78 : vector<16x16xf32>
    %80 = arith.truncf %79 : vector<16x16xf32> to vector<16x16xbf16>
    %cst_52 = arith.constant dense<0.000000e+00> : vector<16x16xf32>
    %81 = tpu.matmul %80, %64, %cst_52 {dimension_numbers = #tpu.dot_dimension_numbers<[1], [0], [0], [1], [0, 0, 1, 1], [], []>} : vector<16x16xbf16>, vector<16x16xbf16>, vector<16x16xf32> -> vector<16x16xf32>
    %c0_53 = arith.constant 0 : index
    %c32_54 = arith.constant 32 : index
    %82 = vector.load %arg12[%c0_53, %c32_54] : memref<32x128xf32, #tpu.memory_space<vmem>>, vector<16x16xf32>
    tpu.vector_store %arg12[%c0_53, %c32_54], %81 {strides = array<i32>} : memref<32x128xf32, #tpu.memory_space<vmem>>, vector<16x16xf32>,
    %c0_55 = arith.constant 0 : index
    %c48 = arith.constant 48 : index
    %83 = vector.load %arg9[%c0_55, %c48] : memref<32x128xbf16, #tpu.memory_space<vmem>>, vector<16x16xbf16>
    %c0_56 = arith.constant 0 : index
    %c48_57 = arith.constant 48 : index
    %84 = vector.load %arg10[%c0_56, %c48_57] : memref<32x128xbf16, #tpu.memory_space<vmem>>, vector<16x16xbf16>
    %c0_58 = arith.constant 0 : index
    %c48_59 = arith.constant 48 : index
    %85 = vector.load %arg11[%c0_58, %c48_59] : memref<32x128xbf16, #tpu.memory_space<vmem>>, vector<16x16xbf16>
    %cst_60 = arith.constant dense<0.000000e+00> : vector<16x16xf32>
    %86 = tpu.matmul %83, %84, %cst_60 {dimension_numbers = #tpu.dot_dimension_numbers<[1], [1], [0], [0], [0, 0, 1, 0], [], []>} : vector<16x16xbf16>, vector<16x16xbf16>, vector<16x16xf32> -> vector<16x16xf32>
    %cst_61 = arith.constant 2.500000e-01 : f32
    %87 = vector.broadcast %cst_61 : f32 to vector<16x16xf32>
    %88 = arith.mulf %86, %87 : vector<16x16xf32>
    %cst_62 = arith.constant -1.000000e+09 : f32
    %89 = vector.broadcast %cst_62 : f32 to vector<16x16xf32>
    %90 = arith.select %19, %89, %88 : vector<16x16xi1>, vector<16x16xf32>
    %cst_63 = arith.constant dense<0xFF800000> : vector<16xf32>
    %91 = vector.multi_reduction <maximumf>, %90, %cst_63 [1] : vector<16x16xf32> to vector<16xf32>
    %92 = vector.shape_cast %91 : vector<16xf32> to vector<16x1xf32>
    %93 = vector.broadcast %92 : vector<16x1xf32> to vector<16x16xf32>
    %94 = arith.subf %90, %93 : vector<16x16xf32>
    %95 = math.exp %94 : vector<16x16xf32>
    %cst_64 = arith.constant dense<0.000000e+00> : vector<16xf32>
    %96 = vector.multi_reduction <add>, %95, %cst_64 [1] : vector<16x16xf32> to vector<16xf32>
    %97 = vector.shape_cast %96 : vector<16xf32> to vector<16x1xf32>
    %98 = tpu.reciprocal %97 {approx = true} : vector<16x1xf32> -> vector<16x1xf32>
    %99 = vector.broadcast %98 : vector<16x1xf32> to vector<16x16xf32>
    %100 = arith.mulf %95, %99 : vector<16x16xf32>
    %101 = arith.truncf %100 : vector<16x16xf32> to vector<16x16xbf16>
    %cst_65 = arith.constant dense<0.000000e+00> : vector<16x16xf32>
    %102 = tpu.matmul %101, %85, %cst_65 {dimension_numbers = #tpu.dot_dimension_numbers<[1], [0], [0], [1], [0, 0, 1, 1], [], []>} : vector<16x16xbf16>, vector<16x16xbf16>, vector<16x16xf32> -> vector<16x16xf32>
    %c0_66 = arith.constant 0 : index
    %c48_67 = arith.constant 48 : index
    %103 = vector.load %arg12[%c0_66, %c48_67] : memref<32x128xf32, #tpu.memory_space<vmem>>, vector<16x16xf32>
    tpu.vector_store %arg12[%c0_66, %c48_67], %102 {strides = array<i32>} : memref<32x128xf32, #tpu.memory_space<vmem>>, vector<16x16xf32>,
    %c0_68 = arith.constant 0 : index
    %c64 = arith.constant 64 : index
    %104 = vector.load %arg9[%c0_68, %c64] : memref<32x128xbf16, #tpu.memory_space<vmem>>, vector<16x16xbf16>
    %c0_69 = arith.constant 0 : index
    %c64_70 = arith.constant 64 : index
    %105 = vector.load %arg10[%c0_69, %c64_70] : memref<32x128xbf16, #tpu.memory_space<vmem>>, vector<16x16xbf16>
    %c0_71 = arith.constant 0 : index
    %c64_72 = arith.constant 64 : index
    %106 = vector.load %arg11[%c0_71, %c64_72] : memref<32x128xbf16, #tpu.memory_space<vmem>>, vector<16x16xbf16>
    %cst_73 = arith.constant dense<0.000000e+00> : vector<16x16xf32>
    %107 = tpu.matmul %104, %105, %cst_73 {dimension_numbers = #tpu.dot_dimension_numbers<[1], [1], [0], [0], [0, 0, 1, 0], [], []>} : vector<16x16xbf16>, vector<16x16xbf16>, vector<16x16xf32> -> vector<16x16xf32>
    %cst_74 = arith.constant 2.500000e-01 : f32
    %108 = vector.broadcast %cst_74 : f32 to vector<16x16xf32>
    %109 = arith.mulf %107, %108 : vector<16x16xf32>
    %cst_75 = arith.constant -1.000000e+09 : f32
    %110 = vector.broadcast %cst_75 : f32 to vector<16x16xf32>
    %111 = arith.select %19, %110, %109 : vector<16x16xi1>, vector<16x16xf32>
    %cst_76 = arith.constant dense<0xFF800000> : vector<16xf32>
    %112 = vector.multi_reduction <maximumf>, %111, %cst_76 [1] : vector<16x16xf32> to vector<16xf32>
    %113 = vector.shape_cast %112 : vector<16xf32> to vector<16x1xf32>
    %114 = vector.broadcast %113 : vector<16x1xf32> to vector<16x16xf32>
    %115 = arith.subf %111, %114 : vector<16x16xf32>
    %116 = math.exp %115 : vector<16x16xf32>
    %cst_77 = arith.constant dense<0.000000e+00> : vector<16xf32>
    %117 = vector.multi_reduction <add>, %116, %cst_77 [1] : vector<16x16xf32> to vector<16xf32>
    %118 = vector.shape_cast %117 : vector<16xf32> to vector<16x1xf32>
    %119 = tpu.reciprocal %118 {approx = true} : vector<16x1xf32> -> vector<16x1xf32>
    %120 = vector.broadcast %119 : vector<16x1xf32> to vector<16x16xf32>
    %121 = arith.mulf %116, %120 : vector<16x16xf32>
    %122 = arith.truncf %121 : vector<16x16xf32> to vector<16x16xbf16>
    %cst_78 = arith.constant dense<0.000000e+00> : vector<16x16xf32>
    %123 = tpu.matmul %122, %106, %cst_78 {dimension_numbers = #tpu.dot_dimension_numbers<[1], [0], [0], [1], [0, 0, 1, 1], [], []>} : vector<16x16xbf16>, vector<16x16xbf16>, vector<16x16xf32> -> vector<16x16xf32>
    %c0_79 = arith.constant 0 : index
    %c64_80 = arith.constant 64 : index
    %124 = vector.load %arg12[%c0_79, %c64_80] : memref<32x128xf32, #tpu.memory_space<vmem>>, vector<16x16xf32>
    tpu.vector_store %arg12[%c0_79, %c64_80], %123 {strides = array<i32>} : memref<32x128xf32, #tpu.memory_space<vmem>>, vector<16x16xf32>,
    %c0_81 = arith.constant 0 : index
    %c80 = arith.constant 80 : index
    %125 = vector.load %arg9[%c0_81, %c80] : memref<32x128xbf16, #tpu.memory_space<vmem>>, vector<16x16xbf16>
    %c0_82 = arith.constant 0 : index
    %c80_83 = arith.constant 80 : index
    %126 = vector.load %arg10[%c0_82, %c80_83] : memref<32x128xbf16, #tpu.memory_space<vmem>>, vector<16x16xbf16>
    %c0_84 = arith.constant 0 : index
    %c80_85 = arith.constant 80 : index
    %127 = vector.load %arg11[%c0_84, %c80_85] : memref<32x128xbf16, #tpu.memory_space<vmem>>, vector<16x16xbf16>
    %cst_86 = arith.constant dense<0.000000e+00> : vector<16x16xf32>
    %128 = tpu.matmul %125, %126, %cst_86 {dimension_numbers = #tpu.dot_dimension_numbers<[1], [1], [0], [0], [0, 0, 1, 0], [], []>} : vector<16x16xbf16>, vector<16x16xbf16>, vector<16x16xf32> -> vector<16x16xf32>
    %cst_87 = arith.constant 2.500000e-01 : f32
    %129 = vector.broadcast %cst_87 : f32 to vector<16x16xf32>
    %130 = arith.mulf %128, %129 : vector<16x16xf32>
    %cst_88 = arith.constant -1.000000e+09 : f32
    %131 = vector.broadcast %cst_88 : f32 to vector<16x16xf32>
    %132 = arith.select %19, %131, %130 : vector<16x16xi1>, vector<16x16xf32>
    %cst_89 = arith.constant dense<0xFF800000> : vector<16xf32>
    %133 = vector.multi_reduction <maximumf>, %132, %cst_89 [1] : vector<16x16xf32> to vector<16xf32>
    %134 = vector.shape_cast %133 : vector<16xf32> to vector<16x1xf32>
    %135 = vector.broadcast %134 : vector<16x1xf32> to vector<16x16xf32>
    %136 = arith.subf %132, %135 : vector<16x16xf32>
    %137 = math.exp %136 : vector<16x16xf32>
    %cst_90 = arith.constant dense<0.000000e+00> : vector<16xf32>
    %138 = vector.multi_reduction <add>, %137, %cst_90 [1] : vector<16x16xf32> to vector<16xf32>
    %139 = vector.shape_cast %138 : vector<16xf32> to vector<16x1xf32>
    %140 = tpu.reciprocal %139 {approx = true} : vector<16x1xf32> -> vector<16x1xf32>
    %141 = vector.broadcast %140 : vector<16x1xf32> to vector<16x16xf32>
    %142 = arith.mulf %137, %141 : vector<16x16xf32>
    %143 = arith.truncf %142 : vector<16x16xf32> to vector<16x16xbf16>
    %cst_91 = arith.constant dense<0.000000e+00> : vector<16x16xf32>
    %144 = tpu.matmul %143, %127, %cst_91 {dimension_numbers = #tpu.dot_dimension_numbers<[1], [0], [0], [1], [0, 0, 1, 1], [], []>} : vector<16x16xbf16>, vector<16x16xbf16>, vector<16x16xf32> -> vector<16x16xf32>
    %c0_92 = arith.constant 0 : index
    %c80_93 = arith.constant 80 : index
    %145 = vector.load %arg12[%c0_92, %c80_93] : memref<32x128xf32, #tpu.memory_space<vmem>>, vector<16x16xf32>
    tpu.vector_store %arg12[%c0_92, %c80_93], %144 {strides = array<i32>} : memref<32x128xf32, #tpu.memory_space<vmem>>, vector<16x16xf32>,
    %c0_94 = arith.constant 0 : index
    %c96 = arith.constant 96 : index
    %146 = vector.load %arg9[%c0_94, %c96] : memref<32x128xbf16, #tpu.memory_space<vmem>>, vector<16x16xbf16>
    %c0_95 = arith.constant 0 : index
    %c96_96 = arith.constant 96 : index
    %147 = vector.load %arg10[%c0_95, %c96_96] : memref<32x128xbf16, #tpu.memory_space<vmem>>, vector<16x16xbf16>
    %c0_97 = arith.constant 0 : index
    %c96_98 = arith.constant 96 : index
    %148 = vector.load %arg11[%c0_97, %c96_98] : memref<32x128xbf16, #tpu.memory_space<vmem>>, vector<16x16xbf16>
    %cst_99 = arith.constant dense<0.000000e+00> : vector<16x16xf32>
    %149 = tpu.matmul %146, %147, %cst_99 {dimension_numbers = #tpu.dot_dimension_numbers<[1], [1], [0], [0], [0, 0, 1, 0], [], []>} : vector<16x16xbf16>, vector<16x16xbf16>, vector<16x16xf32> -> vector<16x16xf32>
    %cst_100 = arith.constant 2.500000e-01 : f32
    %150 = vector.broadcast %cst_100 : f32 to vector<16x16xf32>
    %151 = arith.mulf %149, %150 : vector<16x16xf32>
    %cst_101 = arith.constant -1.000000e+09 : f32
    %152 = vector.broadcast %cst_101 : f32 to vector<16x16xf32>
    %153 = arith.select %19, %152, %151 : vector<16x16xi1>, vector<16x16xf32>
    %cst_102 = arith.constant dense<0xFF800000> : vector<16xf32>
    %154 = vector.multi_reduction <maximumf>, %153, %cst_102 [1] : vector<16x16xf32> to vector<16xf32>
    %155 = vector.shape_cast %154 : vector<16xf32> to vector<16x1xf32>
    %156 = vector.broadcast %155 : vector<16x1xf32> to vector<16x16xf32>
    %157 = arith.subf %153, %156 : vector<16x16xf32>
    %158 = math.exp %157 : vector<16x16xf32>
    %cst_103 = arith.constant dense<0.000000e+00> : vector<16xf32>
    %159 = vector.multi_reduction <add>, %158, %cst_103 [1] : vector<16x16xf32> to vector<16xf32>
    %160 = vector.shape_cast %159 : vector<16xf32> to vector<16x1xf32>
    %161 = tpu.reciprocal %160 {approx = true} : vector<16x1xf32> -> vector<16x1xf32>
    %162 = vector.broadcast %161 : vector<16x1xf32> to vector<16x16xf32>
    %163 = arith.mulf %158, %162 : vector<16x16xf32>
    %164 = arith.truncf %163 : vector<16x16xf32> to vector<16x16xbf16>
    %cst_104 = arith.constant dense<0.000000e+00> : vector<16x16xf32>
    %165 = tpu.matmul %164, %148, %cst_104 {dimension_numbers = #tpu.dot_dimension_numbers<[1], [0], [0], [1], [0, 0, 1, 1], [], []>} : vector<16x16xbf16>, vector<16x16xbf16>, vector<16x16xf32> -> vector<16x16xf32>
    %c0_105 = arith.constant 0 : index
    %c96_106 = arith.constant 96 : index
    %166 = vector.load %arg12[%c0_105, %c96_106] : memref<32x128xf32, #tpu.memory_space<vmem>>, vector<16x16xf32>
    tpu.vector_store %arg12[%c0_105, %c96_106], %165 {strides = array<i32>} : memref<32x128xf32, #tpu.memory_space<vmem>>, vector<16x16xf32>,
    %c0_107 = arith.constant 0 : index
    %c112 = arith.constant 112 : index
    %167 = vector.load %arg9[%c0_107, %c112] : memref<32x128xbf16, #tpu.memory_space<vmem>>, vector<16x16xbf16>
    %c0_108 = arith.constant 0 : index
    %c112_109 = arith.constant 112 : index
    %168 = vector.load %arg10[%c0_108, %c112_109] : memref<32x128xbf16, #tpu.memory_space<vmem>>, vector<16x16xbf16>
    %c0_110 = arith.constant 0 : index
    %c112_111 = arith.constant 112 : index
    %169 = vector.load %arg11[%c0_110, %c112_111] : memref<32x128xbf16, #tpu.memory_space<vmem>>, vector<16x16xbf16>
    %cst_112 = arith.constant dense<0.000000e+00> : vector<16x16xf32>
    %170 = tpu.matmul %167, %168, %cst_112 {dimension_numbers = #tpu.dot_dimension_numbers<[1], [1], [0], [0], [0, 0, 1, 0], [], []>} : vector<16x16xbf16>, vector<16x16xbf16>, vector<16x16xf32> -> vector<16x16xf32>
    %cst_113 = arith.constant 2.500000e-01 : f32
    %171 = vector.broadcast %cst_113 : f32 to vector<16x16xf32>
    %172 = arith.mulf %170, %171 : vector<16x16xf32>
    %cst_114 = arith.constant -1.000000e+09 : f32
    %173 = vector.broadcast %cst_114 : f32 to vector<16x16xf32>
    %174 = arith.select %19, %173, %172 : vector<16x16xi1>, vector<16x16xf32>
    %cst_115 = arith.constant dense<0xFF800000> : vector<16xf32>
    %175 = vector.multi_reduction <maximumf>, %174, %cst_115 [1] : vector<16x16xf32> to vector<16xf32>
    %176 = vector.shape_cast %175 : vector<16xf32> to vector<16x1xf32>
    %177 = vector.broadcast %176 : vector<16x1xf32> to vector<16x16xf32>
    %178 = arith.subf %174, %177 : vector<16x16xf32>
    %179 = math.exp %178 : vector<16x16xf32>
    %cst_116 = arith.constant dense<0.000000e+00> : vector<16xf32>
    %180 = vector.multi_reduction <add>, %179, %cst_116 [1] : vector<16x16xf32> to vector<16xf32>
    %181 = vector.shape_cast %180 : vector<16xf32> to vector<16x1xf32>
    %182 = tpu.reciprocal %181 {approx = true} : vector<16x1xf32> -> vector<16x1xf32>
    %183 = vector.broadcast %182 : vector<16x1xf32> to vector<16x16xf32>
    %184 = arith.mulf %179, %183 : vector<16x16xf32>
    %185 = arith.truncf %184 : vector<16x16xf32> to vector<16x16xbf16>
    %cst_117 = arith.constant dense<0.000000e+00> : vector<16x16xf32>
    %186 = tpu.matmul %185, %169, %cst_117 {dimension_numbers = #tpu.dot_dimension_numbers<[1], [0], [0], [1], [0, 0, 1, 1], [], []>} : vector<16x16xbf16>, vector<16x16xbf16>, vector<16x16xf32> -> vector<16x16xf32>
    %c0_118 = arith.constant 0 : index
    %c112_119 = arith.constant 112 : index
    %187 = vector.load %arg12[%c0_118, %c112_119] : memref<32x128xf32, #tpu.memory_space<vmem>>, vector<16x16xf32>
    tpu.vector_store %arg12[%c0_118, %c112_119], %186 {strides = array<i32>} : memref<32x128xf32, #tpu.memory_space<vmem>>, vector<16x16xf32>,
    %c16_120 = arith.constant 16 : index
    %c0_121 = arith.constant 0 : index
    %188 = vector.load %arg9[%c16_120, %c0_121] : memref<32x128xbf16, #tpu.memory_space<vmem>>, vector<16x16xbf16>
    %c16_122 = arith.constant 16 : index
    %c0_123 = arith.constant 0 : index
    %189 = vector.load %arg10[%c16_122, %c0_123] : memref<32x128xbf16, #tpu.memory_space<vmem>>, vector<16x16xbf16>
    %c16_124 = arith.constant 16 : index
    %c0_125 = arith.constant 0 : index
    %190 = vector.load %arg11[%c16_124, %c0_125] : memref<32x128xbf16, #tpu.memory_space<vmem>>, vector<16x16xbf16>
    %cst_126 = arith.constant dense<0.000000e+00> : vector<16x16xf32>
    %191 = tpu.matmul %188, %189, %cst_126 {dimension_numbers = #tpu.dot_dimension_numbers<[1], [1], [0], [0], [0, 0, 1, 0], [], []>} : vector<16x16xbf16>, vector<16x16xbf16>, vector<16x16xf32> -> vector<16x16xf32>
    %cst_127 = arith.constant 2.500000e-01 : f32
    %192 = vector.broadcast %cst_127 : f32 to vector<16x16xf32>
    %193 = arith.mulf %191, %192 : vector<16x16xf32>
    %cst_128 = arith.constant -1.000000e+09 : f32
    %194 = vector.broadcast %cst_128 : f32 to vector<16x16xf32>
    %195 = arith.select %19, %194, %193 : vector<16x16xi1>, vector<16x16xf32>
    %cst_129 = arith.constant dense<0xFF800000> : vector<16xf32>
    %196 = vector.multi_reduction <maximumf>, %195, %cst_129 [1] : vector<16x16xf32> to vector<16xf32>
    %197 = vector.shape_cast %196 : vector<16xf32> to vector<16x1xf32>
    %198 = vector.broadcast %197 : vector<16x1xf32> to vector<16x16xf32>
    %199 = arith.subf %195, %198 : vector<16x16xf32>
    %200 = math.exp %199 : vector<16x16xf32>
    %cst_130 = arith.constant dense<0.000000e+00> : vector<16xf32>
    %201 = vector.multi_reduction <add>, %200, %cst_130 [1] : vector<16x16xf32> to vector<16xf32>
    %202 = vector.shape_cast %201 : vector<16xf32> to vector<16x1xf32>
    %203 = tpu.reciprocal %202 {approx = true} : vector<16x1xf32> -> vector<16x1xf32>
    %204 = vector.broadcast %203 : vector<16x1xf32> to vector<16x16xf32>
    %205 = arith.mulf %200, %204 : vector<16x16xf32>
    %206 = arith.truncf %205 : vector<16x16xf32> to vector<16x16xbf16>
    %cst_131 = arith.constant dense<0.000000e+00> : vector<16x16xf32>
    %207 = tpu.matmul %206, %190, %cst_131 {dimension_numbers = #tpu.dot_dimension_numbers<[1], [0], [0], [1], [0, 0, 1, 1], [], []>} : vector<16x16xbf16>, vector<16x16xbf16>, vector<16x16xf32> -> vector<16x16xf32>
    %c16_132 = arith.constant 16 : index
    %c0_133 = arith.constant 0 : index
    %208 = vector.load %arg12[%c16_132, %c0_133] : memref<32x128xf32, #tpu.memory_space<vmem>>, vector<16x16xf32>
    tpu.vector_store %arg12[%c16_132, %c0_133], %207 {strides = array<i32>} : memref<32x128xf32, #tpu.memory_space<vmem>>, vector<16x16xf32>,
    %c16_134 = arith.constant 16 : index
    %c16_135 = arith.constant 16 : index
    %209 = vector.load %arg9[%c16_134, %c16_135] : memref<32x128xbf16, #tpu.memory_space<vmem>>, vector<16x16xbf16>
    %c16_136 = arith.constant 16 : index
    %c16_137 = arith.constant 16 : index
    %210 = vector.load %arg10[%c16_136, %c16_137] : memref<32x128xbf16, #tpu.memory_space<vmem>>, vector<16x16xbf16>
    %c16_138 = arith.constant 16 : index
    %c16_139 = arith.constant 16 : index
    %211 = vector.load %arg11[%c16_138, %c16_139] : memref<32x128xbf16, #tpu.memory_space<vmem>>, vector<16x16xbf16>
    %cst_140 = arith.constant dense<0.000000e+00> : vector<16x16xf32>
    %212 = tpu.matmul %209, %210, %cst_140 {dimension_numbers = #tpu.dot_dimension_numbers<[1], [1], [0], [0], [0, 0, 1, 0], [], []>} : vector<16x16xbf16>, vector<16x16xbf16>, vector<16x16xf32> -> vector<16x16xf32>
    %cst_141 = arith.constant 2.500000e-01 : f32
    %213 = vector.broadcast %cst_141 : f32 to vector<16x16xf32>
    %214 = arith.mulf %212, %213 : vector<16x16xf32>
    %cst_142 = arith.constant -1.000000e+09 : f32
    %215 = vector.broadcast %cst_142 : f32 to vector<16x16xf32>
    %216 = arith.select %19, %215, %214 : vector<16x16xi1>, vector<16x16xf32>
    %cst_143 = arith.constant dense<0xFF800000> : vector<16xf32>
    %217 = vector.multi_reduction <maximumf>, %216, %cst_143 [1] : vector<16x16xf32> to vector<16xf32>
    %218 = vector.shape_cast %217 : vector<16xf32> to vector<16x1xf32>
    %219 = vector.broadcast %218 : vector<16x1xf32> to vector<16x16xf32>
    %220 = arith.subf %216, %219 : vector<16x16xf32>
    %221 = math.exp %220 : vector<16x16xf32>
    %cst_144 = arith.constant dense<0.000000e+00> : vector<16xf32>
    %222 = vector.multi_reduction <add>, %221, %cst_144 [1] : vector<16x16xf32> to vector<16xf32>
    %223 = vector.shape_cast %222 : vector<16xf32> to vector<16x1xf32>
    %224 = tpu.reciprocal %223 {approx = true} : vector<16x1xf32> -> vector<16x1xf32>
    %225 = vector.broadcast %224 : vector<16x1xf32> to vector<16x16xf32>
    %226 = arith.mulf %221, %225 : vector<16x16xf32>
    %227 = arith.truncf %226 : vector<16x16xf32> to vector<16x16xbf16>
    %cst_145 = arith.constant dense<0.000000e+00> : vector<16x16xf32>
    %228 = tpu.matmul %227, %211, %cst_145 {dimension_numbers = #tpu.dot_dimension_numbers<[1], [0], [0], [1], [0, 0, 1, 1], [], []>} : vector<16x16xbf16>, vector<16x16xbf16>, vector<16x16xf32> -> vector<16x16xf32>
    %c16_146 = arith.constant 16 : index
    %c16_147 = arith.constant 16 : index
    %229 = vector.load %arg12[%c16_146, %c16_147] : memref<32x128xf32, #tpu.memory_space<vmem>>, vector<16x16xf32>
    tpu.vector_store %arg12[%c16_146, %c16_147], %228 {strides = array<i32>} : memref<32x128xf32, #tpu.memory_space<vmem>>, vector<16x16xf32>,
    %c16_148 = arith.constant 16 : index
    %c32_149 = arith.constant 32 : index
    %230 = vector.load %arg9[%c16_148, %c32_149] : memref<32x128xbf16, #tpu.memory_space<vmem>>, vector<16x16xbf16>
    %c16_150 = arith.constant 16 : index
    %c32_151 = arith.constant 32 : index
    %231 = vector.load %arg10[%c16_150, %c32_151] : memref<32x128xbf16, #tpu.memory_space<vmem>>, vector<16x16xbf16>
    %c16_152 = arith.constant 16 : index
    %c32_153 = arith.constant 32 : index
    %232 = vector.load %arg11[%c16_152, %c32_153] : memref<32x128xbf16, #tpu.memory_space<vmem>>, vector<16x16xbf16>
    %cst_154 = arith.constant dense<0.000000e+00> : vector<16x16xf32>
    %233 = tpu.matmul %230, %231, %cst_154 {dimension_numbers = #tpu.dot_dimension_numbers<[1], [1], [0], [0], [0, 0, 1, 0], [], []>} : vector<16x16xbf16>, vector<16x16xbf16>, vector<16x16xf32> -> vector<16x16xf32>
    %cst_155 = arith.constant 2.500000e-01 : f32
    %234 = vector.broadcast %cst_155 : f32 to vector<16x16xf32>
    %235 = arith.mulf %233, %234 : vector<16x16xf32>
    %cst_156 = arith.constant -1.000000e+09 : f32
    %236 = vector.broadcast %cst_156 : f32 to vector<16x16xf32>
    %237 = arith.select %19, %236, %235 : vector<16x16xi1>, vector<16x16xf32>
    %cst_157 = arith.constant dense<0xFF800000> : vector<16xf32>
    %238 = vector.multi_reduction <maximumf>, %237, %cst_157 [1] : vector<16x16xf32> to vector<16xf32>
    %239 = vector.shape_cast %238 : vector<16xf32> to vector<16x1xf32>
    %240 = vector.broadcast %239 : vector<16x1xf32> to vector<16x16xf32>
    %241 = arith.subf %237, %240 : vector<16x16xf32>
    %242 = math.exp %241 : vector<16x16xf32>
    %cst_158 = arith.constant dense<0.000000e+00> : vector<16xf32>
    %243 = vector.multi_reduction <add>, %242, %cst_158 [1] : vector<16x16xf32> to vector<16xf32>
    %244 = vector.shape_cast %243 : vector<16xf32> to vector<16x1xf32>
    %245 = tpu.reciprocal %244 {approx = true} : vector<16x1xf32> -> vector<16x1xf32>
    %246 = vector.broadcast %245 : vector<16x1xf32> to vector<16x16xf32>
    %247 = arith.mulf %242, %246 : vector<16x16xf32>
    %248 = arith.truncf %247 : vector<16x16xf32> to vector<16x16xbf16>
    %cst_159 = arith.constant dense<0.000000e+00> : vector<16x16xf32>
    %249 = tpu.matmul %248, %232, %cst_159 {dimension_numbers = #tpu.dot_dimension_numbers<[1], [0], [0], [1], [0, 0, 1, 1], [], []>} : vector<16x16xbf16>, vector<16x16xbf16>, vector<16x16xf32> -> vector<16x16xf32>
    %c16_160 = arith.constant 16 : index
    %c32_161 = arith.constant 32 : index
    %250 = vector.load %arg12[%c16_160, %c32_161] : memref<32x128xf32, #tpu.memory_space<vmem>>, vector<16x16xf32>
    tpu.vector_store %arg12[%c16_160, %c32_161], %249 {strides = array<i32>} : memref<32x128xf32, #tpu.memory_space<vmem>>, vector<16x16xf32>,
    %c16_162 = arith.constant 16 : index
    %c48_163 = arith.constant 48 : index
    %251 = vector.load %arg9[%c16_162, %c48_163] : memref<32x128xbf16, #tpu.memory_space<vmem>>, vector<16x16xbf16>
    %c16_164 = arith.constant 16 : index
    %c48_165 = arith.constant 48 : index
    %252 = vector.load %arg10[%c16_164, %c48_165] : memref<32x128xbf16, #tpu.memory_space<vmem>>, vector<16x16xbf16>
    %c16_166 = arith.constant 16 : index
    %c48_167 = arith.constant 48 : index
    %253 = vector.load %arg11[%c16_166, %c48_167] : memref<32x128xbf16, #tpu.memory_space<vmem>>, vector<16x16xbf16>
    %cst_168 = arith.constant dense<0.000000e+00> : vector<16x16xf32>
    %254 = tpu.matmul %251, %252, %cst_168 {dimension_numbers = #tpu.dot_dimension_numbers<[1], [1], [0], [0], [0, 0, 1, 0], [], []>} : vector<16x16xbf16>, vector<16x16xbf16>, vector<16x16xf32> -> vector<16x16xf32>
    %cst_169 = arith.constant 2.500000e-01 : f32
    %255 = vector.broadcast %cst_169 : f32 to vector<16x16xf32>
    %256 = arith.mulf %254, %255 : vector<16x16xf32>
    %cst_170 = arith.constant -1.000000e+09 : f32
    %257 = vector.broadcast %cst_170 : f32 to vector<16x16xf32>
    %258 = arith.select %19, %257, %256 : vector<16x16xi1>, vector<16x16xf32>
    %cst_171 = arith.constant dense<0xFF800000> : vector<16xf32>
    %259 = vector.multi_reduction <maximumf>, %258, %cst_171 [1] : vector<16x16xf32> to vector<16xf32>
    %260 = vector.shape_cast %259 : vector<16xf32> to vector<16x1xf32>
    %261 = vector.broadcast %260 : vector<16x1xf32> to vector<16x16xf32>
    %262 = arith.subf %258, %261 : vector<16x16xf32>
    %263 = math.exp %262 : vector<16x16xf32>
    %cst_172 = arith.constant dense<0.000000e+00> : vector<16xf32>
    %264 = vector.multi_reduction <add>, %263, %cst_172 [1] : vector<16x16xf32> to vector<16xf32>
    %265 = vector.shape_cast %264 : vector<16xf32> to vector<16x1xf32>
    %266 = tpu.reciprocal %265 {approx = true} : vector<16x1xf32> -> vector<16x1xf32>
    %267 = vector.broadcast %266 : vector<16x1xf32> to vector<16x16xf32>
    %268 = arith.mulf %263, %267 : vector<16x16xf32>
    %269 = arith.truncf %268 : vector<16x16xf32> to vector<16x16xbf16>
    %cst_173 = arith.constant dense<0.000000e+00> : vector<16x16xf32>
    %270 = tpu.matmul %269, %253, %cst_173 {dimension_numbers = #tpu.dot_dimension_numbers<[1], [0], [0], [1], [0, 0, 1, 1], [], []>} : vector<16x16xbf16>, vector<16x16xbf16>, vector<16x16xf32> -> vector<16x16xf32>
    %c16_174 = arith.constant 16 : index
    %c48_175 = arith.constant 48 : index
    %271 = vector.load %arg12[%c16_174, %c48_175] : memref<32x128xf32, #tpu.memory_space<vmem>>, vector<16x16xf32>
    tpu.vector_store %arg12[%c16_174, %c48_175], %270 {strides = array<i32>} : memref<32x128xf32, #tpu.memory_space<vmem>>, vector<16x16xf32>,
    %c16_176 = arith.constant 16 : index
    %c64_177 = arith.constant 64 : index
    %272 = vector.load %arg9[%c16_176, %c64_177] : memref<32x128xbf16, #tpu.memory_space<vmem>>, vector<16x16xbf16>
    %c16_178 = arith.constant 16 : index
    %c64_179 = arith.constant 64 : index
    %273 = vector.load %arg10[%c16_178, %c64_179] : memref<32x128xbf16, #tpu.memory_space<vmem>>, vector<16x16xbf16>
    %c16_180 = arith.constant 16 : index
    %c64_181 = arith.constant 64 : index
    %274 = vector.load %arg11[%c16_180, %c64_181] : memref<32x128xbf16, #tpu.memory_space<vmem>>, vector<16x16xbf16>
    %cst_182 = arith.constant dense<0.000000e+00> : vector<16x16xf32>
    %275 = tpu.matmul %272, %273, %cst_182 {dimension_numbers = #tpu.dot_dimension_numbers<[1], [1], [0], [0], [0, 0, 1, 0], [], []>} : vector<16x16xbf16>, vector<16x16xbf16>, vector<16x16xf32> -> vector<16x16xf32>
    %cst_183 = arith.constant 2.500000e-01 : f32
    %276 = vector.broadcast %cst_183 : f32 to vector<16x16xf32>
    %277 = arith.mulf %275, %276 : vector<16x16xf32>
    %cst_184 = arith.constant -1.000000e+09 : f32
    %278 = vector.broadcast %cst_184 : f32 to vector<16x16xf32>
    %279 = arith.select %19, %278, %277 : vector<16x16xi1>, vector<16x16xf32>
    %cst_185 = arith.constant dense<0xFF800000> : vector<16xf32>
    %280 = vector.multi_reduction <maximumf>, %279, %cst_185 [1] : vector<16x16xf32> to vector<16xf32>
    %281 = vector.shape_cast %280 : vector<16xf32> to vector<16x1xf32>
    %282 = vector.broadcast %281 : vector<16x1xf32> to vector<16x16xf32>
    %283 = arith.subf %279, %282 : vector<16x16xf32>
    %284 = math.exp %283 : vector<16x16xf32>
    %cst_186 = arith.constant dense<0.000000e+00> : vector<16xf32>
    %285 = vector.multi_reduction <add>, %284, %cst_186 [1] : vector<16x16xf32> to vector<16xf32>
    %286 = vector.shape_cast %285 : vector<16xf32> to vector<16x1xf32>
    %287 = tpu.reciprocal %286 {approx = true} : vector<16x1xf32> -> vector<16x1xf32>
    %288 = vector.broadcast %287 : vector<16x1xf32> to vector<16x16xf32>
    %289 = arith.mulf %284, %288 : vector<16x16xf32>
    %290 = arith.truncf %289 : vector<16x16xf32> to vector<16x16xbf16>
    %cst_187 = arith.constant dense<0.000000e+00> : vector<16x16xf32>
    %291 = tpu.matmul %290, %274, %cst_187 {dimension_numbers = #tpu.dot_dimension_numbers<[1], [0], [0], [1], [0, 0, 1, 1], [], []>} : vector<16x16xbf16>, vector<16x16xbf16>, vector<16x16xf32> -> vector<16x16xf32>
    %c16_188 = arith.constant 16 : index
    %c64_189 = arith.constant 64 : index
    %292 = vector.load %arg12[%c16_188, %c64_189] : memref<32x128xf32, #tpu.memory_space<vmem>>, vector<16x16xf32>
    tpu.vector_store %arg12[%c16_188, %c64_189], %291 {strides = array<i32>} : memref<32x128xf32, #tpu.memory_space<vmem>>, vector<16x16xf32>,
    %c16_190 = arith.constant 16 : index
    %c80_191 = arith.constant 80 : index
    %293 = vector.load %arg9[%c16_190, %c80_191] : memref<32x128xbf16, #tpu.memory_space<vmem>>, vector<16x16xbf16>
    %c16_192 = arith.constant 16 : index
    %c80_193 = arith.constant 80 : index
    %294 = vector.load %arg10[%c16_192, %c80_193] : memref<32x128xbf16, #tpu.memory_space<vmem>>, vector<16x16xbf16>
    %c16_194 = arith.constant 16 : index
    %c80_195 = arith.constant 80 : index
    %295 = vector.load %arg11[%c16_194, %c80_195] : memref<32x128xbf16, #tpu.memory_space<vmem>>, vector<16x16xbf16>
    %cst_196 = arith.constant dense<0.000000e+00> : vector<16x16xf32>
    %296 = tpu.matmul %293, %294, %cst_196 {dimension_numbers = #tpu.dot_dimension_numbers<[1], [1], [0], [0], [0, 0, 1, 0], [], []>} : vector<16x16xbf16>, vector<16x16xbf16>, vector<16x16xf32> -> vector<16x16xf32>
    %cst_197 = arith.constant 2.500000e-01 : f32
    %297 = vector.broadcast %cst_197 : f32 to vector<16x16xf32>
    %298 = arith.mulf %296, %297 : vector<16x16xf32>
    %cst_198 = arith.constant -1.000000e+09 : f32
    %299 = vector.broadcast %cst_198 : f32 to vector<16x16xf32>
    %300 = arith.select %19, %299, %298 : vector<16x16xi1>, vector<16x16xf32>
    %cst_199 = arith.constant dense<0xFF800000> : vector<16xf32>
    %301 = vector.multi_reduction <maximumf>, %300, %cst_199 [1] : vector<16x16xf32> to vector<16xf32>
    %302 = vector.shape_cast %301 : vector<16xf32> to vector<16x1xf32>
    %303 = vector.broadcast %302 : vector<16x1xf32> to vector<16x16xf32>
    %304 = arith.subf %300, %303 : vector<16x16xf32>
    %305 = math.exp %304 : vector<16x16xf32>
    %cst_200 = arith.constant dense<0.000000e+00> : vector<16xf32>
    %306 = vector.multi_reduction <add>, %305, %cst_200 [1] : vector<16x16xf32> to vector<16xf32>
    %307 = vector.shape_cast %306 : vector<16xf32> to vector<16x1xf32>
    %308 = tpu.reciprocal %307 {approx = true} : vector<16x1xf32> -> vector<16x1xf32>
    %309 = vector.broadcast %308 : vector<16x1xf32> to vector<16x16xf32>
    %310 = arith.mulf %305, %309 : vector<16x16xf32>
    %311 = arith.truncf %310 : vector<16x16xf32> to vector<16x16xbf16>
    %cst_201 = arith.constant dense<0.000000e+00> : vector<16x16xf32>
    %312 = tpu.matmul %311, %295, %cst_201 {dimension_numbers = #tpu.dot_dimension_numbers<[1], [0], [0], [1], [0, 0, 1, 1], [], []>} : vector<16x16xbf16>, vector<16x16xbf16>, vector<16x16xf32> -> vector<16x16xf32>
    %c16_202 = arith.constant 16 : index
    %c80_203 = arith.constant 80 : index
    %313 = vector.load %arg12[%c16_202, %c80_203] : memref<32x128xf32, #tpu.memory_space<vmem>>, vector<16x16xf32>
    tpu.vector_store %arg12[%c16_202, %c80_203], %312 {strides = array<i32>} : memref<32x128xf32, #tpu.memory_space<vmem>>, vector<16x16xf32>,
    %c16_204 = arith.constant 16 : index
    %c96_205 = arith.constant 96 : index
    %314 = vector.load %arg9[%c16_204, %c96_205] : memref<32x128xbf16, #tpu.memory_space<vmem>>, vector<16x16xbf16>
    %c16_206 = arith.constant 16 : index
    %c96_207 = arith.constant 96 : index
    %315 = vector.load %arg10[%c16_206, %c96_207] : memref<32x128xbf16, #tpu.memory_space<vmem>>, vector<16x16xbf16>
    %c16_208 = arith.constant 16 : index
    %c96_209 = arith.constant 96 : index
    %316 = vector.load %arg11[%c16_208, %c96_209] : memref<32x128xbf16, #tpu.memory_space<vmem>>, vector<16x16xbf16>
    %cst_210 = arith.constant dense<0.000000e+00> : vector<16x16xf32>
    %317 = tpu.matmul %314, %315, %cst_210 {dimension_numbers = #tpu.dot_dimension_numbers<[1], [1], [0], [0], [0, 0, 1, 0], [], []>} : vector<16x16xbf16>, vector<16x16xbf16>, vector<16x16xf32> -> vector<16x16xf32>
    %cst_211 = arith.constant 2.500000e-01 : f32
    %318 = vector.broadcast %cst_211 : f32 to vector<16x16xf32>
    %319 = arith.mulf %317, %318 : vector<16x16xf32>
    %cst_212 = arith.constant -1.000000e+09 : f32
    %320 = vector.broadcast %cst_212 : f32 to vector<16x16xf32>
    %321 = arith.select %19, %320, %319 : vector<16x16xi1>, vector<16x16xf32>
    %cst_213 = arith.constant dense<0xFF800000> : vector<16xf32>
    %322 = vector.multi_reduction <maximumf>, %321, %cst_213 [1] : vector<16x16xf32> to vector<16xf32>
    %323 = vector.shape_cast %322 : vector<16xf32> to vector<16x1xf32>
    %324 = vector.broadcast %323 : vector<16x1xf32> to vector<16x16xf32>
    %325 = arith.subf %321, %324 : vector<16x16xf32>
    %326 = math.exp %325 : vector<16x16xf32>
    %cst_214 = arith.constant dense<0.000000e+00> : vector<16xf32>
    %327 = vector.multi_reduction <add>, %326, %cst_214 [1] : vector<16x16xf32> to vector<16xf32>
    %328 = vector.shape_cast %327 : vector<16xf32> to vector<16x1xf32>
    %329 = tpu.reciprocal %328 {approx = true} : vector<16x1xf32> -> vector<16x1xf32>
    %330 = vector.broadcast %329 : vector<16x1xf32> to vector<16x16xf32>
    %331 = arith.mulf %326, %330 : vector<16x16xf32>
    %332 = arith.truncf %331 : vector<16x16xf32> to vector<16x16xbf16>
    %cst_215 = arith.constant dense<0.000000e+00> : vector<16x16xf32>
    %333 = tpu.matmul %332, %316, %cst_215 {dimension_numbers = #tpu.dot_dimension_numbers<[1], [0], [0], [1], [0, 0, 1, 1], [], []>} : vector<16x16xbf16>, vector<16x16xbf16>, vector<16x16xf32> -> vector<16x16xf32>
    %c16_216 = arith.constant 16 : index
    %c96_217 = arith.constant 96 : index
    %334 = vector.load %arg12[%c16_216, %c96_217] : memref<32x128xf32, #tpu.memory_space<vmem>>, vector<16x16xf32>
    tpu.vector_store %arg12[%c16_216, %c96_217], %333 {strides = array<i32>} : memref<32x128xf32, #tpu.memory_space<vmem>>, vector<16x16xf32>,
    %c16_218 = arith.constant 16 : index
    %c112_219 = arith.constant 112 : index
    %335 = vector.load %arg9[%c16_218, %c112_219] : memref<32x128xbf16, #tpu.memory_space<vmem>>, vector<16x16xbf16>
    %c16_220 = arith.constant 16 : index
    %c112_221 = arith.constant 112 : index
    %336 = vector.load %arg10[%c16_220, %c112_221] : memref<32x128xbf16, #tpu.memory_space<vmem>>, vector<16x16xbf16>
    %c16_222 = arith.constant 16 : index
    %c112_223 = arith.constant 112 : index
    %337 = vector.load %arg11[%c16_222, %c112_223] : memref<32x128xbf16, #tpu.memory_space<vmem>>, vector<16x16xbf16>
    %cst_224 = arith.constant dense<0.000000e+00> : vector<16x16xf32>
    %338 = tpu.matmul %335, %336, %cst_224 {dimension_numbers = #tpu.dot_dimension_numbers<[1], [1], [0], [0], [0, 0, 1, 0], [], []>} : vector<16x16xbf16>, vector<16x16xbf16>, vector<16x16xf32> -> vector<16x16xf32>
    %cst_225 = arith.constant 2.500000e-01 : f32
    %339 = vector.broadcast %cst_225 : f32 to vector<16x16xf32>
    %340 = arith.mulf %338, %339 : vector<16x16xf32>
    %cst_226 = arith.constant -1.000000e+09 : f32
    %341 = vector.broadcast %cst_226 : f32 to vector<16x16xf32>
    %342 = arith.select %19, %341, %340 : vector<16x16xi1>, vector<16x16xf32>
    %cst_227 = arith.constant dense<0xFF800000> : vector<16xf32>
    %343 = vector.multi_reduction <maximumf>, %342, %cst_227 [1] : vector<16x16xf32> to vector<16xf32>
    %344 = vector.shape_cast %343 : vector<16xf32> to vector<16x1xf32>
    %345 = vector.broadcast %344 : vector<16x1xf32> to vector<16x16xf32>
    %346 = arith.subf %342, %345 : vector<16x16xf32>
    %347 = math.exp %346 : vector<16x16xf32>
    %cst_228 = arith.constant dense<0.000000e+00> : vector<16xf32>
    %348 = vector.multi_reduction <add>, %347, %cst_228 [1] : vector<16x16xf32> to vector<16xf32>
    %349 = vector.shape_cast %348 : vector<16xf32> to vector<16x1xf32>
    %350 = tpu.reciprocal %349 {approx = true} : vector<16x1xf32> -> vector<16x1xf32>
    %351 = vector.broadcast %350 : vector<16x1xf32> to vector<16x16xf32>
    %352 = arith.mulf %347, %351 : vector<16x16xf32>
    %353 = arith.truncf %352 : vector<16x16xf32> to vector<16x16xbf16>
    %cst_229 = arith.constant dense<0.000000e+00> : vector<16x16xf32>
    %354 = tpu.matmul %353, %337, %cst_229 {dimension_numbers = #tpu.dot_dimension_numbers<[1], [0], [0], [1], [0, 0, 1, 1], [], []>} : vector<16x16xbf16>, vector<16x16xbf16>, vector<16x16xf32> -> vector<16x16xf32>
    %c16_230 = arith.constant 16 : index
    %c112_231 = arith.constant 112 : index
    %355 = vector.load %arg12[%c16_230, %c112_231] : memref<32x128xf32, #tpu.memory_space<vmem>>, vector<16x16xf32>
    tpu.vector_store %arg12[%c16_230, %c112_231], %354 {strides = array<i32>} : memref<32x128xf32, #tpu.memory_space<vmem>>, vector<16x16xf32>,
    %c0_232 = arith.constant 0 : index
    %c0_233 = arith.constant 0 : index
    %356 = vector.load %arg12[%c0_232, %c0_233] : memref<32x128xf32, #tpu.memory_space<vmem>>, vector<32x128xf32>
    %357 = arith.truncf %356 : vector<32x128xf32> to vector<32x128xbf16>
    %c0_234 = arith.constant 0 : index
    %c0_235 = arith.constant 0 : index
    %358 = vector.load %arg6[%c0_234, %c0_235] : memref<128x128xbf16, #tpu.memory_space<vmem>>, vector<128x128xbf16>
    %cst_236 = arith.constant dense<0.000000e+00> : vector<32x128xf32>
    %359 = tpu.matmul %357, %358, %cst_236 {dimension_numbers = #tpu.dot_dimension_numbers<[1], [0], [0], [1], [0, 0, 1, 1], [], []>} : vector<32x128xbf16>, vector<128x128xbf16>, vector<32x128xf32> -> vector<32x128xf32>
    %c0_237 = arith.constant 0 : index
    %c0_238 = arith.constant 0 : index
    %360 = vector.load %arg7[%c0_237, %c0_238] : memref<1x128xf32, #tpu.memory_space<vmem>>, vector<1x128xf32>
    %361 = vector.broadcast %360 : vector<1x128xf32> to vector<32x128xf32>
    %362 = arith.addf %359, %361 : vector<32x128xf32>
    %363 = vector.shape_cast %362 : vector<32x128xf32> to vector<2x16x128xf32>
    %c0_239 = arith.constant 0 : index
    %c0_240 = arith.constant 0 : index
    %c0_241 = arith.constant 0 : index
    %364 = vector.load %arg8[%c0_239, %c0_240, %c0_241] : memref<2x16x128xf32, #tpu.memory_space<vmem>>, vector<2x16x128xf32>
    tpu.vector_store %arg8[%c0_239, %c0_240, %c0_241], %363 {strides = array<i32>} : memref<2x16x128xf32, #tpu.memory_space<vmem>>, vector<2x16x128xf32>,
    return
  }
  func.func @transform_0(%arg0: i32, %arg1: memref<1xi32, #tpu.memory_space<smem>>) -> (i32, i32, i32) {
    %c0_i32 = arith.constant 0 : i32
    %c0_i32_0 = arith.constant 0 : i32
    %c0_i32_1 = arith.constant 0 : i32
    return %arg0, %c0_i32, %c0_i32_0 : i32, i32, i32
  }
  func.func @transform_1(%arg0: i32, %arg1: memref<1xi32, #tpu.memory_space<smem>>) -> (i32, i32, i32) {
    %c0_i32 = arith.constant 0 : i32
    %c0_i32_0 = arith.constant 0 : i32
    %c0_i32_1 = arith.constant 0 : i32
    %c0_i32_2 = arith.constant 0 : i32
    return %c0_i32, %c0_i32_0, %c0_i32_1 : i32, i32, i32
  }
  func.func @transform_2(%arg0: i32, %arg1: memref<1xi32, #tpu.memory_space<smem>>) -> (i32, i32) {
    %c0_i32 = arith.constant 0 : i32
    %c0_i32_0 = arith.constant 0 : i32
    %c0_i32_1 = arith.constant 0 : i32
    return %c0_i32, %c0_i32_0 : i32, i32
  }
  func.func @transform_3(%arg0: i32, %arg1: memref<1xi32, #tpu.memory_space<smem>>) -> (i32, i32) {
    %c0_i32 = arith.constant 0 : i32
    %c0_i32_0 = arith.constant 0 : i32
    %c0_i32_1 = arith.constant 0 : i32
    return %c0_i32, %c0_i32_0 : i32, i32
  }
  func.func @transform_4(%arg0: i32, %arg1: memref<1xi32, #tpu.memory_space<smem>>) -> (i32, i32) {
    %c0_i32 = arith.constant 0 : i32
    %c0_i32_0 = arith.constant 0 : i32
    %c0_i32_1 = arith.constant 0 : i32
    return %c0_i32, %c0_i32_0 : i32, i32
  }
  func.func @transform_5(%arg0: i32, %arg1: memref<1xi32, #tpu.memory_space<smem>>) -> (i32, i32) {
    %c0_i32 = arith.constant 0 : i32
    %c0_i32_0 = arith.constant 0 : i32
    %c0_i32_1 = arith.constant 0 : i32
    return %c0_i32, %c0_i32_0 : i32, i32
  }
  func.func @transform_6(%arg0: i32, %arg1: memref<1xi32, #tpu.memory_space<smem>>) -> (i32, i32, i32) {
    %c0_i32 = arith.constant 0 : i32
    %c0_i32_0 = arith.constant 0 : i32
    %c0_i32_1 = arith.constant 0 : i32
    return %arg0, %c0_i32, %c0_i32_0 : i32, i32, i32
  }
}

</mosaic_0001>

<llo_original>
// kernel: tpu_custom_call.1
$region0: #{tpu_custom_call.1}
  #allocation0 [shape = 'u32[]', space=smem, size = 0x4, offset = 0x4, fixed_abs, tag = 'smem constant byte address 0x4 - core index']
  #allocation1 [shape = 'u32[144,128]{1,0:T(1,128)}', space=vmem, size = 0x12000, scoped, tag = 'internal scratch']
  #allocation2 [shape = 'bf16[32,128]{1,0:T(16,128)(2,1)}', space=vmem, size = 0x2000, scoped, tag = 'scratch operand']
  #allocation3 [shape = 'bf16[32,128]{1,0:T(16,128)(2,1)}', space=vmem, size = 0x2000, scoped, tag = 'scratch operand']
  #allocation4 [shape = 'bf16[32,128]{1,0:T(16,128)(2,1)}', space=vmem, size = 0x2000, scoped, tag = 'scratch operand']
  #allocation5 [shape = 'f32[32,128]{1,0:T(8,128)}', space=vmem, size = 0x4000, scoped, tag = 'scratch operand']
  #allocation6 [shape = 's32[1]{0}', space=sflag, size = 0x4, scoped, tag = 'scoped memory for tpu_custom_call.1']
  #allocation7 [shape = 's32[1]{0:T(128)S(6)}', space=smem, size = 0x200, scoped, tag = 'prefetched SMEM operand 0']
  %s0 = inlined_call_operand.<no memory space> [shape: s32[1], index: 0, kind: input, shape index: {}]
  %s1 = inlined_call_operand.hbm [shape: bf16[2,16,128], index: 1, kind: input, shape index: {}]
  %s2 = inlined_call_operand.hbm [shape: s32[1,16,16], index: 2, kind: input, shape index: {}]
  %s3 = inlined_call_operand.hbm [shape: bf16[128,384], index: 3, kind: input, shape index: {}]
  %s4 = inlined_call_operand.vmem [shape: f32[1,384], index: 4, kind: input, shape index: {}]
  %s5 = inlined_call_operand.hbm [shape: bf16[128,128], index: 5, kind: input, shape index: {}]
  %s6 = inlined_call_operand.vmem [shape: f32[1,128], index: 6, kind: input, shape index: {}]
  %s7 = inlined_call_operand.hbm [shape: f32[2,16,128], index: 7, kind: output, shape index: {}]
  %s8 = sld [smem:[#allocation0]]
  $region50: #{tpu_custom_call.1} parent=0
    _
  %s10 = ssub.s32 1, %s8
  %s11 = scalar_select 0, %s10, %s8
  %12 = sst [smem:[#allocation7]] %s0
  $region1: #{tpu_custom_call.1} parent=0
    #allocation8 [shape = 'u8[8192]{0}', space=vmem, size = 0x2000, scoped, tag = 'input window, operand 1, single buffered']
    #allocation9 [shape = 's32[1]{0}', space=sflag, size = 0x4, scoped, tag = 'scoped memory for tpu_custom_call.1']
    #allocation10 [shape = 's32[1]{0}', space=sflag, size = 0x4, scoped, tag = 'scoped memory for tpu_custom_call.1']
    #allocation11 [shape = 'u8[8192]{0}', space=vmem, size = 0x2000, scoped, tag = 'input window, operand 2, single buffered']
    #allocation12 [shape = 's32[1]{0}', space=sflag, size = 0x4, scoped, tag = 'scoped memory for tpu_custom_call.1']
    #allocation13 [shape = 'u8[98304]{0}', space=vmem, size = 0x18000, scoped, tag = 'input window, operand 3, single buffered']
    #allocation14 [shape = 'u8[32768]{0}', space=vmem, size = 0x8000, scoped, tag = 'input window, operand 5, single buffered']
    #allocation15 [shape = 's32[1]{0}', space=sflag, size = 0x4, scoped, tag = 'scoped memory for tpu_custom_call.1']
    #allocation16 [shape = 'u8[16384]{0}', space=vmem, size = 0x4000, scoped, tag = 'output window, operand 0, single buffered']
    %13 = vsyncpa [#allocation9], 0
    %14 = vsyncpa [#allocation12], 0
    %15 = vsyncpa [#allocation15], 0
    %16 = vsyncpa [#allocation10], 0
    // Predicated region
    $region2: #{tpu_custom_call.1} parent=1 // pred_check
      _
    $region3: #{tpu_custom_call.1} parent=1 // pred_check_branch
      %18 = sbr.rel (0) target = $region5
    $region4: #{tpu_custom_call.1} parent=1 // pred_region
      %s20 = ssub.s32 256, 256
      %21 = vsyncadd [#allocation9], %s20
      %s22 = sshll.u32 [#allocation8], 4
      %s23 = int_to_ptr.vmem [resolvable:$true] %s22
      %28 = dma.hbm_to_vmem [thread:$0]  %s1, 256, %s23, [#allocation9], 64, 64, 4
    $region5: #{tpu_custom_call.1} parent=1 // pred_fallthru
      _
    // Predicated region
    $region6: #{tpu_custom_call.1} parent=1 // pred_check
      _
    $region7: #{tpu_custom_call.1} parent=1 // pred_check_branch
      %30 = sbr.rel (0) target = $region9
    $region8: #{tpu_custom_call.1} parent=1 // pred_region
      %s32 = ssub.s32 256, 256
      %33 = vsyncadd [#allocation12], %s32
      %s34 = sshll.u32 [#allocation11], 4
      %s35 = int_to_ptr.vmem [resolvable:$true] %s34
      %40 = dma.hbm_to_vmem [thread:$0]  %s2, 256, %s35, [#allocation12], 128, 128, 8
    $region9: #{tpu_custom_call.1} parent=1 // pred_fallthru
      _
    // Predicated region
    $region10: #{tpu_custom_call.1} parent=1 // pred_check
      _
    $region11: #{tpu_custom_call.1} parent=1 // pred_check_branch
      %42 = sbr.rel (0) target = $region13
    $region12: #{tpu_custom_call.1} parent=1 // pred_region
      %s44 = ssub.s32 3072, 3072
      %45 = vsyncadd [#allocation12], %s44
      %s46 = sshll.u32 [#allocation13], 4
      %s47 = int_to_ptr.vmem [resolvable:$true] %s46
      %52 = dma.hbm_to_vmem [thread:$0]  %s3, 3072, %s47, [#allocation12], 192, 192, 12
    $region13: #{tpu_custom_call.1} parent=1 // pred_fallthru
      _
    // Predicated region
    $region14: #{tpu_custom_call.1} parent=1 // pred_check
      _
    $region15: #{tpu_custom_call.1} parent=1 // pred_check_branch
      %54 = sbr.rel (0) target = $region17
    $region16: #{tpu_custom_call.1} parent=1 // pred_region
      _
    $region17: #{tpu_custom_call.1} parent=1 // pred_fallthru
      _
    // Predicated region
    $region18: #{tpu_custom_call.1} parent=1 // pred_check
      _
    $region19: #{tpu_custom_call.1} parent=1 // pred_check_branch
      %56 = sbr.rel (0) target = $region21
    $region20: #{tpu_custom_call.1} parent=1 // pred_region
      %s58 = ssub.s32 1024, 1024
      %59 = vsyncadd [#allocation15], %s58
      %s60 = sshll.u32 [#allocation14], 4
      %s61 = int_to_ptr.vmem [resolvable:$true] %s60
      %66 = dma.hbm_to_vmem [thread:$0]  %s5, 1024, %s61, [#allocation15], 64, 64, 4
    $region21: #{tpu_custom_call.1} parent=1 // pred_fallthru
      _
    // Predicated region
    $region22: #{tpu_custom_call.1} parent=1 // pred_check
      _
    $region23: #{tpu_custom_call.1} parent=1 // pred_check_branch
      %68 = sbr.rel (0) target = $region25
    $region24: #{tpu_custom_call.1} parent=1 // pred_region
      _
    $region25: #{tpu_custom_call.1} parent=1 // pred_fallthru
      _
    // Predicated region
    $region26: #{tpu_custom_call.1} parent=1 // pred_check
      _
    $region27: #{tpu_custom_call.1} parent=1 // pred_check_branch
      %70 = sbr.rel (0) target = $region29
    $region28: #{tpu_custom_call.1} parent=1 // pred_region
      %71 = dma.done [#allocation9], 256
    $region29: #{tpu_custom_call.1} parent=1 // pred_fallthru
      _
    // Predicated region
    $region30: #{tpu_custom_call.1} parent=1 // pred_check
      _
    $region31: #{tpu_custom_call.1} parent=1 // pred_check_branch
      %73 = sbr.rel (0) target = $region33
    $region32: #{tpu_custom_call.1} parent=1 // pred_region
      %74 = dma.done [#allocation12], 256
    $region33: #{tpu_custom_call.1} parent=1 // pred_fallthru
      _
    // Predicated region
    $region34: #{tpu_custom_call.1} parent=1 // pred_check
      _
    $region35: #{tpu_custom_call.1} parent=1 // pred_check_branch
      %76 = sbr.rel (0) target = $region37
    $region36: #{tpu_custom_call.1} parent=1 // pred_region
      %77 = dma.done [#allocation12], 3072
    $region37: #{tpu_custom_call.1} parent=1 // pred_fallthru
      _
    // Predicated region
    $region38: #{tpu_custom_call.1} parent=1 // pred_check
      _
    $region39: #{tpu_custom_call.1} parent=1 // pred_check_branch
      %79 = sbr.rel (0) target = $region41
    $region40: #{tpu_custom_call.1} parent=1 // pred_region
      %80 = dma.done [#allocation15], 1024
    $region41: #{tpu_custom_call.1} parent=1 // pred_fallthru
      _
    %v82 = vld [vmem:[#allocation8] sm:$0xf]
    %v83 = vld [vmem:[#allocation8 + $0x4] sm:$0xf]
    %v84 = vld [vmem:[#allocation8 + $0x8] sm:$0xf]
    %v85 = vld [vmem:[#allocation8 + $0xc] sm:$0xf]
    %v86 = vld [vmem:[#allocation13] sm:$0xff]
    %v87 = vld [vmem:[#allocation13 + $0x8] sm:$0xf]
    %v88 = vld [vmem:[#allocation13 + $0xc] sm:$0xff]
    %v89 = vld [vmem:[#allocation13 + $0x14] sm:$0xf]
    %v90 = vld [vmem:[#allocation13 + $0x18] sm:$0xff]
    %v91 = vld [vmem:[#allocation13 + $0x20] sm:$0xf]
    %v92 = vld [vmem:[#allocation13 + $0x24] sm:$0xff]
    %v93 = vld [vmem:[#allocation13 + $0x2c] sm:$0xf]
    %v94 = vld [vmem:[#allocation13 + $0x30] sm:$0xff]
    %v95 = vld [vmem:[#allocation13 + $0x38] sm:$0xf]
    %v96 = vld [vmem:[#allocation13 + $0x3c] sm:$0xff]
    %v97 = vld [vmem:[#allocation13 + $0x44] sm:$0xf]
    %v98 = vld [vmem:[#allocation13 + $0x48] sm:$0xff]
    %v99 = vld [vmem:[#allocation13 + $0x50] sm:$0xf]
    %v100 = vld [vmem:[#allocation13 + $0x54] sm:$0xff]
    %v101 = vld [vmem:[#allocation13 + $0x5c] sm:$0xf]
    %v102 = vld [vmem:[#allocation13 + $0x60] sm:$0xff]
    %v103 = vld [vmem:[#allocation13 + $0x68] sm:$0xf]
    %v104 = vld [vmem:[#allocation13 + $0x6c] sm:$0xff]
    %v105 = vld [vmem:[#allocation13 + $0x74] sm:$0xf]
    %v106 = vld [vmem:[#allocation13 + $0x78] sm:$0xff]
    %v107 = vld [vmem:[#allocation13 + $0x80] sm:$0xf]
    %v108 = vld [vmem:[#allocation13 + $0x84] sm:$0xff]
    %v109 = vld [vmem:[#allocation13 + $0x8c] sm:$0xf]
    %v110 = vld [vmem:[#allocation13 + $0x90] sm:$0xff]
    %v111 = vld [vmem:[#allocation13 + $0x98] sm:$0xf]
    %v112 = vld [vmem:[#allocation13 + $0x9c] sm:$0xff]
    %v113 = vld [vmem:[#allocation13 + $0xa4] sm:$0xf]
    %v114 = vld [vmem:[#allocation13 + $0xa8] sm:$0xff]
    %v115 = vld [vmem:[#allocation13 + $0xb0] sm:$0xf]
    %v116 = vld [vmem:[#allocation13 + $0xb4] sm:$0xff]
    %v117 = vld [vmem:[#allocation13 + $0xbc] sm:$0xf]
    %v118 = vld [vmem:[%s4] sm:$0x7]
    %v120 = vlaneseq
    %v121 = vshrl.u32 %v120, 7
    %v122 = vsub.s32 0, %v121
    %v123 = vrot.slane %v118, %v122
    %v124 = vlaneseq
    %v125 = vshrl.u32 %v124, 7
    %v126 = vsub.s32 1, %v125
    %v127 = vrot.slane %v118, %v126
    %v128 = vlaneseq
    %v129 = vshrl.u32 %v128, 7
    %v130 = vsub.s32 2, %v129
    %v131 = vrot.slane %v118, %v130
    %v139 = vunpack.c.l.b16 %v82
    %v140 = vunpack.c.l.b16 %v83
    %v141 = vunpack.c.l.b16 %v84
    %v142 = vunpack.c.l.b16 %v85
    %v143 = vpack.c.b16 %v140, %v139
    %v144 = vpack.c.b16 %v142, %v141
    %v179 = vunpack.c.l.b16 %v86
    %v180 = vunpack.c.h.b16 %v86
    %v181 = vunpack.c.l.b16 %v87
    %v182 = vunpack.c.l.b16 %v88
    %v183 = vunpack.c.h.b16 %v88
    %v184 = vunpack.c.l.b16 %v89
    %v185 = vunpack.c.l.b16 %v90
    %v186 = vunpack.c.h.b16 %v90
    %v187 = vunpack.c.l.b16 %v91
    %v188 = vunpack.c.l.b16 %v92
    %v189 = vunpack.c.h.b16 %v92
    %v190 = vunpack.c.l.b16 %v93
    %v191 = vunpack.c.l.b16 %v94
    %v192 = vunpack.c.h.b16 %v94
    %v193 = vunpack.c.l.b16 %v95
    %v194 = vunpack.c.l.b16 %v96
    %v195 = vunpack.c.h.b16 %v96
    %v196 = vunpack.c.l.b16 %v97
    %v197 = vunpack.c.l.b16 %v98
    %v198 = vunpack.c.h.b16 %v98
    %v199 = vunpack.c.l.b16 %v99
    %v200 = vunpack.c.l.b16 %v100
    %v201 = vunpack.c.h.b16 %v100
    %v202 = vunpack.c.l.b16 %v101
    %v203 = vunpack.c.l.b16 %v102
    %v204 = vunpack.c.h.b16 %v102
    %v205 = vunpack.c.l.b16 %v103
    %v206 = vunpack.c.l.b16 %v104
    %v207 = vunpack.c.h.b16 %v104
    %v208 = vunpack.c.l.b16 %v105
    %v209 = vunpack.c.l.b16 %v106
    %v210 = vunpack.c.h.b16 %v106
    %v211 = vunpack.c.l.b16 %v107
    %v212 = vunpack.c.l.b16 %v108
    %v213 = vunpack.c.h.b16 %v108
    %v214 = vunpack.c.l.b16 %v109
    %v215 = vunpack.c.l.b16 %v110
    %v216 = vunpack.c.h.b16 %v110
    %v217 = vunpack.c.l.b16 %v111
    %v218 = vunpack.c.l.b16 %v112
    %v219 = vunpack.c.h.b16 %v112
    %v220 = vunpack.c.l.b16 %v113
    %v221 = vunpack.c.l.b16 %v114
    %v222 = vunpack.c.h.b16 %v114
    %v223 = vunpack.c.l.b16 %v115
    %v224 = vunpack.c.l.b16 %v116
    %v225 = vunpack.c.h.b16 %v116
    %v226 = vunpack.c.l.b16 %v117
    %v227 = vpack.c.b16 %v182, %v179
    %v228 = vpack.c.b16 %v183, %v180
    %v229 = vpack.c.b16 %v184, %v181
    %v230 = vpack.c.b16 %v188, %v185
    %v231 = vpack.c.b16 %v189, %v186
    %v232 = vpack.c.b16 %v190, %v187
    %v233 = vpack.c.b16 %v194, %v191
    %v234 = vpack.c.b16 %v195, %v192
    %v235 = vpack.c.b16 %v196, %v193
    %v236 = vpack.c.b16 %v200, %v197
    %v237 = vpack.c.b16 %v201, %v198
    %v238 = vpack.c.b16 %v202, %v199
    %v239 = vpack.c.b16 %v206, %v203
    %v240 = vpack.c.b16 %v207, %v204
    %v241 = vpack.c.b16 %v208, %v205
    %v242 = vpack.c.b16 %v212, %v209
    %v243 = vpack.c.b16 %v213, %v210
    %v244 = vpack.c.b16 %v214, %v211
    %v245 = vpack.c.b16 %v218, %v215
    %v246 = vpack.c.b16 %v219, %v216
    %v247 = vpack.c.b16 %v220, %v217
    %v248 = vpack.c.b16 %v224, %v221
    %v249 = vpack.c.b16 %v225, %v222
    %v250 = vpack.c.b16 %v226, %v223
    %275 = vmatprep.subr.bf16.mxu0 %v228
    %276 = vmatpush1.bf16.msra.mxu0 %v227
    %277 = vmatprep.subr.bf16.mxu0 %v231
    %278 = vmatpush1.bf16.msra.mxu0 %v230
    %279 = vmatprep.subr.bf16.mxu0 %v234
    %280 = vmatpush1.bf16.msra.mxu0 %v233
    %281 = vmatprep.subr.bf16.mxu0 %v237
    %282 = vmatpush1.bf16.msra.mxu0 %v236
    %283 = vmatprep.subr.bf16.mxu0 %v240
    %284 = vmatpush1.bf16.msra.mxu0 %v239
    %285 = vmatprep.subr.bf16.mxu0 %v243
    %286 = vmatpush1.bf16.msra.mxu0 %v242
    %287 = vmatprep.subr.bf16.mxu0 %v246
    %288 = vmatpush1.bf16.msra.mxu0 %v245
    %289 = vmatprep.subr.bf16.mxu0 %v249
    %290 = vmatpush1.bf16.msra.mxu0 %v248
    %291 = vmatprep.subr.bf16.mxu0 0
    %292 = vmatpush1.bf16.msra.mxu0 0
    %293 = vmatprep.subr.bf16.mxu0 0
    %294 = vmatpush1.bf16.msra.mxu0 0
    %295 = vmatprep.subr.bf16.mxu0 0
    %296 = vmatpush1.bf16.msra.mxu0 0
    %297 = vmatprep.subr.bf16.mxu0 0
    %298 = vmatpush1.bf16.msra.mxu0 0
    %299 = vmatprep.subr.bf16.mxu0 0
    %300 = vmatpush1.bf16.msra.mxu0 0
    %301 = vmatprep.subr.bf16.mxu0 0
    %302 = vmatpush1.bf16.msra.mxu0 0
    %303 = vmatprep.subr.bf16.mxu0 0
    %304 = vmatpush1.bf16.msra.mxu0 0
    %305 = vmatprep.subr.bf16.mxu0 0
    %306 = vmatpush1.bf16.msra.mxu0 0
    %307 = vmatprep.mubr.bf16.mxu0 0
    %308 = vmatmul.mubr.bf16.gmra.mrb[0].mxu0 %v143
    %v309 = vpop.f32.mrb[0].mxu0
    %v310 = vadd.f32 %v123, %v309
    %v311 = vpop.f32.mrb[0].mxu0
    %v312 = vadd.f32 %v127, %v311
    %v313 = vpop.f32.mrb[0].mxu0
    %v314 = vadd.f32 %v123, %v313
    %v315 = vpop.f32.mrb[0].mxu0
    %v316 = vadd.f32 %v127, %v315
    %317 = vmatprep.mubr.bf16.mxu0 0
    %318 = vmatmul.mubr.bf16.gmra.mrb[0].mxu0 %v144
    %v319 = vpop.f32.mrb[0].mxu0
    %v320 = vadd.f32 %v123, %v319
    %v321 = vpop.f32.mrb[0].mxu0
    %v322 = vadd.f32 %v127, %v321
    %v323 = vpop.f32.mrb[0].mxu0
    %v324 = vadd.f32 %v123, %v323
    %v325 = vpop.f32.mrb[0].mxu0
    %v326 = vadd.f32 %v127, %v325
    %327 = vdwg.mxu0
    %328 = vmatprep.subr.bf16.mxu0 0
    %329 = vmatpush1.bf16.msra.mxu0 %v229
    %330 = vmatprep.subr.bf16.mxu0 0
    %331 = vmatpush1.bf16.msra.mxu0 %v232
    %332 = vmatprep.subr.bf16.mxu0 0
    %333 = vmatpush1.bf16.msra.mxu0 %v235
    %334 = vmatprep.subr.bf16.mxu0 0
    %335 = vmatpush1.bf16.msra.mxu0 %v238
    %336 = vmatprep.subr.bf16.mxu0 0
    %337 = vmatpush1.bf16.msra.mxu0 %v241
    %338 = vmatprep.subr.bf16.mxu0 0
    %339 = vmatpush1.bf16.msra.mxu0 %v244
    %340 = vmatprep.subr.bf16.mxu0 0
    %341 = vmatpush1.bf16.msra.mxu0 %v247
    %342 = vmatprep.subr.bf16.mxu0 0
    %343 = vmatpush1.bf16.msra.mxu0 %v250
    %344 = vmatprep.subr.bf16.mxu0 0
    %345 = vmatpush1.bf16.msra.mxu0 0
    %346 = vmatprep.subr.bf16.mxu0 0
    %347 = vmatpush1.bf16.msra.mxu0 0
    %348 = vmatprep.subr.bf16.mxu0 0
    %349 = vmatpush1.bf16.msra.mxu0 0
    %350 = vmatprep.subr.bf16.mxu0 0
    %351 = vmatpush1.bf16.msra.mxu0 0
    %352 = vmatprep.subr.bf16.mxu0 0
    %353 = vmatpush1.bf16.msra.mxu0 0
    %354 = vmatprep.subr.bf16.mxu0 0
    %355 = vmatpush1.bf16.msra.mxu0 0
    %356 = vmatprep.subr.bf16.mxu0 0
    %357 = vmatpush1.bf16.msra.mxu0 0
    %358 = vmatprep.subr.bf16.mxu0 0
    %359 = vmatpush1.bf16.msra.mxu0 0
    %360 = vmatprep.mubr.bf16.mxu0 0
    %361 = vmatmul.mubr.bf16.gmra.mrb[0].mxu0 %v143
    %v362 = vpop.f32.mrb[0].mxu0
    %v363 = vadd.f32 %v131, %v362
    %v364 = vpop.f32.mrb[0].mxu0
    %v365 = vpop.f32.mrb[0].mxu0
    %v366 = vadd.f32 %v131, %v365
    %v367 = vpop.f32.mrb[0].mxu0
    %368 = vmatprep.mubr.bf16.mxu0 0
    %369 = vmatmul.mubr.bf16.gmra.mrb[0].mxu0 %v144
    %v370 = vpop.f32.mrb[0].mxu0
    %v371 = vadd.f32 %v131, %v370
    %v372 = vpop.f32.mrb[0].mxu0
    %v373 = vpop.f32.mrb[0].mxu0
    %v374 = vadd.f32 %v131, %v373
    %v375 = vpop.f32.mrb[0].mxu0
    %376 = vdwg.mxu0
    %v377 = vpack.c.bf16 %v314, %v310
    %v378 = vpack.c.bf16 %v324, %v320
    %379 = vst [vmem:[#allocation2] sm:$0xff] %v377
    %380 = vst [vmem:[#allocation2 + $0x8] sm:$0xff] %v378
    %v381 = vpack.c.bf16 %v316, %v312
    %v382 = vpack.c.bf16 %v326, %v322
    %383 = vst [vmem:[#allocation3] sm:$0xff] %v381
    %384 = vst [vmem:[#allocation3 + $0x8] sm:$0xff] %v382
    %v385 = vpack.c.bf16 %v366, %v363
    %v386 = vpack.c.bf16 %v374, %v371
    %387 = vst [vmem:[#allocation4] sm:$0xff] %v385
    %388 = vst [vmem:[#allocation4 + $0x8] sm:$0xff] %v386
    %v389 = vld [vmem:[#allocation11] sm:$0xff]
    %v390 = vld [vmem:[#allocation11 + $0x8] sm:$0xff]
    %vm391 = vcmp.eq.s32.totalorder %v389, 0
    %vm392 = vcmp.eq.s32.totalorder %v390, 0
    %v393 = vld [vmem:[#allocation2] sm:$0xff]
    %v394 = vld [vmem:[#allocation3] sm:$0xff]
    %v395 = vld [vmem:[#allocation4] sm:$0xff]
    %vm396 = vcmask 130048
    %v398 = vsel %vm396, %v393, 0
    %v401 = vsel %vm396, %v394, 0
    %403 = vmatprep.subr.bf16.mxu0 0
    %404 = vmatpush1.bf16.xpose.msra.mxu0 %v401
    %405 = vmatprep.subr.bf16.mxu0 0
    %406 = vmatpush1.bf16.xpose.msra.mxu0 0
    %407 = vmatprep.subr.bf16.mxu0 0
    %408 = vmatpush1.bf16.xpose.msra.mxu0 0
    %409 = vmatprep.subr.bf16.mxu0 0
    %410 = vmatpush1.bf16.xpose.msra.mxu0 0
    %411 = vmatprep.subr.bf16.mxu0 0
    %412 = vmatpush1.bf16.xpose.msra.mxu0 0
    %413 = vmatprep.subr.bf16.mxu0 0
    %414 = vmatpush1.bf16.xpose.msra.mxu0 0
    %415 = vmatprep.subr.bf16.mxu0 0
    %416 = vmatpush1.bf16.xpose.msra.mxu0 0
    %417 = vmatprep.subr.bf16.mxu0 0
    %418 = vmatpush1.bf16.xpose.msra.mxu0 0
    %419 = vmatprep.subr.bf16.mxu0 0
    %420 = vmatpush1.bf16.xpose.msra.mxu0 0
    %421 = vmatprep.subr.bf16.mxu0 0
    %422 = vmatpush1.bf16.xpose.msra.mxu0 0
    %423 = vmatprep.subr.bf16.mxu0 0
    %424 = vmatpush1.bf16.xpose.msra.mxu0 0
    %425 = vmatprep.subr.bf16.mxu0 0
    %426 = vmatpush1.bf16.xpose.msra.mxu0 0
    %427 = vmatprep.subr.bf16.mxu0 0
    %428 = vmatpush1.bf16.xpose.msra.mxu0 0
    %429 = vmatprep.subr.bf16.mxu0 0
    %430 = vmatpush1.bf16.xpose.msra.mxu0 0
    %431 = vmatprep.subr.bf16.mxu0 0
    %432 = vmatpush1.bf16.xpose.msra.mxu0 0
    %433 = vmatprep.subr.bf16.mxu0 0
    %434 = vmatpush1.bf16.xpose.msra.mxu0 0
    %435 = vmatprep.mubr.bf16.mxu0 0
    %436 = vmatmul.mubr.bf16.gmra.mrb[0].mxu0 %v398
    %v437 = vpop.f32.mrb[0].mxu0
    %v438 = vadd.f32 0.0, %v437
    %v439 = vpop.f32.mrb[0].mxu0
    %v440 = vpop.f32.mrb[0].mxu0
    %v441 = vadd.f32 0.0, %v440
    %v442 = vpop.f32.mrb[0].mxu0
    %443 = vdwg.mxu0
    %v444 = vmul.f32 %v438, 0.25
    %v445 = vmul.f32 %v441, 0.25
    %v446 = vsel %vm391, -1e+09, %v444
    %v447 = vsel %vm392, -1e+09, %v445
    %v448 = vsel %vm396, %v446, -inf
    %449 = vmax.xlane.f32.xlu0 %v448
    %v450 = vpop.xlane.xlu0 %449
    %v451 = vsel %vm396, %v447, -inf
    %452 = vmax.xlane.f32.xlu0 %v451
    %v453 = vpop.xlane.xlu0 %452
    %v454 = vsub.f32 %v446, %v450
    %v455 = vsub.f32 %v447, %v453
    %v456 = vmul.f32 %v454, 1.442695
    %v457 = vpow.pop %v456
    %v458 = vmul.f32 %v455, 1.442695
    %v459 = vpow.pop %v458
    %v460 = vsel %vm396, %v457, 0.0
    %461 = vadd.xlane.f32.xlu0 %v460
    %v462 = vpop.xlane.xlu0 %461
    %v463 = vsel %vm396, %v459, 0.0
    %464 = vadd.xlane.f32.xlu0 %v463
    %v465 = vpop.xlane.xlu0 %464
    %v466 = vrcp.pop %v462
    %v467 = vrcp.pop %v465
    %v468 = vmul.f32 %v457, %v466
    %v469 = vmul.f32 %v459, %v467
    %v470 = vpack.c.bf16 %v469, %v468
    %v472 = vsel %vm396, %v470, 0
    %474 = vmatprep.subr.bf16.mxu0 0
    %475 = vmatpush1.bf16.msra.mxu0 %v395
    %476 = vmatprep.subr.bf16.mxu0 0
    %477 = vmatpush1.bf16.msra.mxu0 0
    %478 = vmatprep.subr.bf16.mxu0 0
    %479 = vmatpush1.bf16.msra.mxu0 0
    %480 = vmatprep.subr.bf16.mxu0 0
    %481 = vmatpush1.bf16.msra.mxu0 0
    %482 = vmatprep.subr.bf16.mxu0 0
    %483 = vmatpush1.bf16.msra.mxu0 0
    %484 = vmatprep.subr.bf16.mxu0 0
    %485 = vmatpush1.bf16.msra.mxu0 0
    %486 = vmatprep.subr.bf16.mxu0 0
    %487 = vmatpush1.bf16.msra.mxu0 0
    %488 = vmatprep.subr.bf16.mxu0 0
    %489 = vmatpush1.bf16.msra.mxu0 0
    %490 = vmatprep.subr.bf16.mxu0 0
    %491 = vmatpush1.bf16.msra.mxu0 0
    %492 = vmatprep.subr.bf16.mxu0 0
    %493 = vmatpush1.bf16.msra.mxu0 0
    %494 = vmatprep.subr.bf16.mxu0 0
    %495 = vmatpush1.bf16.msra.mxu0 0
    %496 = vmatprep.subr.bf16.mxu0 0
    %497 = vmatpush1.bf16.msra.mxu0 0
    %498 = vmatprep.subr.bf16.mxu0 0
    %499 = vmatpush1.bf16.msra.mxu0 0
    %500 = vmatprep.subr.bf16.mxu0 0
    %501 = vmatpush1.bf16.msra.mxu0 0
    %502 = vmatprep.subr.bf16.mxu0 0
    %503 = vmatpush1.bf16.msra.mxu0 0
    %504 = vmatprep.subr.bf16.mxu0 0
    %505 = vmatpush1.bf16.msra.mxu0 0
    %506 = vmatprep.mubr.bf16.mxu0 0
    %507 = vmatmul.mubr.bf16.gmra.mrb[0].mxu0 %v472
    %v508 = vpop.f32.mrb[0].mxu0
    %v509 = vadd.f32 0.0, %v508
    %v510 = vpop.f32.mrb[0].mxu0
    %v511 = vpop.f32.mrb[0].mxu0
    %v512 = vadd.f32 0.0, %v511
    %v513 = vpop.f32.mrb[0].mxu0
    %514 = vdwg.mxu0
    %515 = vst.msk [vmem:[#allocation5] sm:$0xff] %vm396, %v509
    %516 = vst.msk [vmem:[#allocation5 + $0x8] sm:$0xff] %vm396, %v512
    %v517 = vld [vmem:[#allocation2] sm:$0xff]
    %v518 = vld [vmem:[#allocation3] sm:$0xff]
    %v519 = vld [vmem:[#allocation4] sm:$0xff]
    %521 = vrot.lane.b32.xlu0 %v517, 112
    %v522 = vpop.permute.xlu0 %521
    %524 = vrot.lane.b32.xlu0 %v518, 112
    %v525 = vpop.permute.xlu0 %524
    %v527 = vsel %vm396, %v522, 0
    %v530 = vsel %vm396, %v525, 0
    %532 = vmatprep.subr.bf16.mxu0 0
    %533 = vmatpush1.bf16.xpose.msra.mxu0 %v530
    %534 = vmatprep.subr.bf16.mxu0 0
    %535 = vmatpush1.bf16.xpose.msra.mxu0 0
    %536 = vmatprep.subr.bf16.mxu0 0
    %537 = vmatpush1.bf16.xpose.msra.mxu0 0
    %538 = vmatprep.subr.bf16.mxu0 0
    %539 = vmatpush1.bf16.xpose.msra.mxu0 0
    %540 = vmatprep.subr.bf16.mxu0 0
    %541 = vmatpush1.bf16.xpose.msra.mxu0 0
    %542 = vmatprep.subr.bf16.mxu0 0
    %543 = vmatpush1.bf16.xpose.msra.mxu0 0
    %544 = vmatprep.subr.bf16.mxu0 0
    %545 = vmatpush1.bf16.xpose.msra.mxu0 0
    %546 = vmatprep.subr.bf16.mxu0 0
    %547 = vmatpush1.bf16.xpose.msra.mxu0 0
    %548 = vmatprep.subr.bf16.mxu0 0
    %549 = vmatpush1.bf16.xpose.msra.mxu0 0
    %550 = vmatprep.subr.bf16.mxu0 0
    %551 = vmatpush1.bf16.xpose.msra.mxu0 0
    %552 = vmatprep.subr.bf16.mxu0 0
    %553 = vmatpush1.bf16.xpose.msra.mxu0 0
    %554 = vmatprep.subr.bf16.mxu0 0
    %555 = vmatpush1.bf16.xpose.msra.mxu0 0
    %556 = vmatprep.subr.bf16.mxu0 0
    %557 = vmatpush1.bf16.xpose.msra.mxu0 0
    %558 = vmatprep.subr.bf16.mxu0 0
    %559 = vmatpush1.bf16.xpose.msra.mxu0 0
    %560 = vmatprep.subr.bf16.mxu0 0
    %561 = vmatpush1.bf16.xpose.msra.mxu0 0
    %562 = vmatprep.subr.bf16.mxu0 0
    %563 = vmatpush1.bf16.xpose.msra.mxu0 0
    %564 = vmatprep.mubr.bf16.mxu0 0
    %565 = vmatmul.mubr.bf16.gmra.mrb[0].mxu0 %v527
    %v566 = vpop.f32.mrb[0].mxu0
    %v567 = vadd.f32 0.0, %v566
    %v568 = vpop.f32.mrb[0].mxu0
    %v569 = vpop.f32.mrb[0].mxu0
    %v570 = vadd.f32 0.0, %v569
    %v571 = vpop.f32.mrb[0].mxu0
    %572 = vdwg.mxu0
    %v573 = vmul.f32 %v567, 0.25
    %v574 = vmul.f32 %v570, 0.25
    %v575 = vsel %vm391, -1e+09, %v573
    %v576 = vsel %vm392, -1e+09, %v574
    %v577 = vsel %vm396, %v575, -inf
    %578 = vmax.xlane.f32.xlu0 %v577
    %v579 = vpop.xlane.xlu0 %578
    %v580 = vsel %vm396, %v576, -inf
    %581 = vmax.xlane.f32.xlu0 %v580
    %v582 = vpop.xlane.xlu0 %581
    %v583 = vsub.f32 %v575, %v579
    %v584 = vsub.f32 %v576, %v582
    %v585 = vmul.f32 %v583, 1.442695
    %v586 = vpow.pop %v585
    %v587 = vmul.f32 %v584, 1.442695
    %v588 = vpow.pop %v587
    %v589 = vsel %vm396, %v586, 0.0
    %590 = vadd.xlane.f32.xlu0 %v589
    %v591 = vpop.xlane.xlu0 %590
    %v592 = vsel %vm396, %v588, 0.0
    %593 = vadd.xlane.f32.xlu0 %v592
    %v594 = vpop.xlane.xlu0 %593
    %v595 = vrcp.pop %v591
    %v596 = vrcp.pop %v594
    %v597 = vmul.f32 %v586, %v595
    %v598 = vmul.f32 %v588, %v596
    %v599 = vpack.c.bf16 %v598, %v597
    %601 = vrot.lane.b32.xlu0 %v519, 112
    %v602 = vpop.permute.xlu0 %601
    %v605 = vsel %vm396, %v599, 0
    %607 = vmatprep.subr.bf16.mxu0 0
    %608 = vmatpush1.bf16.msra.mxu0 %v602
    %609 = vmatprep.subr.bf16.mxu0 0
    %610 = vmatpush1.bf16.msra.mxu0 0
    %611 = vmatprep.subr.bf16.mxu0 0
    %612 = vmatpush1.bf16.msra.mxu0 0
    %613 = vmatprep.subr.bf16.mxu0 0
    %614 = vmatpush1.bf16.msra.mxu0 0
    %615 = vmatprep.subr.bf16.mxu0 0
    %616 = vmatpush1.bf16.msra.mxu0 0
    %617 = vmatprep.subr.bf16.mxu0 0
    %618 = vmatpush1.bf16.msra.mxu0 0
    %619 = vmatprep.subr.bf16.mxu0 0
    %620 = vmatpush1.bf16.msra.mxu0 0
    %621 = vmatprep.subr.bf16.mxu0 0
    %622 = vmatpush1.bf16.msra.mxu0 0
    %623 = vmatprep.subr.bf16.mxu0 0
    %624 = vmatpush1.bf16.msra.mxu0 0
    %625 = vmatprep.subr.bf16.mxu0 0
    %626 = vmatpush1.bf16.msra.mxu0 0
    %627 = vmatprep.subr.bf16.mxu0 0
    %628 = vmatpush1.bf16.msra.mxu0 0
    %629 = vmatprep.subr.bf16.mxu0 0
    %630 = vmatpush1.bf16.msra.mxu0 0
    %631 = vmatprep.subr.bf16.mxu0 0
    %632 = vmatpush1.bf16.msra.mxu0 0
    %633 = vmatprep.subr.bf16.mxu0 0
    %634 = vmatpush1.bf16.msra.mxu0 0
    %635 = vmatprep.subr.bf16.mxu0 0
    %636 = vmatpush1.bf16.msra.mxu0 0
    %637 = vmatprep.subr.bf16.mxu0 0
    %638 = vmatpush1.bf16.msra.mxu0 0
    %639 = vmatprep.mubr.bf16.mxu0 0
    %640 = vmatmul.mubr.bf16.gmra.mrb[0].mxu0 %v605
    %v641 = vpop.f32.mrb[0].mxu0
    %v642 = vadd.f32 0.0, %v641
    %v643 = vpop.f32.mrb[0].mxu0
    %v644 = vpop.f32.mrb[0].mxu0
    %v645 = vadd.f32 0.0, %v644
    %v646 = vpop.f32.mrb[0].mxu0
    %647 = vdwg.mxu0
    %650 = vrot.lane.b32.xlu0 %v642, 16
    %v651 = vpop.permute.xlu0 %650
    %652 = vrot.lane.b32.xlu0 %v645, 16
    %v653 = vpop.permute.xlu0 %652
    %vm656 = vcmask 261248
    %657 = vst.msk [vmem:[#allocation5] sm:$0xff] %vm656, %v651
    %658 = vst.msk [vmem:[#allocation5 + $0x8] sm:$0xff] %vm656, %v653
    %v659 = vld [vmem:[#allocation2] sm:$0xff]
    %v660 = vld [vmem:[#allocation3] sm:$0xff]
    %v661 = vld [vmem:[#allocation4] sm:$0xff]
    %663 = vrot.lane.b32.xlu0 %v659, 96
    %v664 = vpop.permute.xlu0 %663
    %666 = vrot.lane.b32.xlu0 %v660, 96
    %v667 = vpop.permute.xlu0 %666
    %v669 = vsel %vm396, %v664, 0
    %v672 = vsel %vm396, %v667, 0
    %674 = vmatprep.subr.bf16.mxu0 0
    %675 = vmatpush1.bf16.xpose.msra.mxu0 %v672
    %676 = vmatprep.subr.bf16.mxu0 0
    %677 = vmatpush1.bf16.xpose.msra.mxu0 0
    %678 = vmatprep.subr.bf16.mxu0 0
    %679 = vmatpush1.bf16.xpose.msra.mxu0 0
    %680 = vmatprep.subr.bf16.mxu0 0
    %681 = vmatpush1.bf16.xpose.msra.mxu0 0
    %682 = vmatprep.subr.bf16.mxu0 0
    %683 = vmatpush1.bf16.xpose.msra.mxu0 0
    %684 = vmatprep.subr.bf16.mxu0 0
    %685 = vmatpush1.bf16.xpose.msra.mxu0 0
    %686 = vmatprep.subr.bf16.mxu0 0
    %687 = vmatpush1.bf16.xpose.msra.mxu0 0
    %688 = vmatprep.subr.bf16.mxu0 0
    %689 = vmatpush1.bf16.xpose.msra.mxu0 0
    %690 = vmatprep.subr.bf16.mxu0 0
    %691 = vmatpush1.bf16.xpose.msra.mxu0 0
    %692 = vmatprep.subr.bf16.mxu0 0
    %693 = vmatpush1.bf16.xpose.msra.mxu0 0
    %694 = vmatprep.subr.bf16.mxu0 0
    %695 = vmatpush1.bf16.xpose.msra.mxu0 0
    %696 = vmatprep.subr.bf16.mxu0 0
    %697 = vmatpush1.bf16.xpose.msra.mxu0 0
    %698 = vmatprep.subr.bf16.mxu0 0
    %699 = vmatpush1.bf16.xpose.msra.mxu0 0
    %700 = vmatprep.subr.bf16.mxu0 0
    %701 = vmatpush1.bf16.xpose.msra.mxu0 0
    %702 = vmatprep.subr.bf16.mxu0 0
    %703 = vmatpush1.bf16.xpose.msra.mxu0 0
    %704 = vmatprep.subr.bf16.mxu0 0
    %705 = vmatpush1.bf16.xpose.msra.mxu0 0
    %706 = vmatprep.mubr.bf16.mxu0 0
    %707 = vmatmul.mubr.bf16.gmra.mrb[0].mxu0 %v669
    %v708 = vpop.f32.mrb[0].mxu0
    %v709 = vadd.f32 0.0, %v708
    %v710 = vpop.f32.mrb[0].mxu0
    %v711 = vpop.f32.mrb[0].mxu0
    %v712 = vadd.f32 0.0, %v711
    %v713 = vpop.f32.mrb[0].mxu0
    %714 = vdwg.mxu0
    %v715 = vmul.f32 %v709, 0.25
    %v716 = vmul.f32 %v712, 0.25
    %v717 = vsel %vm391, -1e+09, %v715
    %v718 = vsel %vm392, -1e+09, %v716
    %v719 = vsel %vm396, %v717, -inf
    %720 = vmax.xlane.f32.xlu0 %v719
    %v721 = vpop.xlane.xlu0 %720
    %v722 = vsel %vm396, %v718, -inf
    %723 = vmax.xlane.f32.xlu0 %v722
    %v724 = vpop.xlane.xlu0 %723
    %v725 = vsub.f32 %v717, %v721
    %v726 = vsub.f32 %v718, %v724
    %v727 = vmul.f32 %v725, 1.442695
    %v728 = vpow.pop %v727
    %v729 = vmul.f32 %v726, 1.442695
    %v730 = vpow.pop %v729
    %v731 = vsel %vm396, %v728, 0.0
    %732 = vadd.xlane.f32.xlu0 %v731
    %v733 = vpop.xlane.xlu0 %732
    %v734 = vsel %vm396, %v730, 0.0
    %735 = vadd.xlane.f32.xlu0 %v734
    %v736 = vpop.xlane.xlu0 %735
    %v737 = vrcp.pop %v733
    %v738 = vrcp.pop %v736
    %v739 = vmul.f32 %v728, %v737
    %v740 = vmul.f32 %v730, %v738
    %v741 = vpack.c.bf16 %v740, %v739
    %743 = vrot.lane.b32.xlu0 %v661, 96
    %v744 = vpop.permute.xlu0 %743
    %v747 = vsel %vm396, %v741, 0
    %749 = vmatprep.subr.bf16.mxu0 0
    %750 = vmatpush1.bf16.msra.mxu0 %v744
    %751 = vmatprep.subr.bf16.mxu0 0
    %752 = vmatpush1.bf16.msra.mxu0 0
    %753 = vmatprep.subr.bf16.mxu0 0
    %754 = vmatpush1.bf16.msra.mxu0 0
    %755 = vmatprep.subr.bf16.mxu0 0
    %756 = vmatpush1.bf16.msra.mxu0 0
    %757 = vmatprep.subr.bf16.mxu0 0
    %758 = vmatpush1.bf16.msra.mxu0 0
    %759 = vmatprep.subr.bf16.mxu0 0
    %760 = vmatpush1.bf16.msra.mxu0 0
    %761 = vmatprep.subr.bf16.mxu0 0
    %762 = vmatpush1.bf16.msra.mxu0 0
    %763 = vmatprep.subr.bf16.mxu0 0
    %764 = vmatpush1.bf16.msra.mxu0 0
    %765 = vmatprep.subr.bf16.mxu0 0
    %766 = vmatpush1.bf16.msra.mxu0 0
    %767 = vmatprep.subr.bf16.mxu0 0
    %768 = vmatpush1.bf16.msra.mxu0 0
    %769 = vmatprep.subr.bf16.mxu0 0
    %770 = vmatpush1.bf16.msra.mxu0 0
    %771 = vmatprep.subr.bf16.mxu0 0
    %772 = vmatpush1.bf16.msra.mxu0 0
    %773 = vmatprep.subr.bf16.mxu0 0
    %774 = vmatpush1.bf16.msra.mxu0 0
    %775 = vmatprep.subr.bf16.mxu0 0
    %776 = vmatpush1.bf16.msra.mxu0 0
    %777 = vmatprep.subr.bf16.mxu0 0
    %778 = vmatpush1.bf16.msra.mxu0 0
    %779 = vmatprep.subr.bf16.mxu0 0
    %780 = vmatpush1.bf16.msra.mxu0 0
    %781 = vmatprep.mubr.bf16.mxu0 0
    %782 = vmatmul.mubr.bf16.gmra.mrb[0].mxu0 %v747
    %v783 = vpop.f32.mrb[0].mxu0
    %v784 = vadd.f32 0.0, %v783
    %v785 = vpop.f32.mrb[0].mxu0
    %v786 = vpop.f32.mrb[0].mxu0
    %v787 = vadd.f32 0.0, %v786
    %v788 = vpop.f32.mrb[0].mxu0
    %789 = vdwg.mxu0
    %792 = vrot.lane.b32.xlu0 %v784, 32
    %v793 = vpop.permute.xlu0 %792
    %794 = vrot.lane.b32.xlu0 %v787, 32
    %v795 = vpop.permute.xlu0 %794
    %vm798 = vcmask 392448
    %799 = vst.msk [vmem:[#allocation5] sm:$0xff] %vm798, %v793
    %800 = vst.msk [vmem:[#allocation5 + $0x8] sm:$0xff] %vm798, %v795
    %v801 = vld [vmem:[#allocation2] sm:$0xff]
    %v802 = vld [vmem:[#allocation3] sm:$0xff]
    %v803 = vld [vmem:[#allocation4] sm:$0xff]
    %805 = vrot.lane.b32.xlu0 %v801, 80
    %v806 = vpop.permute.xlu0 %805
    %808 = vrot.lane.b32.xlu0 %v802, 80
    %v809 = vpop.permute.xlu0 %808
    %v811 = vsel %vm396, %v806, 0
    %v814 = vsel %vm396, %v809, 0
    %816 = vmatprep.subr.bf16.mxu0 0
    %817 = vmatpush1.bf16.xpose.msra.mxu0 %v814
    %818 = vmatprep.subr.bf16.mxu0 0
    %819 = vmatpush1.bf16.xpose.msra.mxu0 0
    %820 = vmatprep.subr.bf16.mxu0 0
    %821 = vmatpush1.bf16.xpose.msra.mxu0 0
    %822 = vmatprep.subr.bf16.mxu0 0
    %823 = vmatpush1.bf16.xpose.msra.mxu0 0
    %824 = vmatprep.subr.bf16.mxu0 0
    %825 = vmatpush1.bf16.xpose.msra.mxu0 0
    %826 = vmatprep.subr.bf16.mxu0 0
    %827 = vmatpush1.bf16.xpose.msra.mxu0 0
    %828 = vmatprep.subr.bf16.mxu0 0
    %829 = vmatpush1.bf16.xpose.msra.mxu0 0
    %830 = vmatprep.subr.bf16.mxu0 0
    %831 = vmatpush1.bf16.xpose.msra.mxu0 0
    %832 = vmatprep.subr.bf16.mxu0 0
    %833 = vmatpush1.bf16.xpose.msra.mxu0 0
    %834 = vmatprep.subr.bf16.mxu0 0
    %835 = vmatpush1.bf16.xpose.msra.mxu0 0
    %836 = vmatprep.subr.bf16.mxu0 0
    %837 = vmatpush1.bf16.xpose.msra.mxu0 0
    %838 = vmatprep.subr.bf16.mxu0 0
    %839 = vmatpush1.bf16.xpose.msra.mxu0 0
    %840 = vmatprep.subr.bf16.mxu0 0
    %841 = vmatpush1.bf16.xpose.msra.mxu0 0
    %842 = vmatprep.subr.bf16.mxu0 0
    %843 = vmatpush1.bf16.xpose.msra.mxu0 0
    %844 = vmatprep.subr.bf16.mxu0 0
    %845 = vmatpush1.bf16.xpose.msra.mxu0 0
    %846 = vmatprep.subr.bf16.mxu0 0
    %847 = vmatpush1.bf16.xpose.msra.mxu0 0
    %848 = vmatprep.mubr.bf16.mxu0 0
    %849 = vmatmul.mubr.bf16.gmra.mrb[0].mxu0 %v811
    %v850 = vpop.f32.mrb[0].mxu0
    %v851 = vadd.f32 0.0, %v850
    %v852 = vpop.f32.mrb[0].mxu0
    %v853 = vpop.f32.mrb[0].mxu0
    %v854 = vadd.f32 0.0, %v853
    %v855 = vpop.f32.mrb[0].mxu0
    %856 = vdwg.mxu0
    %v857 = vmul.f32 %v851, 0.25
    %v858 = vmul.f32 %v854, 0.25
    %v859 = vsel %vm391, -1e+09, %v857
    %v860 = vsel %vm392, -1e+09, %v858
    %v861 = vsel %vm396, %v859, -inf
    %862 = vmax.xlane.f32.xlu0 %v861
    %v863 = vpop.xlane.xlu0 %862
    %v864 = vsel %vm396, %v860, -inf
    %865 = vmax.xlane.f32.xlu0 %v864
    %v866 = vpop.xlane.xlu0 %865
    %v867 = vsub.f32 %v859, %v863
    %v868 = vsub.f32 %v860, %v866
    %v869 = vmul.f32 %v867, 1.442695
    %v870 = vpow.pop %v869
    %v871 = vmul.f32 %v868, 1.442695
    %v872 = vpow.pop %v871
    %v873 = vsel %vm396, %v870, 0.0
    %874 = vadd.xlane.f32.xlu0 %v873
    %v875 = vpop.xlane.xlu0 %874
    %v876 = vsel %vm396, %v872, 0.0
    %877 = vadd.xlane.f32.xlu0 %v876
    %v878 = vpop.xlane.xlu0 %877
    %v879 = vrcp.pop %v875
    %v880 = vrcp.pop %v878
    %v881 = vmul.f32 %v870, %v879
    %v882 = vmul.f32 %v872, %v880
    %v883 = vpack.c.bf16 %v882, %v881
    %885 = vrot.lane.b32.xlu0 %v803, 80
    %v886 = vpop.permute.xlu0 %885
    %v889 = vsel %vm396, %v883, 0
    %891 = vmatprep.subr.bf16.mxu0 0
    %892 = vmatpush1.bf16.msra.mxu0 %v886
    %893 = vmatprep.subr.bf16.mxu0 0
    %894 = vmatpush1.bf16.msra.mxu0 0
    %895 = vmatprep.subr.bf16.mxu0 0
    %896 = vmatpush1.bf16.msra.mxu0 0
    %897 = vmatprep.subr.bf16.mxu0 0
    %898 = vmatpush1.bf16.msra.mxu0 0
    %899 = vmatprep.subr.bf16.mxu0 0
    %900 = vmatpush1.bf16.msra.mxu0 0
    %901 = vmatprep.subr.bf16.mxu0 0
    %902 = vmatpush1.bf16.msra.mxu0 0
    %903 = vmatprep.subr.bf16.mxu0 0
    %904 = vmatpush1.bf16.msra.mxu0 0
    %905 = vmatprep.subr.bf16.mxu0 0
    %906 = vmatpush1.bf16.msra.mxu0 0
    %907 = vmatprep.subr.bf16.mxu0 0
    %908 = vmatpush1.bf16.msra.mxu0 0
    %909 = vmatprep.subr.bf16.mxu0 0
    %910 = vmatpush1.bf16.msra.mxu0 0
    %911 = vmatprep.subr.bf16.mxu0 0
    %912 = vmatpush1.bf16.msra.mxu0 0
    %913 = vmatprep.subr.bf16.mxu0 0
    %914 = vmatpush1.bf16.msra.mxu0 0
    %915 = vmatprep.subr.bf16.mxu0 0
    %916 = vmatpush1.bf16.msra.mxu0 0
    %917 = vmatprep.subr.bf16.mxu0 0
    %918 = vmatpush1.bf16.msra.mxu0 0
    %919 = vmatprep.subr.bf16.mxu0 0
    %920 = vmatpush1.bf16.msra.mxu0 0
    %921 = vmatprep.subr.bf16.mxu0 0
    %922 = vmatpush1.bf16.msra.mxu0 0
    %923 = vmatprep.mubr.bf16.mxu0 0
    %924 = vmatmul.mubr.bf16.gmra.mrb[0].mxu0 %v889
    %v925 = vpop.f32.mrb[0].mxu0
    %v926 = vadd.f32 0.0, %v925
    %v927 = vpop.f32.mrb[0].mxu0
    %v928 = vpop.f32.mrb[0].mxu0
    %v929 = vadd.f32 0.0, %v928
    %v930 = vpop.f32.mrb[0].mxu0
    %931 = vdwg.mxu0
    %934 = vrot.lane.b32.xlu0 %v926, 48
    %v935 = vpop.permute.xlu0 %934
    %936 = vrot.lane.b32.xlu0 %v929, 48
    %v937 = vpop.permute.xlu0 %936
    %vm940 = vcmask 523648
    %941 = vst.msk [vmem:[#allocation5] sm:$0xff] %vm940, %v935
    %942 = vst.msk [vmem:[#allocation5 + $0x8] sm:$0xff] %vm940, %v937
    %v943 = vld [vmem:[#allocation2] sm:$0xff]
    %v944 = vld [vmem:[#allocation3] sm:$0xff]
    %v945 = vld [vmem:[#allocation4] sm:$0xff]
    %947 = vrot.lane.b32.xlu0 %v943, 64
    %v948 = vpop.permute.xlu0 %947
    %950 = vrot.lane.b32.xlu0 %v944, 64
    %v951 = vpop.permute.xlu0 %950
    %v953 = vsel %vm396, %v948, 0
    %v956 = vsel %vm396, %v951, 0
    %958 = vmatprep.subr.bf16.mxu0 0
    %959 = vmatpush1.bf16.xpose.msra.mxu0 %v956
    %960 = vmatprep.subr.bf16.mxu0 0
    %961 = vmatpush1.bf16.xpose.msra.mxu0 0
    %962 = vmatprep.subr.bf16.mxu0 0
    %963 = vmatpush1.bf16.xpose.msra.mxu0 0
    %964 = vmatprep.subr.bf16.mxu0 0
    %965 = vmatpush1.bf16.xpose.msra.mxu0 0
    %966 = vmatprep.subr.bf16.mxu0 0
    %967 = vmatpush1.bf16.xpose.msra.mxu0 0
    %968 = vmatprep.subr.bf16.mxu0 0
    %969 = vmatpush1.bf16.xpose.msra.mxu0 0
    %970 = vmatprep.subr.bf16.mxu0 0
    %971 = vmatpush1.bf16.xpose.msra.mxu0 0
    %972 = vmatprep.subr.bf16.mxu0 0
    %973 = vmatpush1.bf16.xpose.msra.mxu0 0
    %974 = vmatprep.subr.bf16.mxu0 0
    %975 = vmatpush1.bf16.xpose.msra.mxu0 0
    %976 = vmatprep.subr.bf16.mxu0 0
    %977 = vmatpush1.bf16.xpose.msra.mxu0 0
    %978 = vmatprep.subr.bf16.mxu0 0
    %979 = vmatpush1.bf16.xpose.msra.mxu0 0
    %980 = vmatprep.subr.bf16.mxu0 0
    %981 = vmatpush1.bf16.xpose.msra.mxu0 0
    %982 = vmatprep.subr.bf16.mxu0 0
    %983 = vmatpush1.bf16.xpose.msra.mxu0 0
    %984 = vmatprep.subr.bf16.mxu0 0
    %985 = vmatpush1.bf16.xpose.msra.mxu0 0
    %986 = vmatprep.subr.bf16.mxu0 0
    %987 = vmatpush1.bf16.xpose.msra.mxu0 0
    %988 = vmatprep.subr.bf16.mxu0 0
    %989 = vmatpush1.bf16.xpose.msra.mxu0 0
    %990 = vmatprep.mubr.bf16.mxu0 0
    %991 = vmatmul.mubr.bf16.gmra.mrb[0].mxu0 %v953
    %v992 = vpop.f32.mrb[0].mxu0
    %v993 = vadd.f32 0.0, %v992
    %v994 = vpop.f32.mrb[0].mxu0
    %v995 = vpop.f32.mrb[0].mxu0
    %v996 = vadd.f32 0.0, %v995
    %v997 = vpop.f32.mrb[0].mxu0
    %998 = vdwg.mxu0
    %v999 = vmul.f32 %v993, 0.25
    %v1000 = vmul.f32 %v996, 0.25
    %v1001 = vsel %vm391, -1e+09, %v999
    %v1002 = vsel %vm392, -1e+09, %v1000
    %v1003 = vsel %vm396, %v1001, -inf
    %1004 = vmax.xlane.f32.xlu0 %v1003
    %v1005 = vpop.xlane.xlu0 %1004
    %v1006 = vsel %vm396, %v1002, -inf
    %1007 = vmax.xlane.f32.xlu0 %v1006
    %v1008 = vpop.xlane.xlu0 %1007
    %v1009 = vsub.f32 %v1001, %v1005
    %v1010 = vsub.f32 %v1002, %v1008
    %v1011 = vmul.f32 %v1009, 1.442695
    %v1012 = vpow.pop %v1011
    %v1013 = vmul.f32 %v1010, 1.442695
    %v1014 = vpow.pop %v1013
    %v1015 = vsel %vm396, %v1012, 0.0
    %1016 = vadd.xlane.f32.xlu0 %v1015
    %v1017 = vpop.xlane.xlu0 %1016
    %v1018 = vsel %vm396, %v1014, 0.0
    %1019 = vadd.xlane.f32.xlu0 %v1018
    %v1020 = vpop.xlane.xlu0 %1019
    %v1021 = vrcp.pop %v1017
    %v1022 = vrcp.pop %v1020
    %v1023 = vmul.f32 %v1012, %v1021
    %v1024 = vmul.f32 %v1014, %v1022
    %v1025 = vpack.c.bf16 %v1024, %v1023
    %1027 = vrot.lane.b32.xlu0 %v945, 64
    %v1028 = vpop.permute.xlu0 %1027
    %v1031 = vsel %vm396, %v1025, 0
    %1033 = vmatprep.subr.bf16.mxu0 0
    %1034 = vmatpush1.bf16.msra.mxu0 %v1028
    %1035 = vmatprep.subr.bf16.mxu0 0
    %1036 = vmatpush1.bf16.msra.mxu0 0
    %1037 = vmatprep.subr.bf16.mxu0 0
    %1038 = vmatpush1.bf16.msra.mxu0 0
    %1039 = vmatprep.subr.bf16.mxu0 0
    %1040 = vmatpush1.bf16.msra.mxu0 0
    %1041 = vmatprep.subr.bf16.mxu0 0
    %1042 = vmatpush1.bf16.msra.mxu0 0
    %1043 = vmatprep.subr.bf16.mxu0 0
    %1044 = vmatpush1.bf16.msra.mxu0 0
    %1045 = vmatprep.subr.bf16.mxu0 0
    %1046 = vmatpush1.bf16.msra.mxu0 0
    %1047 = vmatprep.subr.bf16.mxu0 0
    %1048 = vmatpush1.bf16.msra.mxu0 0
    %1049 = vmatprep.subr.bf16.mxu0 0
    %1050 = vmatpush1.bf16.msra.mxu0 0
    %1051 = vmatprep.subr.bf16.mxu0 0
    %1052 = vmatpush1.bf16.msra.mxu0 0
    %1053 = vmatprep.subr.bf16.mxu0 0
    %1054 = vmatpush1.bf16.msra.mxu0 0
    %1055 = vmatprep.subr.bf16.mxu0 0
    %1056 = vmatpush1.bf16.msra.mxu0 0
    %1057 = vmatprep.subr.bf16.mxu0 0
    %1058 = vmatpush1.bf16.msra.mxu0 0
    %1059 = vmatprep.subr.bf16.mxu0 0
    %1060 = vmatpush1.bf16.msra.mxu0 0
    %1061 = vmatprep.subr.bf16.mxu0 0
    %1062 = vmatpush1.bf16.msra.mxu0 0
    %1063 = vmatprep.subr.bf16.mxu0 0
    %1064 = vmatpush1.bf16.msra.mxu0 0
    %1065 = vmatprep.mubr.bf16.mxu0 0
    %1066 = vmatmul.mubr.bf16.gmra.mrb[0].mxu0 %v1031
    %v1067 = vpop.f32.mrb[0].mxu0
    %v1068 = vadd.f32 0.0, %v1067
    %v1069 = vpop.f32.mrb[0].mxu0
    %v1070 = vpop.f32.mrb[0].mxu0
    %v1071 = vadd.f32 0.0, %v1070
    %v1072 = vpop.f32.mrb[0].mxu0
    %1073 = vdwg.mxu0
    %1076 = vrot.lane.b32.xlu0 %v1068, 64
    %v1077 = vpop.permute.xlu0 %1076
    %1078 = vrot.lane.b32.xlu0 %v1071, 64
    %v1079 = vpop.permute.xlu0 %1078
    %vm1082 = vcmask 654848
    %1083 = vst.msk [vmem:[#allocation5] sm:$0xff] %vm1082, %v1077
    %1084 = vst.msk [vmem:[#allocation5 + $0x8] sm:$0xff] %vm1082, %v1079
    %v1085 = vld [vmem:[#allocation2] sm:$0xff]
    %v1086 = vld [vmem:[#allocation3] sm:$0xff]
    %v1087 = vld [vmem:[#allocation4] sm:$0xff]
    %1089 = vrot.lane.b32.xlu0 %v1085, 48
    %v1090 = vpop.permute.xlu0 %1089
    %1092 = vrot.lane.b32.xlu0 %v1086, 48
    %v1093 = vpop.permute.xlu0 %1092
    %v1095 = vsel %vm396, %v1090, 0
    %v1098 = vsel %vm396, %v1093, 0
    %1100 = vmatprep.subr.bf16.mxu0 0
    %1101 = vmatpush1.bf16.xpose.msra.mxu0 %v1098
    %1102 = vmatprep.subr.bf16.mxu0 0
    %1103 = vmatpush1.bf16.xpose.msra.mxu0 0
    %1104 = vmatprep.subr.bf16.mxu0 0
    %1105 = vmatpush1.bf16.xpose.msra.mxu0 0
    %1106 = vmatprep.subr.bf16.mxu0 0
    %1107 = vmatpush1.bf16.xpose.msra.mxu0 0
    %1108 = vmatprep.subr.bf16.mxu0 0
    %1109 = vmatpush1.bf16.xpose.msra.mxu0 0
    %1110 = vmatprep.subr.bf16.mxu0 0
    %1111 = vmatpush1.bf16.xpose.msra.mxu0 0
    %1112 = vmatprep.subr.bf16.mxu0 0
    %1113 = vmatpush1.bf16.xpose.msra.mxu0 0
    %1114 = vmatprep.subr.bf16.mxu0 0
    %1115 = vmatpush1.bf16.xpose.msra.mxu0 0
    %1116 = vmatprep.subr.bf16.mxu0 0
    %1117 = vmatpush1.bf16.xpose.msra.mxu0 0
    %1118 = vmatprep.subr.bf16.mxu0 0
    %1119 = vmatpush1.bf16.xpose.msra.mxu0 0
    %1120 = vmatprep.subr.bf16.mxu0 0
    %1121 = vmatpush1.bf16.xpose.msra.mxu0 0
    %1122 = vmatprep.subr.bf16.mxu0 0
    %1123 = vmatpush1.bf16.xpose.msra.mxu0 0
    %1124 = vmatprep.subr.bf16.mxu0 0
    %1125 = vmatpush1.bf16.xpose.msra.mxu0 0
    %1126 = vmatprep.subr.bf16.mxu0 0
    %1127 = vmatpush1.bf16.xpose.msra.mxu0 0
    %1128 = vmatprep.subr.bf16.mxu0 0
    %1129 = vmatpush1.bf16.xpose.msra.mxu0 0
    %1130 = vmatprep.subr.bf16.mxu0 0
    %1131 = vmatpush1.bf16.xpose.msra.mxu0 0
    %1132 = vmatprep.mubr.bf16.mxu0 0
    %1133 = vmatmul.mubr.bf16.gmra.mrb[0].mxu0 %v1095
    %v1134 = vpop.f32.mrb[0].mxu0
    %v1135 = vadd.f32 0.0, %v1134
    %v1136 = vpop.f32.mrb[0].mxu0
    %v1137 = vpop.f32.mrb[0].mxu0
    %v1138 = vadd.f32 0.0, %v1137
    %v1139 = vpop.f32.mrb[0].mxu0
    %1140 = vdwg.mxu0
    %v1141 = vmul.f32 %v1135, 0.25
    %v1142 = vmul.f32 %v1138, 0.25
    %v1143 = vsel %vm391, -1e+09, %v1141
    %v1144 = vsel %vm392, -1e+09, %v1142
    %v1145 = vsel %vm396, %v1143, -inf
    %1146 = vmax.xlane.f32.xlu0 %v1145
    %v1147 = vpop.xlane.xlu0 %1146
    %v1148 = vsel %vm396, %v1144, -inf
    %1149 = vmax.xlane.f32.xlu0 %v1148
    %v1150 = vpop.xlane.xlu0 %1149
    %v1151 = vsub.f32 %v1143, %v1147
    %v1152 = vsub.f32 %v1144, %v1150
    %v1153 = vmul.f32 %v1151, 1.442695
    %v1154 = vpow.pop %v1153
    %v1155 = vmul.f32 %v1152, 1.442695
    %v1156 = vpow.pop %v1155
    %v1157 = vsel %vm396, %v1154, 0.0
    %1158 = vadd.xlane.f32.xlu0 %v1157
    %v1159 = vpop.xlane.xlu0 %1158
    %v1160 = vsel %vm396, %v1156, 0.0
    %1161 = vadd.xlane.f32.xlu0 %v1160
    %v1162 = vpop.xlane.xlu0 %1161
    %v1163 = vrcp.pop %v1159
    %v1164 = vrcp.pop %v1162
    %v1165 = vmul.f32 %v1154, %v1163
    %v1166 = vmul.f32 %v1156, %v1164
    %v1167 = vpack.c.bf16 %v1166, %v1165
    %1169 = vrot.lane.b32.xlu0 %v1087, 48
    %v1170 = vpop.permute.xlu0 %1169
    %v1173 = vsel %vm396, %v1167, 0
    %1175 = vmatprep.subr.bf16.mxu0 0
    %1176 = vmatpush1.bf16.msra.mxu0 %v1170
    %1177 = vmatprep.subr.bf16.mxu0 0
    %1178 = vmatpush1.bf16.msra.mxu0 0
    %1179 = vmatprep.subr.bf16.mxu0 0
    %1180 = vmatpush1.bf16.msra.mxu0 0
    %1181 = vmatprep.subr.bf16.mxu0 0
    %1182 = vmatpush1.bf16.msra.mxu0 0
    %1183 = vmatprep.subr.bf16.mxu0 0
    %1184 = vmatpush1.bf16.msra.mxu0 0
    %1185 = vmatprep.subr.bf16.mxu0 0
    %1186 = vmatpush1.bf16.msra.mxu0 0
    %1187 = vmatprep.subr.bf16.mxu0 0
    %1188 = vmatpush1.bf16.msra.mxu0 0
    %1189 = vmatprep.subr.bf16.mxu0 0
    %1190 = vmatpush1.bf16.msra.mxu0 0
    %1191 = vmatprep.subr.bf16.mxu0 0
    %1192 = vmatpush1.bf16.msra.mxu0 0
    %1193 = vmatprep.subr.bf16.mxu0 0
    %1194 = vmatpush1.bf16.msra.mxu0 0
    %1195 = vmatprep.subr.bf16.mxu0 0
    %1196 = vmatpush1.bf16.msra.mxu0 0
    %1197 = vmatprep.subr.bf16.mxu0 0
    %1198 = vmatpush1.bf16.msra.mxu0 0
    %1199 = vmatprep.subr.bf16.mxu0 0
    %1200 = vmatpush1.bf16.msra.mxu0 0
    %1201 = vmatprep.subr.bf16.mxu0 0
    %1202 = vmatpush1.bf16.msra.mxu0 0
    %1203 = vmatprep.subr.bf16.mxu0 0
    %1204 = vmatpush1.bf16.msra.mxu0 0
    %1205 = vmatprep.subr.bf16.mxu0 0
    %1206 = vmatpush1.bf16.msra.mxu0 0
    %1207 = vmatprep.mubr.bf16.mxu0 0
    %1208 = vmatmul.mubr.bf16.gmra.mrb[0].mxu0 %v1173
    %v1209 = vpop.f32.mrb[0].mxu0
    %v1210 = vadd.f32 0.0, %v1209
    %v1211 = vpop.f32.mrb[0].mxu0
    %v1212 = vpop.f32.mrb[0].mxu0
    %v1213 = vadd.f32 0.0, %v1212
    %v1214 = vpop.f32.mrb[0].mxu0
    %1215 = vdwg.mxu0
    %1218 = vrot.lane.b32.xlu0 %v1210, 80
    %v1219 = vpop.permute.xlu0 %1218
    %1220 = vrot.lane.b32.xlu0 %v1213, 80
    %v1221 = vpop.permute.xlu0 %1220
    %vm1224 = vcmask 786048
    %1225 = vst.msk [vmem:[#allocation5] sm:$0xff] %vm1224, %v1219
    %1226 = vst.msk [vmem:[#allocation5 + $0x8] sm:$0xff] %vm1224, %v1221
    %v1227 = vld [vmem:[#allocation2] sm:$0xff]
    %v1228 = vld [vmem:[#allocation3] sm:$0xff]
    %v1229 = vld [vmem:[#allocation4] sm:$0xff]
    %1231 = vrot.lane.b32.xlu0 %v1227, 32
    %v1232 = vpop.permute.xlu0 %1231
    %1234 = vrot.lane.b32.xlu0 %v1228, 32
    %v1235 = vpop.permute.xlu0 %1234
    %v1237 = vsel %vm396, %v1232, 0
    %v1240 = vsel %vm396, %v1235, 0
    %1242 = vmatprep.subr.bf16.mxu0 0
    %1243 = vmatpush1.bf16.xpose.msra.mxu0 %v1240
    %1244 = vmatprep.subr.bf16.mxu0 0
    %1245 = vmatpush1.bf16.xpose.msra.mxu0 0
    %1246 = vmatprep.subr.bf16.mxu0 0
    %1247 = vmatpush1.bf16.xpose.msra.mxu0 0
    %1248 = vmatprep.subr.bf16.mxu0 0
    %1249 = vmatpush1.bf16.xpose.msra.mxu0 0
    %1250 = vmatprep.subr.bf16.mxu0 0
    %1251 = vmatpush1.bf16.xpose.msra.mxu0 0
    %1252 = vmatprep.subr.bf16.mxu0 0
    %1253 = vmatpush1.bf16.xpose.msra.mxu0 0
    %1254 = vmatprep.subr.bf16.mxu0 0
    %1255 = vmatpush1.bf16.xpose.msra.mxu0 0
    %1256 = vmatprep.subr.bf16.mxu0 0
    %1257 = vmatpush1.bf16.xpose.msra.mxu0 0
    %1258 = vmatprep.subr.bf16.mxu0 0
    %1259 = vmatpush1.bf16.xpose.msra.mxu0 0
    %1260 = vmatprep.subr.bf16.mxu0 0
    %1261 = vmatpush1.bf16.xpose.msra.mxu0 0
    %1262 = vmatprep.subr.bf16.mxu0 0
    %1263 = vmatpush1.bf16.xpose.msra.mxu0 0
    %1264 = vmatprep.subr.bf16.mxu0 0
    %1265 = vmatpush1.bf16.xpose.msra.mxu0 0
    %1266 = vmatprep.subr.bf16.mxu0 0
    %1267 = vmatpush1.bf16.xpose.msra.mxu0 0
    %1268 = vmatprep.subr.bf16.mxu0 0
    %1269 = vmatpush1.bf16.xpose.msra.mxu0 0
    %1270 = vmatprep.subr.bf16.mxu0 0
    %1271 = vmatpush1.bf16.xpose.msra.mxu0 0
    %1272 = vmatprep.subr.bf16.mxu0 0
    %1273 = vmatpush1.bf16.xpose.msra.mxu0 0
    %1274 = vmatprep.mubr.bf16.mxu0 0
    %1275 = vmatmul.mubr.bf16.gmra.mrb[0].mxu0 %v1237
    %v1276 = vpop.f32.mrb[0].mxu0
    %v1277 = vadd.f32 0.0, %v1276
    %v1278 = vpop.f32.mrb[0].mxu0
    %v1279 = vpop.f32.mrb[0].mxu0
    %v1280 = vadd.f32 0.0, %v1279
    %v1281 = vpop.f32.mrb[0].mxu0
    %1282 = vdwg.mxu0
    %v1283 = vmul.f32 %v1277, 0.25
    %v1284 = vmul.f32 %v1280, 0.25
    %v1285 = vsel %vm391, -1e+09, %v1283
    %v1286 = vsel %vm392, -1e+09, %v1284
    %v1287 = vsel %vm396, %v1285, -inf
    %1288 = vmax.xlane.f32.xlu0 %v1287
    %v1289 = vpop.xlane.xlu0 %1288
    %v1290 = vsel %vm396, %v1286, -inf
    %1291 = vmax.xlane.f32.xlu0 %v1290
    %v1292 = vpop.xlane.xlu0 %1291
    %v1293 = vsub.f32 %v1285, %v1289
    %v1294 = vsub.f32 %v1286, %v1292
    %v1295 = vmul.f32 %v1293, 1.442695
    %v1296 = vpow.pop %v1295
    %v1297 = vmul.f32 %v1294, 1.442695
    %v1298 = vpow.pop %v1297
    %v1299 = vsel %vm396, %v1296, 0.0
    %1300 = vadd.xlane.f32.xlu0 %v1299
    %v1301 = vpop.xlane.xlu0 %1300
    %v1302 = vsel %vm396, %v1298, 0.0
    %1303 = vadd.xlane.f32.xlu0 %v1302
    %v1304 = vpop.xlane.xlu0 %1303
    %v1305 = vrcp.pop %v1301
    %v1306 = vrcp.pop %v1304
    %v1307 = vmul.f32 %v1296, %v1305
    %v1308 = vmul.f32 %v1298, %v1306
    %v1309 = vpack.c.bf16 %v1308, %v1307
    %1311 = vrot.lane.b32.xlu0 %v1229, 32
    %v1312 = vpop.permute.xlu0 %1311
    %v1315 = vsel %vm396, %v1309, 0
    %1317 = vmatprep.subr.bf16.mxu0 0
    %1318 = vmatpush1.bf16.msra.mxu0 %v1312
    %1319 = vmatprep.subr.bf16.mxu0 0
    %1320 = vmatpush1.bf16.msra.mxu0 0
    %1321 = vmatprep.subr.bf16.mxu0 0
    %1322 = vmatpush1.bf16.msra.mxu0 0
    %1323 = vmatprep.subr.bf16.mxu0 0
    %1324 = vmatpush1.bf16.msra.mxu0 0
    %1325 = vmatprep.subr.bf16.mxu0 0
    %1326 = vmatpush1.bf16.msra.mxu0 0
    %1327 = vmatprep.subr.bf16.mxu0 0
    %1328 = vmatpush1.bf16.msra.mxu0 0
    %1329 = vmatprep.subr.bf16.mxu0 0
    %1330 = vmatpush1.bf16.msra.mxu0 0
    %1331 = vmatprep.subr.bf16.mxu0 0
    %1332 = vmatpush1.bf16.msra.mxu0 0
    %1333 = vmatprep.subr.bf16.mxu0 0
    %1334 = vmatpush1.bf16.msra.mxu0 0
    %1335 = vmatprep.subr.bf16.mxu0 0
    %1336 = vmatpush1.bf16.msra.mxu0 0
    %1337 = vmatprep.subr.bf16.mxu0 0
    %1338 = vmatpush1.bf16.msra.mxu0 0
    %1339 = vmatprep.subr.bf16.mxu0 0
    %1340 = vmatpush1.bf16.msra.mxu0 0
    %1341 = vmatprep.subr.bf16.mxu0 0
    %1342 = vmatpush1.bf16.msra.mxu0 0
    %1343 = vmatprep.subr.bf16.mxu0 0
    %1344 = vmatpush1.bf16.msra.mxu0 0
    %1345 = vmatprep.subr.bf16.mxu0 0
    %1346 = vmatpush1.bf16.msra.mxu0 0
    %1347 = vmatprep.subr.bf16.mxu0 0
    %1348 = vmatpush1.bf16.msra.mxu0 0
    %1349 = vmatprep.mubr.bf16.mxu0 0
    %1350 = vmatmul.mubr.bf16.gmra.mrb[0].mxu0 %v1315
    %v1351 = vpop.f32.mrb[0].mxu0
    %v1352 = vadd.f32 0.0, %v1351
    %v1353 = vpop.f32.mrb[0].mxu0
    %v1354 = vpop.f32.mrb[0].mxu0
    %v1355 = vadd.f32 0.0, %v1354
    %v1356 = vpop.f32.mrb[0].mxu0
    %1357 = vdwg.mxu0
    %1360 = vrot.lane.b32.xlu0 %v1352, 96
    %v1361 = vpop.permute.xlu0 %1360
    %1362 = vrot.lane.b32.xlu0 %v1355, 96
    %v1363 = vpop.permute.xlu0 %1362
    %vm1366 = vcmask 917248
    %1367 = vst.msk [vmem:[#allocation5] sm:$0xff] %vm1366, %v1361
    %1368 = vst.msk [vmem:[#allocation5 + $0x8] sm:$0xff] %vm1366, %v1363
    %v1369 = vld [vmem:[#allocation2] sm:$0xff]
    %v1370 = vld [vmem:[#allocation3] sm:$0xff]
    %v1371 = vld [vmem:[#allocation4] sm:$0xff]
    %1373 = vrot.lane.b32.xlu0 %v1369, 16
    %v1374 = vpop.permute.xlu0 %1373
    %1376 = vrot.lane.b32.xlu0 %v1370, 16
    %v1377 = vpop.permute.xlu0 %1376
    %v1379 = vsel %vm396, %v1374, 0
    %v1382 = vsel %vm396, %v1377, 0
    %1384 = vmatprep.subr.bf16.mxu0 0
    %1385 = vmatpush1.bf16.xpose.msra.mxu0 %v1382
    %1386 = vmatprep.subr.bf16.mxu0 0
    %1387 = vmatpush1.bf16.xpose.msra.mxu0 0
    %1388 = vmatprep.subr.bf16.mxu0 0
    %1389 = vmatpush1.bf16.xpose.msra.mxu0 0
    %1390 = vmatprep.subr.bf16.mxu0 0
    %1391 = vmatpush1.bf16.xpose.msra.mxu0 0
    %1392 = vmatprep.subr.bf16.mxu0 0
    %1393 = vmatpush1.bf16.xpose.msra.mxu0 0
    %1394 = vmatprep.subr.bf16.mxu0 0
    %1395 = vmatpush1.bf16.xpose.msra.mxu0 0
    %1396 = vmatprep.subr.bf16.mxu0 0
    %1397 = vmatpush1.bf16.xpose.msra.mxu0 0
    %1398 = vmatprep.subr.bf16.mxu0 0
    %1399 = vmatpush1.bf16.xpose.msra.mxu0 0
    %1400 = vmatprep.subr.bf16.mxu0 0
    %1401 = vmatpush1.bf16.xpose.msra.mxu0 0
    %1402 = vmatprep.subr.bf16.mxu0 0
    %1403 = vmatpush1.bf16.xpose.msra.mxu0 0
    %1404 = vmatprep.subr.bf16.mxu0 0
    %1405 = vmatpush1.bf16.xpose.msra.mxu0 0
    %1406 = vmatprep.subr.bf16.mxu0 0
    %1407 = vmatpush1.bf16.xpose.msra.mxu0 0
    %1408 = vmatprep.subr.bf16.mxu0 0
    %1409 = vmatpush1.bf16.xpose.msra.mxu0 0
    %1410 = vmatprep.subr.bf16.mxu0 0
    %1411 = vmatpush1.bf16.xpose.msra.mxu0 0
    %1412 = vmatprep.subr.bf16.mxu0 0
    %1413 = vmatpush1.bf16.xpose.msra.mxu0 0
    %1414 = vmatprep.subr.bf16.mxu0 0
    %1415 = vmatpush1.bf16.xpose.msra.mxu0 0
    %1416 = vmatprep.mubr.bf16.mxu0 0
    %1417 = vmatmul.mubr.bf16.gmra.mrb[0].mxu0 %v1379
    %v1418 = vpop.f32.mrb[0].mxu0
    %v1419 = vadd.f32 0.0, %v1418
    %v1420 = vpop.f32.mrb[0].mxu0
    %v1421 = vpop.f32.mrb[0].mxu0
    %v1422 = vadd.f32 0.0, %v1421
    %v1423 = vpop.f32.mrb[0].mxu0
    %1424 = vdwg.mxu0
    %v1425 = vmul.f32 %v1419, 0.25
    %v1426 = vmul.f32 %v1422, 0.25
    %v1427 = vsel %vm391, -1e+09, %v1425
    %v1428 = vsel %vm392, -1e+09, %v1426
    %v1429 = vsel %vm396, %v1427, -inf
    %1430 = vmax.xlane.f32.xlu0 %v1429
    %v1431 = vpop.xlane.xlu0 %1430
    %v1432 = vsel %vm396, %v1428, -inf
    %1433 = vmax.xlane.f32.xlu0 %v1432
    %v1434 = vpop.xlane.xlu0 %1433
    %v1435 = vsub.f32 %v1427, %v1431
    %v1436 = vsub.f32 %v1428, %v1434
    %v1437 = vmul.f32 %v1435, 1.442695
    %v1438 = vpow.pop %v1437
    %v1439 = vmul.f32 %v1436, 1.442695
    %v1440 = vpow.pop %v1439
    %v1441 = vsel %vm396, %v1438, 0.0
    %1442 = vadd.xlane.f32.xlu0 %v1441
    %v1443 = vpop.xlane.xlu0 %1442
    %v1444 = vsel %vm396, %v1440, 0.0
    %1445 = vadd.xlane.f32.xlu0 %v1444
    %v1446 = vpop.xlane.xlu0 %1445
    %v1447 = vrcp.pop %v1443
    %v1448 = vrcp.pop %v1446
    %v1449 = vmul.f32 %v1438, %v1447
    %v1450 = vmul.f32 %v1440, %v1448
    %v1451 = vpack.c.bf16 %v1450, %v1449
    %1453 = vrot.lane.b32.xlu0 %v1371, 16
    %v1454 = vpop.permute.xlu0 %1453
    %v1457 = vsel %vm396, %v1451, 0
    %1459 = vmatprep.subr.bf16.mxu0 0
    %1460 = vmatpush1.bf16.msra.mxu0 %v1454
    %1461 = vmatprep.subr.bf16.mxu0 0
    %1462 = vmatpush1.bf16.msra.mxu0 0
    %1463 = vmatprep.subr.bf16.mxu0 0
    %1464 = vmatpush1.bf16.msra.mxu0 0
    %1465 = vmatprep.subr.bf16.mxu0 0
    %1466 = vmatpush1.bf16.msra.mxu0 0
    %1467 = vmatprep.subr.bf16.mxu0 0
    %1468 = vmatpush1.bf16.msra.mxu0 0
    %1469 = vmatprep.subr.bf16.mxu0 0
    %1470 = vmatpush1.bf16.msra.mxu0 0
    %1471 = vmatprep.subr.bf16.mxu0 0
    %1472 = vmatpush1.bf16.msra.mxu0 0
    %1473 = vmatprep.subr.bf16.mxu0 0
    %1474 = vmatpush1.bf16.msra.mxu0 0
    %1475 = vmatprep.subr.bf16.mxu0 0
    %1476 = vmatpush1.bf16.msra.mxu0 0
    %1477 = vmatprep.subr.bf16.mxu0 0
    %1478 = vmatpush1.bf16.msra.mxu0 0
    %1479 = vmatprep.subr.bf16.mxu0 0
    %1480 = vmatpush1.bf16.msra.mxu0 0
    %1481 = vmatprep.subr.bf16.mxu0 0
    %1482 = vmatpush1.bf16.msra.mxu0 0
    %1483 = vmatprep.subr.bf16.mxu0 0
    %1484 = vmatpush1.bf16.msra.mxu0 0
    %1485 = vmatprep.subr.bf16.mxu0 0
    %1486 = vmatpush1.bf16.msra.mxu0 0
    %1487 = vmatprep.subr.bf16.mxu0 0
    %1488 = vmatpush1.bf16.msra.mxu0 0
    %1489 = vmatprep.subr.bf16.mxu0 0
    %1490 = vmatpush1.bf16.msra.mxu0 0
    %1491 = vmatprep.mubr.bf16.mxu0 0
    %1492 = vmatmul.mubr.bf16.gmra.mrb[0].mxu0 %v1457
    %v1493 = vpop.f32.mrb[0].mxu0
    %v1494 = vadd.f32 0.0, %v1493
    %v1495 = vpop.f32.mrb[0].mxu0
    %v1496 = vpop.f32.mrb[0].mxu0
    %v1497 = vadd.f32 0.0, %v1496
    %v1498 = vpop.f32.mrb[0].mxu0
    %1499 = vdwg.mxu0
    %1502 = vrot.lane.b32.xlu0 %v1494, 112
    %v1503 = vpop.permute.xlu0 %1502
    %1504 = vrot.lane.b32.xlu0 %v1497, 112
    %v1505 = vpop.permute.xlu0 %1504
    %vm1508 = vcmask 1048448
    %1509 = vst.msk [vmem:[#allocation5] sm:$0xff] %vm1508, %v1503
    %1510 = vst.msk [vmem:[#allocation5 + $0x8] sm:$0xff] %vm1508, %v1505
    %v1511 = vld [vmem:[#allocation2 + $0x8] sm:$0xff]
    %v1512 = vld [vmem:[#allocation3 + $0x8] sm:$0xff]
    %v1513 = vld [vmem:[#allocation4 + $0x8] sm:$0xff]
    %v1515 = vsel %vm396, %v1511, 0
    %v1518 = vsel %vm396, %v1512, 0
    %1520 = vmatprep.subr.bf16.mxu0 0
    %1521 = vmatpush1.bf16.xpose.msra.mxu0 %v1518
    %1522 = vmatprep.subr.bf16.mxu0 0
    %1523 = vmatpush1.bf16.xpose.msra.mxu0 0
    %1524 = vmatprep.subr.bf16.mxu0 0
    %1525 = vmatpush1.bf16.xpose.msra.mxu0 0
    %1526 = vmatprep.subr.bf16.mxu0 0
    %1527 = vmatpush1.bf16.xpose.msra.mxu0 0
    %1528 = vmatprep.subr.bf16.mxu0 0
    %1529 = vmatpush1.bf16.xpose.msra.mxu0 0
    %1530 = vmatprep.subr.bf16.mxu0 0
    %1531 = vmatpush1.bf16.xpose.msra.mxu0 0
    %1532 = vmatprep.subr.bf16.mxu0 0
    %1533 = vmatpush1.bf16.xpose.msra.mxu0 0
    %1534 = vmatprep.subr.bf16.mxu0 0
    %1535 = vmatpush1.bf16.xpose.msra.mxu0 0
    %1536 = vmatprep.subr.bf16.mxu0 0
    %1537 = vmatpush1.bf16.xpose.msra.mxu0 0
    %1538 = vmatprep.subr.bf16.mxu0 0
    %1539 = vmatpush1.bf16.xpose.msra.mxu0 0
    %1540 = vmatprep.subr.bf16.mxu0 0
    %1541 = vmatpush1.bf16.xpose.msra.mxu0 0
    %1542 = vmatprep.subr.bf16.mxu0 0
    %1543 = vmatpush1.bf16.xpose.msra.mxu0 0
    %1544 = vmatprep.subr.bf16.mxu0 0
    %1545 = vmatpush1.bf16.xpose.msra.mxu0 0
    %1546 = vmatprep.subr.bf16.mxu0 0
    %1547 = vmatpush1.bf16.xpose.msra.mxu0 0
    %1548 = vmatprep.subr.bf16.mxu0 0
    %1549 = vmatpush1.bf16.xpose.msra.mxu0 0
    %1550 = vmatprep.subr.bf16.mxu0 0
    %1551 = vmatpush1.bf16.xpose.msra.mxu0 0
    %1552 = vmatprep.mubr.bf16.mxu0 0
    %1553 = vmatmul.mubr.bf16.gmra.mrb[0].mxu0 %v1515
    %v1554 = vpop.f32.mrb[0].mxu0
    %v1555 = vadd.f32 0.0, %v1554
    %v1556 = vpop.f32.mrb[0].mxu0
    %v1557 = vpop.f32.mrb[0].mxu0
    %v1558 = vadd.f32 0.0, %v1557
    %v1559 = vpop.f32.mrb[0].mxu0
    %1560 = vdwg.mxu0
    %v1561 = vmul.f32 %v1555, 0.25
    %v1562 = vmul.f32 %v1558, 0.25
    %v1563 = vsel %vm391, -1e+09, %v1561
    %v1564 = vsel %vm392, -1e+09, %v1562
    %v1565 = vsel %vm396, %v1563, -inf
    %1566 = vmax.xlane.f32.xlu0 %v1565
    %v1567 = vpop.xlane.xlu0 %1566
    %v1568 = vsel %vm396, %v1564, -inf
    %1569 = vmax.xlane.f32.xlu0 %v1568
    %v1570 = vpop.xlane.xlu0 %1569
    %v1571 = vsub.f32 %v1563, %v1567
    %v1572 = vsub.f32 %v1564, %v1570
    %v1573 = vmul.f32 %v1571, 1.442695
    %v1574 = vpow.pop %v1573
    %v1575 = vmul.f32 %v1572, 1.442695
    %v1576 = vpow.pop %v1575
    %v1577 = vsel %vm396, %v1574, 0.0
    %1578 = vadd.xlane.f32.xlu0 %v1577
    %v1579 = vpop.xlane.xlu0 %1578
    %v1580 = vsel %vm396, %v1576, 0.0
    %1581 = vadd.xlane.f32.xlu0 %v1580
    %v1582 = vpop.xlane.xlu0 %1581
    %v1583 = vrcp.pop %v1579
    %v1584 = vrcp.pop %v1582
    %v1585 = vmul.f32 %v1574, %v1583
    %v1586 = vmul.f32 %v1576, %v1584
    %v1587 = vpack.c.bf16 %v1586, %v1585
    %v1589 = vsel %vm396, %v1587, 0
    %1591 = vmatprep.subr.bf16.mxu0 0
    %1592 = vmatpush1.bf16.msra.mxu0 %v1513
    %1593 = vmatprep.subr.bf16.mxu0 0
    %1594 = vmatpush1.bf16.msra.mxu0 0
    %1595 = vmatprep.subr.bf16.mxu0 0
    %1596 = vmatpush1.bf16.msra.mxu0 0
    %1597 = vmatprep.subr.bf16.mxu0 0
    %1598 = vmatpush1.bf16.msra.mxu0 0
    %1599 = vmatprep.subr.bf16.mxu0 0
    %1600 = vmatpush1.bf16.msra.mxu0 0
    %1601 = vmatprep.subr.bf16.mxu0 0
    %1602 = vmatpush1.bf16.msra.mxu0 0
    %1603 = vmatprep.subr.bf16.mxu0 0
    %1604 = vmatpush1.bf16.msra.mxu0 0
    %1605 = vmatprep.subr.bf16.mxu0 0
    %1606 = vmatpush1.bf16.msra.mxu0 0
    %1607 = vmatprep.subr.bf16.mxu0 0
    %1608 = vmatpush1.bf16.msra.mxu0 0
    %1609 = vmatprep.subr.bf16.mxu0 0
    %1610 = vmatpush1.bf16.msra.mxu0 0
    %1611 = vmatprep.subr.bf16.mxu0 0
    %1612 = vmatpush1.bf16.msra.mxu0 0
    %1613 = vmatprep.subr.bf16.mxu0 0
    %1614 = vmatpush1.bf16.msra.mxu0 0
    %1615 = vmatprep.subr.bf16.mxu0 0
    %1616 = vmatpush1.bf16.msra.mxu0 0
    %1617 = vmatprep.subr.bf16.mxu0 0
    %1618 = vmatpush1.bf16.msra.mxu0 0
    %1619 = vmatprep.subr.bf16.mxu0 0
    %1620 = vmatpush1.bf16.msra.mxu0 0
    %1621 = vmatprep.subr.bf16.mxu0 0
    %1622 = vmatpush1.bf16.msra.mxu0 0
    %1623 = vmatprep.mubr.bf16.mxu0 0
    %1624 = vmatmul.mubr.bf16.gmra.mrb[0].mxu0 %v1589
    %v1625 = vpop.f32.mrb[0].mxu0
    %v1626 = vadd.f32 0.0, %v1625
    %v1627 = vpop.f32.mrb[0].mxu0
    %v1628 = vpop.f32.mrb[0].mxu0
    %v1629 = vadd.f32 0.0, %v1628
    %v1630 = vpop.f32.mrb[0].mxu0
    %1631 = vdwg.mxu0
    %1632 = vst.msk [vmem:[#allocation5 + $0x10] sm:$0xff] %vm396, %v1626
    %1633 = vst.msk [vmem:[#allocation5 + $0x18] sm:$0xff] %vm396, %v1629
    %v1634 = vld [vmem:[#allocation2 + $0x8] sm:$0xff]
    %v1635 = vld [vmem:[#allocation3 + $0x8] sm:$0xff]
    %v1636 = vld [vmem:[#allocation4 + $0x8] sm:$0xff]
    %1638 = vrot.lane.b32.xlu0 %v1634, 112
    %v1639 = vpop.permute.xlu0 %1638
    %1641 = vrot.lane.b32.xlu0 %v1635, 112
    %v1642 = vpop.permute.xlu0 %1641
    %v1644 = vsel %vm396, %v1639, 0
    %v1647 = vsel %vm396, %v1642, 0
    %1649 = vmatprep.subr.bf16.mxu0 0
    %1650 = vmatpush1.bf16.xpose.msra.mxu0 %v1647
    %1651 = vmatprep.subr.bf16.mxu0 0
    %1652 = vmatpush1.bf16.xpose.msra.mxu0 0
    %1653 = vmatprep.subr.bf16.mxu0 0
    %1654 = vmatpush1.bf16.xpose.msra.mxu0 0
    %1655 = vmatprep.subr.bf16.mxu0 0
    %1656 = vmatpush1.bf16.xpose.msra.mxu0 0
    %1657 = vmatprep.subr.bf16.mxu0 0
    %1658 = vmatpush1.bf16.xpose.msra.mxu0 0
    %1659 = vmatprep.subr.bf16.mxu0 0
    %1660 = vmatpush1.bf16.xpose.msra.mxu0 0
    %1661 = vmatprep.subr.bf16.mxu0 0
    %1662 = vmatpush1.bf16.xpose.msra.mxu0 0
    %1663 = vmatprep.subr.bf16.mxu0 0
    %1664 = vmatpush1.bf16.xpose.msra.mxu0 0
    %1665 = vmatprep.subr.bf16.mxu0 0
    %1666 = vmatpush1.bf16.xpose.msra.mxu0 0
    %1667 = vmatprep.subr.bf16.mxu0 0
    %1668 = vmatpush1.bf16.xpose.msra.mxu0 0
    %1669 = vmatprep.subr.bf16.mxu0 0
    %1670 = vmatpush1.bf16.xpose.msra.mxu0 0
    %1671 = vmatprep.subr.bf16.mxu0 0
    %1672 = vmatpush1.bf16.xpose.msra.mxu0 0
    %1673 = vmatprep.subr.bf16.mxu0 0
    %1674 = vmatpush1.bf16.xpose.msra.mxu0 0
    %1675 = vmatprep.subr.bf16.mxu0 0
    %1676 = vmatpush1.bf16.xpose.msra.mxu0 0
    %1677 = vmatprep.subr.bf16.mxu0 0
    %1678 = vmatpush1.bf16.xpose.msra.mxu0 0
    %1679 = vmatprep.subr.bf16.mxu0 0
    %1680 = vmatpush1.bf16.xpose.msra.mxu0 0
    %1681 = vmatprep.mubr.bf16.mxu0 0
    %1682 = vmatmul.mubr.bf16.gmra.mrb[0].mxu0 %v1644
    %v1683 = vpop.f32.mrb[0].mxu0
    %v1684 = vadd.f32 0.0, %v1683
    %v1685 = vpop.f32.mrb[0].mxu0
    %v1686 = vpop.f32.mrb[0].mxu0
    %v1687 = vadd.f32 0.0, %v1686
    %v1688 = vpop.f32.mrb[0].mxu0
    %1689 = vdwg.mxu0
    %v1690 = vmul.f32 %v1684, 0.25
    %v1691 = vmul.f32 %v1687, 0.25
    %v1692 = vsel %vm391, -1e+09, %v1690
    %v1693 = vsel %vm392, -1e+09, %v1691
    %v1694 = vsel %vm396, %v1692, -inf
    %1695 = vmax.xlane.f32.xlu0 %v1694
    %v1696 = vpop.xlane.xlu0 %1695
    %v1697 = vsel %vm396, %v1693, -inf
    %1698 = vmax.xlane.f32.xlu0 %v1697
    %v1699 = vpop.xlane.xlu0 %1698
    %v1700 = vsub.f32 %v1692, %v1696
    %v1701 = vsub.f32 %v1693, %v1699
    %v1702 = vmul.f32 %v1700, 1.442695
    %v1703 = vpow.pop %v1702
    %v1704 = vmul.f32 %v1701, 1.442695
    %v1705 = vpow.pop %v1704
    %v1706 = vsel %vm396, %v1703, 0.0
    %1707 = vadd.xlane.f32.xlu0 %v1706
    %v1708 = vpop.xlane.xlu0 %1707
    %v1709 = vsel %vm396, %v1705, 0.0
    %1710 = vadd.xlane.f32.xlu0 %v1709
    %v1711 = vpop.xlane.xlu0 %1710
    %v1712 = vrcp.pop %v1708
    %v1713 = vrcp.pop %v1711
    %v1714 = vmul.f32 %v1703, %v1712
    %v1715 = vmul.f32 %v1705, %v1713
    %v1716 = vpack.c.bf16 %v1715, %v1714
    %1718 = vrot.lane.b32.xlu0 %v1636, 112
    %v1719 = vpop.permute.xlu0 %1718
    %v1722 = vsel %vm396, %v1716, 0
    %1724 = vmatprep.subr.bf16.mxu0 0
    %1725 = vmatpush1.bf16.msra.mxu0 %v1719
    %1726 = vmatprep.subr.bf16.mxu0 0
    %1727 = vmatpush1.bf16.msra.mxu0 0
    %1728 = vmatprep.subr.bf16.mxu0 0
    %1729 = vmatpush1.bf16.msra.mxu0 0
    %1730 = vmatprep.subr.bf16.mxu0 0
    %1731 = vmatpush1.bf16.msra.mxu0 0
    %1732 = vmatprep.subr.bf16.mxu0 0
    %1733 = vmatpush1.bf16.msra.mxu0 0
    %1734 = vmatprep.subr.bf16.mxu0 0
    %1735 = vmatpush1.bf16.msra.mxu0 0
    %1736 = vmatprep.subr.bf16.mxu0 0
    %1737 = vmatpush1.bf16.msra.mxu0 0
    %1738 = vmatprep.subr.bf16.mxu0 0
    %1739 = vmatpush1.bf16.msra.mxu0 0
    %1740 = vmatprep.subr.bf16.mxu0 0
    %1741 = vmatpush1.bf16.msra.mxu0 0
    %1742 = vmatprep.subr.bf16.mxu0 0
    %1743 = vmatpush1.bf16.msra.mxu0 0
    %1744 = vmatprep.subr.bf16.mxu0 0
    %1745 = vmatpush1.bf16.msra.mxu0 0
    %1746 = vmatprep.subr.bf16.mxu0 0
    %1747 = vmatpush1.bf16.msra.mxu0 0
    %1748 = vmatprep.subr.bf16.mxu0 0
    %1749 = vmatpush1.bf16.msra.mxu0 0
    %1750 = vmatprep.subr.bf16.mxu0 0
    %1751 = vmatpush1.bf16.msra.mxu0 0
    %1752 = vmatprep.subr.bf16.mxu0 0
    %1753 = vmatpush1.bf16.msra.mxu0 0
    %1754 = vmatprep.subr.bf16.mxu0 0
    %1755 = vmatpush1.bf16.msra.mxu0 0
    %1756 = vmatprep.mubr.bf16.mxu0 0
    %1757 = vmatmul.mubr.bf16.gmra.mrb[0].mxu0 %v1722
    %v1758 = vpop.f32.mrb[0].mxu0
    %v1759 = vadd.f32 0.0, %v1758
    %v1760 = vpop.f32.mrb[0].mxu0
    %v1761 = vpop.f32.mrb[0].mxu0
    %v1762 = vadd.f32 0.0, %v1761
    %v1763 = vpop.f32.mrb[0].mxu0
    %1764 = vdwg.mxu0
    %1767 = vrot.lane.b32.xlu0 %v1759, 16
    %v1768 = vpop.permute.xlu0 %1767
    %1769 = vrot.lane.b32.xlu0 %v1762, 16
    %v1770 = vpop.permute.xlu0 %1769
    %1773 = vst.msk [vmem:[#allocation5 + $0x10] sm:$0xff] %vm656, %v1768
    %1774 = vst.msk [vmem:[#allocation5 + $0x18] sm:$0xff] %vm656, %v1770
    %v1775 = vld [vmem:[#allocation2 + $0x8] sm:$0xff]
    %v1776 = vld [vmem:[#allocation3 + $0x8] sm:$0xff]
    %v1777 = vld [vmem:[#allocation4 + $0x8] sm:$0xff]
    %1779 = vrot.lane.b32.xlu0 %v1775, 96
    %v1780 = vpop.permute.xlu0 %1779
    %1782 = vrot.lane.b32.xlu0 %v1776, 96
    %v1783 = vpop.permute.xlu0 %1782
    %v1785 = vsel %vm396, %v1780, 0
    %v1788 = vsel %vm396, %v1783, 0
    %1790 = vmatprep.subr.bf16.mxu0 0
    %1791 = vmatpush1.bf16.xpose.msra.mxu0 %v1788
    %1792 = vmatprep.subr.bf16.mxu0 0
    %1793 = vmatpush1.bf16.xpose.msra.mxu0 0
    %1794 = vmatprep.subr.bf16.mxu0 0
    %1795 = vmatpush1.bf16.xpose.msra.mxu0 0
    %1796 = vmatprep.subr.bf16.mxu0 0
    %1797 = vmatpush1.bf16.xpose.msra.mxu0 0
    %1798 = vmatprep.subr.bf16.mxu0 0
    %1799 = vmatpush1.bf16.xpose.msra.mxu0 0
    %1800 = vmatprep.subr.bf16.mxu0 0
    %1801 = vmatpush1.bf16.xpose.msra.mxu0 0
    %1802 = vmatprep.subr.bf16.mxu0 0
    %1803 = vmatpush1.bf16.xpose.msra.mxu0 0
    %1804 = vmatprep.subr.bf16.mxu0 0
    %1805 = vmatpush1.bf16.xpose.msra.mxu0 0
    %1806 = vmatprep.subr.bf16.mxu0 0
    %1807 = vmatpush1.bf16.xpose.msra.mxu0 0
    %1808 = vmatprep.subr.bf16.mxu0 0
    %1809 = vmatpush1.bf16.xpose.msra.mxu0 0
    %1810 = vmatprep.subr.bf16.mxu0 0
    %1811 = vmatpush1.bf16.xpose.msra.mxu0 0
    %1812 = vmatprep.subr.bf16.mxu0 0
    %1813 = vmatpush1.bf16.xpose.msra.mxu0 0
    %1814 = vmatprep.subr.bf16.mxu0 0
    %1815 = vmatpush1.bf16.xpose.msra.mxu0 0
    %1816 = vmatprep.subr.bf16.mxu0 0
    %1817 = vmatpush1.bf16.xpose.msra.mxu0 0
    %1818 = vmatprep.subr.bf16.mxu0 0
    %1819 = vmatpush1.bf16.xpose.msra.mxu0 0
    %1820 = vmatprep.subr.bf16.mxu0 0
    %1821 = vmatpush1.bf16.xpose.msra.mxu0 0
    %1822 = vmatprep.mubr.bf16.mxu0 0
    %1823 = vmatmul.mubr.bf16.gmra.mrb[0].mxu0 %v1785
    %v1824 = vpop.f32.mrb[0].mxu0
    %v1825 = vadd.f32 0.0, %v1824
    %v1826 = vpop.f32.mrb[0].mxu0
    %v1827 = vpop.f32.mrb[0].mxu0
    %v1828 = vadd.f32 0.0, %v1827
    %v1829 = vpop.f32.mrb[0].mxu0
    %1830 = vdwg.mxu0
    %v1831 = vmul.f32 %v1825, 0.25
    %v1832 = vmul.f32 %v1828, 0.25
    %v1833 = vsel %vm391, -1e+09, %v1831
    %v1834 = vsel %vm392, -1e+09, %v1832
    %v1835 = vsel %vm396, %v1833, -inf
    %1836 = vmax.xlane.f32.xlu0 %v1835
    %v1837 = vpop.xlane.xlu0 %1836
    %v1838 = vsel %vm396, %v1834, -inf
    %1839 = vmax.xlane.f32.xlu0 %v1838
    %v1840 = vpop.xlane.xlu0 %1839
    %v1841 = vsub.f32 %v1833, %v1837
    %v1842 = vsub.f32 %v1834, %v1840
    %v1843 = vmul.f32 %v1841, 1.442695
    %v1844 = vpow.pop %v1843
    %v1845 = vmul.f32 %v1842, 1.442695
    %v1846 = vpow.pop %v1845
    %v1847 = vsel %vm396, %v1844, 0.0
    %1848 = vadd.xlane.f32.xlu0 %v1847
    %v1849 = vpop.xlane.xlu0 %1848
    %v1850 = vsel %vm396, %v1846, 0.0
    %1851 = vadd.xlane.f32.xlu0 %v1850
    %v1852 = vpop.xlane.xlu0 %1851
    %v1853 = vrcp.pop %v1849
    %v1854 = vrcp.pop %v1852
    %v1855 = vmul.f32 %v1844, %v1853
    %v1856 = vmul.f32 %v1846, %v1854
    %v1857 = vpack.c.bf16 %v1856, %v1855
    %1859 = vrot.lane.b32.xlu0 %v1777, 96
    %v1860 = vpop.permute.xlu0 %1859
    %v1863 = vsel %vm396, %v1857, 0
    %1865 = vmatprep.subr.bf16.mxu0 0
    %1866 = vmatpush1.bf16.msra.mxu0 %v1860
    %1867 = vmatprep.subr.bf16.mxu0 0
    %1868 = vmatpush1.bf16.msra.mxu0 0
    %1869 = vmatprep.subr.bf16.mxu0 0
    %1870 = vmatpush1.bf16.msra.mxu0 0
    %1871 = vmatprep.subr.bf16.mxu0 0
    %1872 = vmatpush1.bf16.msra.mxu0 0
    %1873 = vmatprep.subr.bf16.mxu0 0
    %1874 = vmatpush1.bf16.msra.mxu0 0
    %1875 = vmatprep.subr.bf16.mxu0 0
    %1876 = vmatpush1.bf16.msra.mxu0 0
    %1877 = vmatprep.subr.bf16.mxu0 0
    %1878 = vmatpush1.bf16.msra.mxu0 0
    %1879 = vmatprep.subr.bf16.mxu0 0
    %1880 = vmatpush1.bf16.msra.mxu0 0
    %1881 = vmatprep.subr.bf16.mxu0 0
    %1882 = vmatpush1.bf16.msra.mxu0 0
    %1883 = vmatprep.subr.bf16.mxu0 0
    %1884 = vmatpush1.bf16.msra.mxu0 0
    %1885 = vmatprep.subr.bf16.mxu0 0
    %1886 = vmatpush1.bf16.msra.mxu0 0
    %1887 = vmatprep.subr.bf16.mxu0 0
    %1888 = vmatpush1.bf16.msra.mxu0 0
    %1889 = vmatprep.subr.bf16.mxu0 0
    %1890 = vmatpush1.bf16.msra.mxu0 0
    %1891 = vmatprep.subr.bf16.mxu0 0
    %1892 = vmatpush1.bf16.msra.mxu0 0
    %1893 = vmatprep.subr.bf16.mxu0 0
    %1894 = vmatpush1.bf16.msra.mxu0 0
    %1895 = vmatprep.subr.bf16.mxu0 0
    %1896 = vmatpush1.bf16.msra.mxu0 0
    %1897 = vmatprep.mubr.bf16.mxu0 0
    %1898 = vmatmul.mubr.bf16.gmra.mrb[0].mxu0 %v1863
    %v1899 = vpop.f32.mrb[0].mxu0
    %v1900 = vadd.f32 0.0, %v1899
    %v1901 = vpop.f32.mrb[0].mxu0
    %v1902 = vpop.f32.mrb[0].mxu0
    %v1903 = vadd.f32 0.0, %v1902
    %v1904 = vpop.f32.mrb[0].mxu0
    %1905 = vdwg.mxu0
    %1908 = vrot.lane.b32.xlu0 %v1900, 32
    %v1909 = vpop.permute.xlu0 %1908
    %1910 = vrot.lane.b32.xlu0 %v1903, 32
    %v1911 = vpop.permute.xlu0 %1910
    %1914 = vst.msk [vmem:[#allocation5 + $0x10] sm:$0xff] %vm798, %v1909
    %1915 = vst.msk [vmem:[#allocation5 + $0x18] sm:$0xff] %vm798, %v1911
    %v1916 = vld [vmem:[#allocation2 + $0x8] sm:$0xff]
    %v1917 = vld [vmem:[#allocation3 + $0x8] sm:$0xff]
    %v1918 = vld [vmem:[#allocation4 + $0x8] sm:$0xff]
    %1920 = vrot.lane.b32.xlu0 %v1916, 80
    %v1921 = vpop.permute.xlu0 %1920
    %1923 = vrot.lane.b32.xlu0 %v1917, 80
    %v1924 = vpop.permute.xlu0 %1923
    %v1926 = vsel %vm396, %v1921, 0
    %v1929 = vsel %vm396, %v1924, 0
    %1931 = vmatprep.subr.bf16.mxu0 0
    %1932 = vmatpush1.bf16.xpose.msra.mxu0 %v1929
    %1933 = vmatprep.subr.bf16.mxu0 0
    %1934 = vmatpush1.bf16.xpose.msra.mxu0 0
    %1935 = vmatprep.subr.bf16.mxu0 0
    %1936 = vmatpush1.bf16.xpose.msra.mxu0 0
    %1937 = vmatprep.subr.bf16.mxu0 0
    %1938 = vmatpush1.bf16.xpose.msra.mxu0 0
    %1939 = vmatprep.subr.bf16.mxu0 0
    %1940 = vmatpush1.bf16.xpose.msra.mxu0 0
    %1941 = vmatprep.subr.bf16.mxu0 0
    %1942 = vmatpush1.bf16.xpose.msra.mxu0 0
    %1943 = vmatprep.subr.bf16.mxu0 0
    %1944 = vmatpush1.bf16.xpose.msra.mxu0 0
    %1945 = vmatprep.subr.bf16.mxu0 0
    %1946 = vmatpush1.bf16.xpose.msra.mxu0 0
    %1947 = vmatprep.subr.bf16.mxu0 0
    %1948 = vmatpush1.bf16.xpose.msra.mxu0 0
    %1949 = vmatprep.subr.bf16.mxu0 0
    %1950 = vmatpush1.bf16.xpose.msra.mxu0 0
    %1951 = vmatprep.subr.bf16.mxu0 0
    %1952 = vmatpush1.bf16.xpose.msra.mxu0 0
    %1953 = vmatprep.subr.bf16.mxu0 0
    %1954 = vmatpush1.bf16.xpose.msra.mxu0 0
    %1955 = vmatprep.subr.bf16.mxu0 0
    %1956 = vmatpush1.bf16.xpose.msra.mxu0 0
    %1957 = vmatprep.subr.bf16.mxu0 0
    %1958 = vmatpush1.bf16.xpose.msra.mxu0 0
    %1959 = vmatprep.subr.bf16.mxu0 0
    %1960 = vmatpush1.bf16.xpose.msra.mxu0 0
    %1961 = vmatprep.subr.bf16.mxu0 0
    %1962 = vmatpush1.bf16.xpose.msra.mxu0 0
    %1963 = vmatprep.mubr.bf16.mxu0 0
    %1964 = vmatmul.mubr.bf16.gmra.mrb[0].mxu0 %v1926
    %v1965 = vpop.f32.mrb[0].mxu0
    %v1966 = vadd.f32 0.0, %v1965
    %v1967 = vpop.f32.mrb[0].mxu0
    %v1968 = vpop.f32.mrb[0].mxu0
    %v1969 = vadd.f32 0.0, %v1968
    %v1970 = vpop.f32.mrb[0].mxu0
    %1971 = vdwg.mxu0
    %v1972 = vmul.f32 %v1966, 0.25
    %v1973 = vmul.f32 %v1969, 0.25
    %v1974 = vsel %vm391, -1e+09, %v1972
    %v1975 = vsel %vm392, -1e+09, %v1973
    %v1976 = vsel %vm396, %v1974, -inf
    %1977 = vmax.xlane.f32.xlu0 %v1976
    %v1978 = vpop.xlane.xlu0 %1977
    %v1979 = vsel %vm396, %v1975, -inf
    %1980 = vmax.xlane.f32.xlu0 %v1979
    %v1981 = vpop.xlane.xlu0 %1980
    %v1982 = vsub.f32 %v1974, %v1978
    %v1983 = vsub.f32 %v1975, %v1981
    %v1984 = vmul.f32 %v1982, 1.442695
    %v1985 = vpow.pop %v1984
    %v1986 = vmul.f32 %v1983, 1.442695
    %v1987 = vpow.pop %v1986
    %v1988 = vsel %vm396, %v1985, 0.0
    %1989 = vadd.xlane.f32.xlu0 %v1988
    %v1990 = vpop.xlane.xlu0 %1989
    %v1991 = vsel %vm396, %v1987, 0.0
    %1992 = vadd.xlane.f32.xlu0 %v1991
    %v1993 = vpop.xlane.xlu0 %1992
    %v1994 = vrcp.pop %v1990
    %v1995 = vrcp.pop %v1993
    %v1996 = vmul.f32 %v1985, %v1994
    %v1997 = vmul.f32 %v1987, %v1995
    %v1998 = vpack.c.bf16 %v1997, %v1996
    %2000 = vrot.lane.b32.xlu0 %v1918, 80
    %v2001 = vpop.permute.xlu0 %2000
    %v2004 = vsel %vm396, %v1998, 0
    %2006 = vmatprep.subr.bf16.mxu0 0
    %2007 = vmatpush1.bf16.msra.mxu0 %v2001
    %2008 = vmatprep.subr.bf16.mxu0 0
    %2009 = vmatpush1.bf16.msra.mxu0 0
    %2010 = vmatprep.subr.bf16.mxu0 0
    %2011 = vmatpush1.bf16.msra.mxu0 0
    %2012 = vmatprep.subr.bf16.mxu0 0
    %2013 = vmatpush1.bf16.msra.mxu0 0
    %2014 = vmatprep.subr.bf16.mxu0 0
    %2015 = vmatpush1.bf16.msra.mxu0 0
    %2016 = vmatprep.subr.bf16.mxu0 0
    %2017 = vmatpush1.bf16.msra.mxu0 0
    %2018 = vmatprep.subr.bf16.mxu0 0
    %2019 = vmatpush1.bf16.msra.mxu0 0
    %2020 = vmatprep.subr.bf16.mxu0 0
    %2021 = vmatpush1.bf16.msra.mxu0 0
    %2022 = vmatprep.subr.bf16.mxu0 0
    %2023 = vmatpush1.bf16.msra.mxu0 0
    %2024 = vmatprep.subr.bf16.mxu0 0
    %2025 = vmatpush1.bf16.msra.mxu0 0
    %2026 = vmatprep.subr.bf16.mxu0 0
    %2027 = vmatpush1.bf16.msra.mxu0 0
    %2028 = vmatprep.subr.bf16.mxu0 0
    %2029 = vmatpush1.bf16.msra.mxu0 0
    %2030 = vmatprep.subr.bf16.mxu0 0
    %2031 = vmatpush1.bf16.msra.mxu0 0
    %2032 = vmatprep.subr.bf16.mxu0 0
    %2033 = vmatpush1.bf16.msra.mxu0 0
    %2034 = vmatprep.subr.bf16.mxu0 0
    %2035 = vmatpush1.bf16.msra.mxu0 0
    %2036 = vmatprep.subr.bf16.mxu0 0
    %2037 = vmatpush1.bf16.msra.mxu0 0
    %2038 = vmatprep.mubr.bf16.mxu0 0
    %2039 = vmatmul.mubr.bf16.gmra.mrb[0].mxu0 %v2004
    %v2040 = vpop.f32.mrb[0].mxu0
    %v2041 = vadd.f32 0.0, %v2040
    %v2042 = vpop.f32.mrb[0].mxu0
    %v2043 = vpop.f32.mrb[0].mxu0
    %v2044 = vadd.f32 0.0, %v2043
    %v2045 = vpop.f32.mrb[0].mxu0
    %2046 = vdwg.mxu0
    %2049 = vrot.lane.b32.xlu0 %v2041, 48
    %v2050 = vpop.permute.xlu0 %2049
    %2051 = vrot.lane.b32.xlu0 %v2044, 48
    %v2052 = vpop.permute.xlu0 %2051
    %2055 = vst.msk [vmem:[#allocation5 + $0x10] sm:$0xff] %vm940, %v2050
    %2056 = vst.msk [vmem:[#allocation5 + $0x18] sm:$0xff] %vm940, %v2052
    %v2057 = vld [vmem:[#allocation2 + $0x8] sm:$0xff]
    %v2058 = vld [vmem:[#allocation3 + $0x8] sm:$0xff]
    %v2059 = vld [vmem:[#allocation4 + $0x8] sm:$0xff]
    %2061 = vrot.lane.b32.xlu0 %v2057, 64
    %v2062 = vpop.permute.xlu0 %2061
    %2064 = vrot.lane.b32.xlu0 %v2058, 64
    %v2065 = vpop.permute.xlu0 %2064
    %v2067 = vsel %vm396, %v2062, 0
    %v2070 = vsel %vm396, %v2065, 0
    %2072 = vmatprep.subr.bf16.mxu0 0
    %2073 = vmatpush1.bf16.xpose.msra.mxu0 %v2070
    %2074 = vmatprep.subr.bf16.mxu0 0
    %2075 = vmatpush1.bf16.xpose.msra.mxu0 0
    %2076 = vmatprep.subr.bf16.mxu0 0
    %2077 = vmatpush1.bf16.xpose.msra.mxu0 0
    %2078 = vmatprep.subr.bf16.mxu0 0
    %2079 = vmatpush1.bf16.xpose.msra.mxu0 0
    %2080 = vmatprep.subr.bf16.mxu0 0
    %2081 = vmatpush1.bf16.xpose.msra.mxu0 0
    %2082 = vmatprep.subr.bf16.mxu0 0
    %2083 = vmatpush1.bf16.xpose.msra.mxu0 0
    %2084 = vmatprep.subr.bf16.mxu0 0
    %2085 = vmatpush1.bf16.xpose.msra.mxu0 0
    %2086 = vmatprep.subr.bf16.mxu0 0
    %2087 = vmatpush1.bf16.xpose.msra.mxu0 0
    %2088 = vmatprep.subr.bf16.mxu0 0
    %2089 = vmatpush1.bf16.xpose.msra.mxu0 0
    %2090 = vmatprep.subr.bf16.mxu0 0
    %2091 = vmatpush1.bf16.xpose.msra.mxu0 0
    %2092 = vmatprep.subr.bf16.mxu0 0
    %2093 = vmatpush1.bf16.xpose.msra.mxu0 0
    %2094 = vmatprep.subr.bf16.mxu0 0
    %2095 = vmatpush1.bf16.xpose.msra.mxu0 0
    %2096 = vmatprep.subr.bf16.mxu0 0
    %2097 = vmatpush1.bf16.xpose.msra.mxu0 0
    %2098 = vmatprep.subr.bf16.mxu0 0
    %2099 = vmatpush1.bf16.xpose.msra.mxu0 0
    %2100 = vmatprep.subr.bf16.mxu0 0
    %2101 = vmatpush1.bf16.xpose.msra.mxu0 0
    %2102 = vmatprep.subr.bf16.mxu0 0
    %2103 = vmatpush1.bf16.xpose.msra.mxu0 0
    %2104 = vmatprep.mubr.bf16.mxu0 0
    %2105 = vmatmul.mubr.bf16.gmra.mrb[0].mxu0 %v2067
    %v2106 = vpop.f32.mrb[0].mxu0
    %v2107 = vadd.f32 0.0, %v2106
    %v2108 = vpop.f32.mrb[0].mxu0
    %v2109 = vpop.f32.mrb[0].mxu0
    %v2110 = vadd.f32 0.0, %v2109
    %v2111 = vpop.f32.mrb[0].mxu0
    %2112 = vdwg.mxu0
    %v2113 = vmul.f32 %v2107, 0.25
    %v2114 = vmul.f32 %v2110, 0.25
    %v2115 = vsel %vm391, -1e+09, %v2113
    %v2116 = vsel %vm392, -1e+09, %v2114
    %v2117 = vsel %vm396, %v2115, -inf
    %2118 = vmax.xlane.f32.xlu0 %v2117
    %v2119 = vpop.xlane.xlu0 %2118
    %v2120 = vsel %vm396, %v2116, -inf
    %2121 = vmax.xlane.f32.xlu0 %v2120
    %v2122 = vpop.xlane.xlu0 %2121
    %v2123 = vsub.f32 %v2115, %v2119
    %v2124 = vsub.f32 %v2116, %v2122
    %v2125 = vmul.f32 %v2123, 1.442695
    %v2126 = vpow.pop %v2125
    %v2127 = vmul.f32 %v2124, 1.442695
    %v2128 = vpow.pop %v2127
    %v2129 = vsel %vm396, %v2126, 0.0
    %2130 = vadd.xlane.f32.xlu0 %v2129
    %v2131 = vpop.xlane.xlu0 %2130
    %v2132 = vsel %vm396, %v2128, 0.0
    %2133 = vadd.xlane.f32.xlu0 %v2132
    %v2134 = vpop.xlane.xlu0 %2133
    %v2135 = vrcp.pop %v2131
    %v2136 = vrcp.pop %v2134
    %v2137 = vmul.f32 %v2126, %v2135
    %v2138 = vmul.f32 %v2128, %v2136
    %v2139 = vpack.c.bf16 %v2138, %v2137
    %2141 = vrot.lane.b32.xlu0 %v2059, 64
    %v2142 = vpop.permute.xlu0 %2141
    %v2145 = vsel %vm396, %v2139, 0
    %2147 = vmatprep.subr.bf16.mxu0 0
    %2148 = vmatpush1.bf16.msra.mxu0 %v2142
    %2149 = vmatprep.subr.bf16.mxu0 0
    %2150 = vmatpush1.bf16.msra.mxu0 0
    %2151 = vmatprep.subr.bf16.mxu0 0
    %2152 = vmatpush1.bf16.msra.mxu0 0
    %2153 = vmatprep.subr.bf16.mxu0 0
    %2154 = vmatpush1.bf16.msra.mxu0 0
    %2155 = vmatprep.subr.bf16.mxu0 0
    %2156 = vmatpush1.bf16.msra.mxu0 0
    %2157 = vmatprep.subr.bf16.mxu0 0
    %2158 = vmatpush1.bf16.msra.mxu0 0
    %2159 = vmatprep.subr.bf16.mxu0 0
    %2160 = vmatpush1.bf16.msra.mxu0 0
    %2161 = vmatprep.subr.bf16.mxu0 0
    %2162 = vmatpush1.bf16.msra.mxu0 0
    %2163 = vmatprep.subr.bf16.mxu0 0
    %2164 = vmatpush1.bf16.msra.mxu0 0
    %2165 = vmatprep.subr.bf16.mxu0 0
    %2166 = vmatpush1.bf16.msra.mxu0 0
    %2167 = vmatprep.subr.bf16.mxu0 0
    %2168 = vmatpush1.bf16.msra.mxu0 0
    %2169 = vmatprep.subr.bf16.mxu0 0
    %2170 = vmatpush1.bf16.msra.mxu0 0
    %2171 = vmatprep.subr.bf16.mxu0 0
    %2172 = vmatpush1.bf16.msra.mxu0 0
    %2173 = vmatprep.subr.bf16.mxu0 0
    %2174 = vmatpush1.bf16.msra.mxu0 0
    %2175 = vmatprep.subr.bf16.mxu0 0
    %2176 = vmatpush1.bf16.msra.mxu0 0
    %2177 = vmatprep.subr.bf16.mxu0 0
    %2178 = vmatpush1.bf16.msra.mxu0 0
    %2179 = vmatprep.mubr.bf16.mxu0 0
    %2180 = vmatmul.mubr.bf16.gmra.mrb[0].mxu0 %v2145
    %v2181 = vpop.f32.mrb[0].mxu0
    %v2182 = vadd.f32 0.0, %v2181
    %v2183 = vpop.f32.mrb[0].mxu0
    %v2184 = vpop.f32.mrb[0].mxu0
    %v2185 = vadd.f32 0.0, %v2184
    %v2186 = vpop.f32.mrb[0].mxu0
    %2187 = vdwg.mxu0
    %2190 = vrot.lane.b32.xlu0 %v2182, 64
    %v2191 = vpop.permute.xlu0 %2190
    %2192 = vrot.lane.b32.xlu0 %v2185, 64
    %v2193 = vpop.permute.xlu0 %2192
    %2196 = vst.msk [vmem:[#allocation5 + $0x10] sm:$0xff] %vm1082, %v2191
    %2197 = vst.msk [vmem:[#allocation5 + $0x18] sm:$0xff] %vm1082, %v2193
    %v2198 = vld [vmem:[#allocation2 + $0x8] sm:$0xff]
    %v2199 = vld [vmem:[#allocation3 + $0x8] sm:$0xff]
    %v2200 = vld [vmem:[#allocation4 + $0x8] sm:$0xff]
    %2202 = vrot.lane.b32.xlu0 %v2198, 48
    %v2203 = vpop.permute.xlu0 %2202
    %2205 = vrot.lane.b32.xlu0 %v2199, 48
    %v2206 = vpop.permute.xlu0 %2205
    %v2208 = vsel %vm396, %v2203, 0
    %v2211 = vsel %vm396, %v2206, 0
    %2213 = vmatprep.subr.bf16.mxu0 0
    %2214 = vmatpush1.bf16.xpose.msra.mxu0 %v2211
    %2215 = vmatprep.subr.bf16.mxu0 0
    %2216 = vmatpush1.bf16.xpose.msra.mxu0 0
    %2217 = vmatprep.subr.bf16.mxu0 0
    %2218 = vmatpush1.bf16.xpose.msra.mxu0 0
    %2219 = vmatprep.subr.bf16.mxu0 0
    %2220 = vmatpush1.bf16.xpose.msra.mxu0 0
    %2221 = vmatprep.subr.bf16.mxu0 0
    %2222 = vmatpush1.bf16.xpose.msra.mxu0 0
    %2223 = vmatprep.subr.bf16.mxu0 0
    %2224 = vmatpush1.bf16.xpose.msra.mxu0 0
    %2225 = vmatprep.subr.bf16.mxu0 0
    %2226 = vmatpush1.bf16.xpose.msra.mxu0 0
    %2227 = vmatprep.subr.bf16.mxu0 0
    %2228 = vmatpush1.bf16.xpose.msra.mxu0 0
    %2229 = vmatprep.subr.bf16.mxu0 0
    %2230 = vmatpush1.bf16.xpose.msra.mxu0 0
    %2231 = vmatprep.subr.bf16.mxu0 0
    %2232 = vmatpush1.bf16.xpose.msra.mxu0 0
    %2233 = vmatprep.subr.bf16.mxu0 0
    %2234 = vmatpush1.bf16.xpose.msra.mxu0 0
    %2235 = vmatprep.subr.bf16.mxu0 0
    %2236 = vmatpush1.bf16.xpose.msra.mxu0 0
    %2237 = vmatprep.subr.bf16.mxu0 0
    %2238 = vmatpush1.bf16.xpose.msra.mxu0 0
    %2239 = vmatprep.subr.bf16.mxu0 0
    %2240 = vmatpush1.bf16.xpose.msra.mxu0 0
    %2241 = vmatprep.subr.bf16.mxu0 0
    %2242 = vmatpush1.bf16.xpose.msra.mxu0 0
    %2243 = vmatprep.subr.bf16.mxu0 0
    %2244 = vmatpush1.bf16.xpose.msra.mxu0 0
    %2245 = vmatprep.mubr.bf16.mxu0 0
    %2246 = vmatmul.mubr.bf16.gmra.mrb[0].mxu0 %v2208
    %v2247 = vpop.f32.mrb[0].mxu0
    %v2248 = vadd.f32 0.0, %v2247
    %v2249 = vpop.f32.mrb[0].mxu0
    %v2250 = vpop.f32.mrb[0].mxu0
    %v2251 = vadd.f32 0.0, %v2250
    %v2252 = vpop.f32.mrb[0].mxu0
    %2253 = vdwg.mxu0
    %v2254 = vmul.f32 %v2248, 0.25
    %v2255 = vmul.f32 %v2251, 0.25
    %v2256 = vsel %vm391, -1e+09, %v2254
    %v2257 = vsel %vm392, -1e+09, %v2255
    %v2258 = vsel %vm396, %v2256, -inf
    %2259 = vmax.xlane.f32.xlu0 %v2258
    %v2260 = vpop.xlane.xlu0 %2259
    %v2261 = vsel %vm396, %v2257, -inf
    %2262 = vmax.xlane.f32.xlu0 %v2261
    %v2263 = vpop.xlane.xlu0 %2262
    %v2264 = vsub.f32 %v2256, %v2260
    %v2265 = vsub.f32 %v2257, %v2263
    %v2266 = vmul.f32 %v2264, 1.442695
    %v2267 = vpow.pop %v2266
    %v2268 = vmul.f32 %v2265, 1.442695
    %v2269 = vpow.pop %v2268
    %v2270 = vsel %vm396, %v2267, 0.0
    %2271 = vadd.xlane.f32.xlu0 %v2270
    %v2272 = vpop.xlane.xlu0 %2271
    %v2273 = vsel %vm396, %v2269, 0.0
    %2274 = vadd.xlane.f32.xlu0 %v2273
    %v2275 = vpop.xlane.xlu0 %2274
    %v2276 = vrcp.pop %v2272
    %v2277 = vrcp.pop %v2275
    %v2278 = vmul.f32 %v2267, %v2276
    %v2279 = vmul.f32 %v2269, %v2277
    %v2280 = vpack.c.bf16 %v2279, %v2278
    %2282 = vrot.lane.b32.xlu0 %v2200, 48
    %v2283 = vpop.permute.xlu0 %2282
    %v2286 = vsel %vm396, %v2280, 0
    %2288 = vmatprep.subr.bf16.mxu0 0
    %2289 = vmatpush1.bf16.msra.mxu0 %v2283
    %2290 = vmatprep.subr.bf16.mxu0 0
    %2291 = vmatpush1.bf16.msra.mxu0 0
    %2292 = vmatprep.subr.bf16.mxu0 0
    %2293 = vmatpush1.bf16.msra.mxu0 0
    %2294 = vmatprep.subr.bf16.mxu0 0
    %2295 = vmatpush1.bf16.msra.mxu0 0
    %2296 = vmatprep.subr.bf16.mxu0 0
    %2297 = vmatpush1.bf16.msra.mxu0 0
    %2298 = vmatprep.subr.bf16.mxu0 0
    %2299 = vmatpush1.bf16.msra.mxu0 0
    %2300 = vmatprep.subr.bf16.mxu0 0
    %2301 = vmatpush1.bf16.msra.mxu0 0
    %2302 = vmatprep.subr.bf16.mxu0 0
    %2303 = vmatpush1.bf16.msra.mxu0 0
    %2304 = vmatprep.subr.bf16.mxu0 0
    %2305 = vmatpush1.bf16.msra.mxu0 0
    %2306 = vmatprep.subr.bf16.mxu0 0
    %2307 = vmatpush1.bf16.msra.mxu0 0
    %2308 = vmatprep.subr.bf16.mxu0 0
    %2309 = vmatpush1.bf16.msra.mxu0 0
    %2310 = vmatprep.subr.bf16.mxu0 0
    %2311 = vmatpush1.bf16.msra.mxu0 0
    %2312 = vmatprep.subr.bf16.mxu0 0
    %2313 = vmatpush1.bf16.msra.mxu0 0
    %2314 = vmatprep.subr.bf16.mxu0 0
    %2315 = vmatpush1.bf16.msra.mxu0 0
    %2316 = vmatprep.subr.bf16.mxu0 0
    %2317 = vmatpush1.bf16.msra.mxu0 0
    %2318 = vmatprep.subr.bf16.mxu0 0
    %2319 = vmatpush1.bf16.msra.mxu0 0
    %2320 = vmatprep.mubr.bf16.mxu0 0
    %2321 = vmatmul.mubr.bf16.gmra.mrb[0].mxu0 %v2286
    %v2322 = vpop.f32.mrb[0].mxu0
    %v2323 = vadd.f32 0.0, %v2322
    %v2324 = vpop.f32.mrb[0].mxu0
    %v2325 = vpop.f32.mrb[0].mxu0
    %v2326 = vadd.f32 0.0, %v2325
    %v2327 = vpop.f32.mrb[0].mxu0
    %2328 = vdwg.mxu0
    %2331 = vrot.lane.b32.xlu0 %v2323, 80
    %v2332 = vpop.permute.xlu0 %2331
    %2333 = vrot.lane.b32.xlu0 %v2326, 80
    %v2334 = vpop.permute.xlu0 %2333
    %2337 = vst.msk [vmem:[#allocation5 + $0x10] sm:$0xff] %vm1224, %v2332
    %2338 = vst.msk [vmem:[#allocation5 + $0x18] sm:$0xff] %vm1224, %v2334
    %v2339 = vld [vmem:[#allocation2 + $0x8] sm:$0xff]
    %v2340 = vld [vmem:[#allocation3 + $0x8] sm:$0xff]
    %v2341 = vld [vmem:[#allocation4 + $0x8] sm:$0xff]
    %2343 = vrot.lane.b32.xlu0 %v2339, 32
    %v2344 = vpop.permute.xlu0 %2343
    %2346 = vrot.lane.b32.xlu0 %v2340, 32
    %v2347 = vpop.permute.xlu0 %2346
    %v2349 = vsel %vm396, %v2344, 0
    %v2352 = vsel %vm396, %v2347, 0
    %2354 = vmatprep.subr.bf16.mxu0 0
    %2355 = vmatpush1.bf16.xpose.msra.mxu0 %v2352
    %2356 = vmatprep.subr.bf16.mxu0 0
    %2357 = vmatpush1.bf16.xpose.msra.mxu0 0
    %2358 = vmatprep.subr.bf16.mxu0 0
    %2359 = vmatpush1.bf16.xpose.msra.mxu0 0
    %2360 = vmatprep.subr.bf16.mxu0 0
    %2361 = vmatpush1.bf16.xpose.msra.mxu0 0
    %2362 = vmatprep.subr.bf16.mxu0 0
    %2363 = vmatpush1.bf16.xpose.msra.mxu0 0
    %2364 = vmatprep.subr.bf16.mxu0 0
    %2365 = vmatpush1.bf16.xpose.msra.mxu0 0
    %2366 = vmatprep.subr.bf16.mxu0 0
    %2367 = vmatpush1.bf16.xpose.msra.mxu0 0
    %2368 = vmatprep.subr.bf16.mxu0 0
    %2369 = vmatpush1.bf16.xpose.msra.mxu0 0
    %2370 = vmatprep.subr.bf16.mxu0 0
    %2371 = vmatpush1.bf16.xpose.msra.mxu0 0
    %2372 = vmatprep.subr.bf16.mxu0 0
    %2373 = vmatpush1.bf16.xpose.msra.mxu0 0
    %2374 = vmatprep.subr.bf16.mxu0 0
    %2375 = vmatpush1.bf16.xpose.msra.mxu0 0
    %2376 = vmatprep.subr.bf16.mxu0 0
    %2377 = vmatpush1.bf16.xpose.msra.mxu0 0
    %2378 = vmatprep.subr.bf16.mxu0 0
    %2379 = vmatpush1.bf16.xpose.msra.mxu0 0
    %2380 = vmatprep.subr.bf16.mxu0 0
    %2381 = vmatpush1.bf16.xpose.msra.mxu0 0
    %2382 = vmatprep.subr.bf16.mxu0 0
    %2383 = vmatpush1.bf16.xpose.msra.mxu0 0
    %2384 = vmatprep.subr.bf16.mxu0 0
    %2385 = vmatpush1.bf16.xpose.msra.mxu0 0
    %2386 = vmatprep.mubr.bf16.mxu0 0
    %2387 = vmatmul.mubr.bf16.gmra.mrb[0].mxu0 %v2349
    %v2388 = vpop.f32.mrb[0].mxu0
    %v2389 = vadd.f32 0.0, %v2388
    %v2390 = vpop.f32.mrb[0].mxu0
    %v2391 = vpop.f32.mrb[0].mxu0
    %v2392 = vadd.f32 0.0, %v2391
    %v2393 = vpop.f32.mrb[0].mxu0
    %2394 = vdwg.mxu0
    %v2395 = vmul.f32 %v2389, 0.25
    %v2396 = vmul.f32 %v2392, 0.25
    %v2397 = vsel %vm391, -1e+09, %v2395
    %v2398 = vsel %vm392, -1e+09, %v2396
    %v2399 = vsel %vm396, %v2397, -inf
    %2400 = vmax.xlane.f32.xlu0 %v2399
    %v2401 = vpop.xlane.xlu0 %2400
    %v2402 = vsel %vm396, %v2398, -inf
    %2403 = vmax.xlane.f32.xlu0 %v2402
    %v2404 = vpop.xlane.xlu0 %2403
    %v2405 = vsub.f32 %v2397, %v2401
    %v2406 = vsub.f32 %v2398, %v2404
    %v2407 = vmul.f32 %v2405, 1.442695
    %v2408 = vpow.pop %v2407
    %v2409 = vmul.f32 %v2406, 1.442695
    %v2410 = vpow.pop %v2409
    %v2411 = vsel %vm396, %v2408, 0.0
    %2412 = vadd.xlane.f32.xlu0 %v2411
    %v2413 = vpop.xlane.xlu0 %2412
    %v2414 = vsel %vm396, %v2410, 0.0
    %2415 = vadd.xlane.f32.xlu0 %v2414
    %v2416 = vpop.xlane.xlu0 %2415
    %v2417 = vrcp.pop %v2413
    %v2418 = vrcp.pop %v2416
    %v2419 = vmul.f32 %v2408, %v2417
    %v2420 = vmul.f32 %v2410, %v2418
    %v2421 = vpack.c.bf16 %v2420, %v2419
    %2423 = vrot.lane.b32.xlu0 %v2341, 32
    %v2424 = vpop.permute.xlu0 %2423
    %v2427 = vsel %vm396, %v2421, 0
    %2429 = vmatprep.subr.bf16.mxu0 0
    %2430 = vmatpush1.bf16.msra.mxu0 %v2424
    %2431 = vmatprep.subr.bf16.mxu0 0
    %2432 = vmatpush1.bf16.msra.mxu0 0
    %2433 = vmatprep.subr.bf16.mxu0 0
    %2434 = vmatpush1.bf16.msra.mxu0 0
    %2435 = vmatprep.subr.bf16.mxu0 0
    %2436 = vmatpush1.bf16.msra.mxu0 0
    %2437 = vmatprep.subr.bf16.mxu0 0
    %2438 = vmatpush1.bf16.msra.mxu0 0
    %2439 = vmatprep.subr.bf16.mxu0 0
    %2440 = vmatpush1.bf16.msra.mxu0 0
    %2441 = vmatprep.subr.bf16.mxu0 0
    %2442 = vmatpush1.bf16.msra.mxu0 0
    %2443 = vmatprep.subr.bf16.mxu0 0
    %2444 = vmatpush1.bf16.msra.mxu0 0
    %2445 = vmatprep.subr.bf16.mxu0 0
    %2446 = vmatpush1.bf16.msra.mxu0 0
    %2447 = vmatprep.subr.bf16.mxu0 0
    %2448 = vmatpush1.bf16.msra.mxu0 0
    %2449 = vmatprep.subr.bf16.mxu0 0
    %2450 = vmatpush1.bf16.msra.mxu0 0
    %2451 = vmatprep.subr.bf16.mxu0 0
    %2452 = vmatpush1.bf16.msra.mxu0 0
    %2453 = vmatprep.subr.bf16.mxu0 0
    %2454 = vmatpush1.bf16.msra.mxu0 0
    %2455 = vmatprep.subr.bf16.mxu0 0
    %2456 = vmatpush1.bf16.msra.mxu0 0
    %2457 = vmatprep.subr.bf16.mxu0 0
    %2458 = vmatpush1.bf16.msra.mxu0 0
    %2459 = vmatprep.subr.bf16.mxu0 0
    %2460 = vmatpush1.bf16.msra.mxu0 0
    %2461 = vmatprep.mubr.bf16.mxu0 0
    %2462 = vmatmul.mubr.bf16.gmra.mrb[0].mxu0 %v2427
    %v2463 = vpop.f32.mrb[0].mxu0
    %v2464 = vadd.f32 0.0, %v2463
    %v2465 = vpop.f32.mrb[0].mxu0
    %v2466 = vpop.f32.mrb[0].mxu0
    %v2467 = vadd.f32 0.0, %v2466
    %v2468 = vpop.f32.mrb[0].mxu0
    %2469 = vdwg.mxu0
    %2472 = vrot.lane.b32.xlu0 %v2464, 96
    %v2473 = vpop.permute.xlu0 %2472
    %2474 = vrot.lane.b32.xlu0 %v2467, 96
    %v2475 = vpop.permute.xlu0 %2474
    %2478 = vst.msk [vmem:[#allocation5 + $0x10] sm:$0xff] %vm1366, %v2473
    %2479 = vst.msk [vmem:[#allocation5 + $0x18] sm:$0xff] %vm1366, %v2475
    %v2480 = vld [vmem:[#allocation2 + $0x8] sm:$0xff]
    %v2481 = vld [vmem:[#allocation3 + $0x8] sm:$0xff]
    %v2482 = vld [vmem:[#allocation4 + $0x8] sm:$0xff]
    %2484 = vrot.lane.b32.xlu0 %v2480, 16
    %v2485 = vpop.permute.xlu0 %2484
    %2487 = vrot.lane.b32.xlu0 %v2481, 16
    %v2488 = vpop.permute.xlu0 %2487
    %v2490 = vsel %vm396, %v2485, 0
    %v2493 = vsel %vm396, %v2488, 0
    %2495 = vmatprep.subr.bf16.mxu0 0
    %2496 = vmatpush1.bf16.xpose.msra.mxu0 %v2493
    %2497 = vmatprep.subr.bf16.mxu0 0
    %2498 = vmatpush1.bf16.xpose.msra.mxu0 0
    %2499 = vmatprep.subr.bf16.mxu0 0
    %2500 = vmatpush1.bf16.xpose.msra.mxu0 0
    %2501 = vmatprep.subr.bf16.mxu0 0
    %2502 = vmatpush1.bf16.xpose.msra.mxu0 0
    %2503 = vmatprep.subr.bf16.mxu0 0
    %2504 = vmatpush1.bf16.xpose.msra.mxu0 0
    %2505 = vmatprep.subr.bf16.mxu0 0
    %2506 = vmatpush1.bf16.xpose.msra.mxu0 0
    %2507 = vmatprep.subr.bf16.mxu0 0
    %2508 = vmatpush1.bf16.xpose.msra.mxu0 0
    %2509 = vmatprep.subr.bf16.mxu0 0
    %2510 = vmatpush1.bf16.xpose.msra.mxu0 0
    %2511 = vmatprep.subr.bf16.mxu0 0
    %2512 = vmatpush1.bf16.xpose.msra.mxu0 0
    %2513 = vmatprep.subr.bf16.mxu0 0
    %2514 = vmatpush1.bf16.xpose.msra.mxu0 0
    %2515 = vmatprep.subr.bf16.mxu0 0
    %2516 = vmatpush1.bf16.xpose.msra.mxu0 0
    %2517 = vmatprep.subr.bf16.mxu0 0
    %2518 = vmatpush1.bf16.xpose.msra.mxu0 0
    %2519 = vmatprep.subr.bf16.mxu0 0
    %2520 = vmatpush1.bf16.xpose.msra.mxu0 0
    %2521 = vmatprep.subr.bf16.mxu0 0
    %2522 = vmatpush1.bf16.xpose.msra.mxu0 0
    %2523 = vmatprep.subr.bf16.mxu0 0
    %2524 = vmatpush1.bf16.xpose.msra.mxu0 0
    %2525 = vmatprep.subr.bf16.mxu0 0
    %2526 = vmatpush1.bf16.xpose.msra.mxu0 0
    %2527 = vmatprep.mubr.bf16.mxu0 0
    %2528 = vmatmul.mubr.bf16.gmra.mrb[0].mxu0 %v2490
    %v2529 = vpop.f32.mrb[0].mxu0
    %v2530 = vadd.f32 0.0, %v2529
    %v2531 = vpop.f32.mrb[0].mxu0
    %v2532 = vpop.f32.mrb[0].mxu0
    %v2533 = vadd.f32 0.0, %v2532
    %v2534 = vpop.f32.mrb[0].mxu0
    %2535 = vdwg.mxu0
    %v2536 = vmul.f32 %v2530, 0.25
    %v2537 = vmul.f32 %v2533, 0.25
    %v2538 = vsel %vm391, -1e+09, %v2536
    %v2539 = vsel %vm392, -1e+09, %v2537
    %v2540 = vsel %vm396, %v2538, -inf
    %2541 = vmax.xlane.f32.xlu0 %v2540
    %v2542 = vpop.xlane.xlu0 %2541
    %v2543 = vsel %vm396, %v2539, -inf
    %2544 = vmax.xlane.f32.xlu0 %v2543
    %v2545 = vpop.xlane.xlu0 %2544
    %v2546 = vsub.f32 %v2538, %v2542
    %v2547 = vsub.f32 %v2539, %v2545
    %v2548 = vmul.f32 %v2546, 1.442695
    %v2549 = vpow.pop %v2548
    %v2550 = vmul.f32 %v2547, 1.442695
    %v2551 = vpow.pop %v2550
    %v2552 = vsel %vm396, %v2549, 0.0
    %2553 = vadd.xlane.f32.xlu0 %v2552
    %v2554 = vpop.xlane.xlu0 %2553
    %v2555 = vsel %vm396, %v2551, 0.0
    %2556 = vadd.xlane.f32.xlu0 %v2555
    %v2557 = vpop.xlane.xlu0 %2556
    %v2558 = vrcp.pop %v2554
    %v2559 = vrcp.pop %v2557
    %v2560 = vmul.f32 %v2549, %v2558
    %v2561 = vmul.f32 %v2551, %v2559
    %v2562 = vpack.c.bf16 %v2561, %v2560
    %2564 = vrot.lane.b32.xlu0 %v2482, 16
    %v2565 = vpop.permute.xlu0 %2564
    %v2568 = vsel %vm396, %v2562, 0
    %2570 = vmatprep.subr.bf16.mxu0 0
    %2571 = vmatpush1.bf16.msra.mxu0 %v2565
    %2572 = vmatprep.subr.bf16.mxu0 0
    %2573 = vmatpush1.bf16.msra.mxu0 0
    %2574 = vmatprep.subr.bf16.mxu0 0
    %2575 = vmatpush1.bf16.msra.mxu0 0
    %2576 = vmatprep.subr.bf16.mxu0 0
    %2577 = vmatpush1.bf16.msra.mxu0 0
    %2578 = vmatprep.subr.bf16.mxu0 0
    %2579 = vmatpush1.bf16.msra.mxu0 0
    %2580 = vmatprep.subr.bf16.mxu0 0
    %2581 = vmatpush1.bf16.msra.mxu0 0
    %2582 = vmatprep.subr.bf16.mxu0 0
    %2583 = vmatpush1.bf16.msra.mxu0 0
    %2584 = vmatprep.subr.bf16.mxu0 0
    %2585 = vmatpush1.bf16.msra.mxu0 0
    %2586 = vmatprep.subr.bf16.mxu0 0
    %2587 = vmatpush1.bf16.msra.mxu0 0
    %2588 = vmatprep.subr.bf16.mxu0 0
    %2589 = vmatpush1.bf16.msra.mxu0 0
    %2590 = vmatprep.subr.bf16.mxu0 0
    %2591 = vmatpush1.bf16.msra.mxu0 0
    %2592 = vmatprep.subr.bf16.mxu0 0
    %2593 = vmatpush1.bf16.msra.mxu0 0
    %2594 = vmatprep.subr.bf16.mxu0 0
    %2595 = vmatpush1.bf16.msra.mxu0 0
    %2596 = vmatprep.subr.bf16.mxu0 0
    %2597 = vmatpush1.bf16.msra.mxu0 0
    %2598 = vmatprep.subr.bf16.mxu0 0
    %2599 = vmatpush1.bf16.msra.mxu0 0
    %2600 = vmatprep.subr.bf16.mxu0 0
    %2601 = vmatpush1.bf16.msra.mxu0 0
    %2602 = vmatprep.mubr.bf16.mxu0 0
    %2603 = vmatmul.mubr.bf16.gmra.mrb[0].mxu0 %v2568
    %v2604 = vpop.f32.mrb[0].mxu0
    %v2605 = vadd.f32 0.0, %v2604
    %v2606 = vpop.f32.mrb[0].mxu0
    %v2607 = vpop.f32.mrb[0].mxu0
    %v2608 = vadd.f32 0.0, %v2607
    %v2609 = vpop.f32.mrb[0].mxu0
    %2610 = vdwg.mxu0
    %2613 = vrot.lane.b32.xlu0 %v2605, 112
    %v2614 = vpop.permute.xlu0 %2613
    %2615 = vrot.lane.b32.xlu0 %v2608, 112
    %v2616 = vpop.permute.xlu0 %2615
    %2619 = vst.msk [vmem:[#allocation5 + $0x10] sm:$0xff] %vm1508, %v2614
    %2620 = vst.msk [vmem:[#allocation5 + $0x18] sm:$0xff] %vm1508, %v2616
    %v2621 = vld [vmem:[#allocation5] sm:$0xff]
    %v2622 = vld [vmem:[#allocation5 + $0x8] sm:$0xff]
    %v2623 = vld [vmem:[#allocation5 + $0x10] sm:$0xff]
    %v2624 = vld [vmem:[#allocation5 + $0x18] sm:$0xff]
    %v2625 = vpack.c.bf16 %v2622, %v2621
    %v2626 = vpack.c.bf16 %v2624, %v2623
    %v2627 = vld [vmem:[#allocation14] sm:$0xf]
    %v2628 = vld [vmem:[#allocation14 + $0x4] sm:$0xf]
    %v2629 = vld [vmem:[#allocation14 + $0x8] sm:$0xf]
    %v2630 = vld [vmem:[#allocation14 + $0xc] sm:$0xf]
    %v2631 = vld [vmem:[#allocation14 + $0x10] sm:$0xf]
    %v2632 = vld [vmem:[#allocation14 + $0x14] sm:$0xf]
    %v2633 = vld [vmem:[#allocation14 + $0x18] sm:$0xf]
    %v2634 = vld [vmem:[#allocation14 + $0x1c] sm:$0xf]
    %v2635 = vld [vmem:[#allocation14 + $0x20] sm:$0xf]
    %v2636 = vld [vmem:[#allocation14 + $0x24] sm:$0xf]
    %v2637 = vld [vmem:[#allocation14 + $0x28] sm:$0xf]
    %v2638 = vld [vmem:[#allocation14 + $0x2c] sm:$0xf]
    %v2639 = vld [vmem:[#allocation14 + $0x30] sm:$0xf]
    %v2640 = vld [vmem:[#allocation14 + $0x34] sm:$0xf]
    %v2641 = vld [vmem:[#allocation14 + $0x38] sm:$0xf]
    %v2642 = vld [vmem:[#allocation14 + $0x3c] sm:$0xf]
    %v2643 = vld [vmem:[%s6] sm:$0x1]
    %v2645 = vlaneseq
    %v2646 = vshrl.u32 %v2645, 7
    %v2647 = vsub.s32 0, %v2646
    %v2648 = vrot.slane %v2643, %v2647
    %v2666 = vunpack.c.l.b16 %v2627
    %v2667 = vunpack.c.l.b16 %v2628
    %v2668 = vunpack.c.l.b16 %v2629
    %v2669 = vunpack.c.l.b16 %v2630
    %v2670 = vunpack.c.l.b16 %v2631
    %v2671 = vunpack.c.l.b16 %v2632
    %v2672 = vunpack.c.l.b16 %v2633
    %v2673 = vunpack.c.l.b16 %v2634
    %v2674 = vunpack.c.l.b16 %v2635
    %v2675 = vunpack.c.l.b16 %v2636
    %v2676 = vunpack.c.l.b16 %v2637
    %v2677 = vunpack.c.l.b16 %v2638
    %v2678 = vunpack.c.l.b16 %v2639
    %v2679 = vunpack.c.l.b16 %v2640
    %v2680 = vunpack.c.l.b16 %v2641
    %v2681 = vunpack.c.l.b16 %v2642
    %v2682 = vpack.c.b16 %v2667, %v2666
    %v2683 = vpack.c.b16 %v2669, %v2668
    %v2684 = vpack.c.b16 %v2671, %v2670
    %v2685 = vpack.c.b16 %v2673, %v2672
    %v2686 = vpack.c.b16 %v2675, %v2674
    %v2687 = vpack.c.b16 %v2677, %v2676
    %v2688 = vpack.c.b16 %v2679, %v2678
    %v2689 = vpack.c.b16 %v2681, %v2680
    %2698 = vmatprep.subr.bf16.mxu0 0
    %2699 = vmatpush1.bf16.msra.mxu0 %v2682
    %2700 = vmatprep.subr.bf16.mxu0 0
    %2701 = vmatpush1.bf16.msra.mxu0 %v2683
    %2702 = vmatprep.subr.bf16.mxu0 0
    %2703 = vmatpush1.bf16.msra.mxu0 %v2684
    %2704 = vmatprep.subr.bf16.mxu0 0
    %2705 = vmatpush1.bf16.msra.mxu0 %v2685
    %2706 = vmatprep.subr.bf16.mxu0 0
    %2707 = vmatpush1.bf16.msra.mxu0 %v2686
    %2708 = vmatprep.subr.bf16.mxu0 0
    %2709 = vmatpush1.bf16.msra.mxu0 %v2687
    %2710 = vmatprep.subr.bf16.mxu0 0
    %2711 = vmatpush1.bf16.msra.mxu0 %v2688
    %2712 = vmatprep.subr.bf16.mxu0 0
    %2713 = vmatpush1.bf16.msra.mxu0 %v2689
    %2714 = vmatprep.subr.bf16.mxu0 0
    %2715 = vmatpush1.bf16.msra.mxu0 0
    %2716 = vmatprep.subr.bf16.mxu0 0
    %2717 = vmatpush1.bf16.msra.mxu0 0
    %2718 = vmatprep.subr.bf16.mxu0 0
    %2719 = vmatpush1.bf16.msra.mxu0 0
    %2720 = vmatprep.subr.bf16.mxu0 0
    %2721 = vmatpush1.bf16.msra.mxu0 0
    %2722 = vmatprep.subr.bf16.mxu0 0
    %2723 = vmatpush1.bf16.msra.mxu0 0
    %2724 = vmatprep.subr.bf16.mxu0 0
    %2725 = vmatpush1.bf16.msra.mxu0 0
    %2726 = vmatprep.subr.bf16.mxu0 0
    %2727 = vmatpush1.bf16.msra.mxu0 0
    %2728 = vmatprep.subr.bf16.mxu0 0
    %2729 = vmatpush1.bf16.msra.mxu0 0
    %2730 = vmatprep.mubr.bf16.mxu0 0
    %2731 = vmatmul.mubr.bf16.gmra.mrb[0].mxu0 %v2625
    %v2732 = vpop.f32.mrb[0].mxu0
    %v2733 = vadd.f32 %v2648, %v2732
    %v2734 = vpop.f32.mrb[0].mxu0
    %v2735 = vpop.f32.mrb[0].mxu0
    %v2736 = vadd.f32 %v2648, %v2735
    %v2737 = vpop.f32.mrb[0].mxu0
    %2738 = vmatprep.mubr.bf16.mxu0 0
    %2739 = vmatmul.mubr.bf16.gmra.mrb[0].mxu0 %v2626
    %v2740 = vpop.f32.mrb[0].mxu0
    %v2741 = vadd.f32 %v2648, %v2740
    %v2742 = vpop.f32.mrb[0].mxu0
    %v2743 = vpop.f32.mrb[0].mxu0
    %v2744 = vadd.f32 %v2648, %v2743
    %v2745 = vpop.f32.mrb[0].mxu0
    %2746 = vdwg.mxu0
    %2747 = vst [vmem:[#allocation16] sm:$0xff] %v2733
    %2748 = vst [vmem:[#allocation16 + $0x8] sm:$0xff] %v2736
    %2749 = vst [vmem:[#allocation16 + $0x10] sm:$0xff] %v2741
    %2750 = vst [vmem:[#allocation16 + $0x18] sm:$0xff] %v2744
    // Predicated region
    $region42: #{tpu_custom_call.1} parent=1 // pred_check
      _
    $region43: #{tpu_custom_call.1} parent=1 // pred_check_branch
      %2752 = sbr.rel (0) target = $region45
    $region44: #{tpu_custom_call.1} parent=1 // pred_region
      %s2754 = ssub.s32 512, 512
      %2755 = vsyncadd [#allocation10], %s2754
      %s2756 = sshll.u32 [#allocation16], 4
      %s2757 = int_to_ptr.vmem [resolvable:$true] %s2756
      %2762 = dma.vmem_to_hbm [thread:$0]  %s2757, 512, %s7, [#allocation10], 128, 128, 8
    $region45: #{tpu_custom_call.1} parent=1 // pred_fallthru
      _
    // Predicated region
    $region46: #{tpu_custom_call.1} parent=1 // pred_check
      _
    $region47: #{tpu_custom_call.1} parent=1 // pred_check_branch
      %2764 = sbr.rel (0) target = $region49
    $region48: #{tpu_custom_call.1} parent=1 // pred_region
      %2765 = dma.done [#allocation10], 512
    $region49: #{tpu_custom_call.1} parent=1 // pred_fallthru
      _
    %2766 = vsyncpa [#allocation9], 1
    %2767 = vsyncpa [#allocation12], 1
    %2768 = vsyncpa [#allocation15], 1
    %2769 = vsyncpa [#allocation10], 1

</llo_original>
